<compile_context>
chip_gen: v7x
topology: tpu7x:2x2x1
jax: 0.10.0
libtpu: 0.0.40
codegen_flags: <defaults>
</compile_context>

<pallas_src>
import jax
import jax.numpy as jnp
from jax.experimental import pallas as pl
from jax.experimental.pallas import tpu as pltpu

B_BLK = 8  # batch rows per grid point / per core


# ----------------------------- Pallas kernel ------------------------------- #
def _lstm_fc_kernel(ids_ref,       # (B_pad*T,) int32  SMEM (scalar prefetch), row-major (b, t)
                    gproj_f_ref,   # (V_pad, 4H) f32 : emb @ W_ih_f.T + b_f   (gate order i,f,g,o)
                    gproj_b_ref,   # (V_pad, 4H) f32 : emb @ W_ih_b.T + b_b
                    whh_ref,       # (H, 4H)   bf16  (forward recurrent weight, transposed)
                    wfc_ref,       # (2H, Cp)  bf16  (Cp = class_num padded to 128)
                    bfc_ref,       # (1, Cp)   f32
                    out_ref,       # (B_BLK, Cp) f32
                    xproj_ref,     # (T*B_BLK, 4H) f32 scratch (time-major gate pre-activations)
                    gb_ref):       # (B_BLK, 4H)   f32 scratch (reverse-dir gates at t = T-1)
    Bq = out_ref.shape[0]
    H = whh_ref.shape[0]
    T = xproj_ref.shape[0] // Bq
    row0 = pl.program_id(0) * Bq

    # --- fused embedding gather: folded input projections (biases already included) ---
    for b in range(Bq):
        base = (row0 + b) * T
        for t in range(T):
            tok = ids_ref[base + t]
            xproj_ref[pl.ds(t * Bq + b, 1), :] = gproj_f_ref[pl.ds(tok, 1), :]
        # reverse direction only needs the last timestep
        tok_last = ids_ref[base + T - 1]
        gb_ref[pl.ds(b, 1), :] = gproj_b_ref[pl.ds(tok_last, 1), :]

    def act(gates, c):
        # sigmoid(x) = 0.5*tanh(0.5*x) + 0.5  -> single EUP op per gate; all math f32.
        i_g = 0.5 * jnp.tanh(0.5 * gates[:, 0 * H:1 * H]) + 0.5
        f_g = 0.5 * jnp.tanh(0.5 * gates[:, 1 * H:2 * H]) + 0.5
        g_g = jnp.tanh(gates[:, 2 * H:3 * H])
        o_g = 0.5 * jnp.tanh(0.5 * gates[:, 3 * H:4 * H]) + 0.5
        c_new = f_g * c + i_g * g_g
        h_new = o_g * jnp.tanh(c_new)
        return h_new, c_new

    zeros = jnp.zeros((Bq, H), jnp.float32)

    # Reverse direction at the last timestep == single zero-state cell on x[T-1];
    # h @ W_hh_b is identically zero and omitted.  Independent of the forward chain.
    h_bwd, _ = act(gb_ref[...], zeros)

    # Forward recurrence, fully unrolled.  Step 0 from zero state: no recurrent matmul.
    whh = whh_ref[...]                                     # (H, 4H) bf16, read once
    h, c = act(xproj_ref[0:Bq, :], zeros)
    for t in range(1, T):
        gates = xproj_ref[t * Bq:(t + 1) * Bq, :] + jnp.dot(
            h.astype(jnp.bfloat16), whh, preferred_element_type=jnp.float32)
        h, c = act(gates, c)

    # Final Linear: one K=2H matmul on the lane-concatenated bf16 hidden states.
    fc_in = jnp.concatenate(
        [h.astype(jnp.bfloat16), h_bwd.astype(jnp.bfloat16)], axis=-1)   # (Bq, 2H) bf16
    out_ref[...] = (jnp.dot(fc_in, wfc_ref[...], preferred_element_type=jnp.float32)
                    + bfc_ref[...])


# -------------------- one-time parameter preparation ------------------------ #
def prepare_params(params):
    """Fold embedding into the gate projections (f32), pre-transpose/cast/pad once."""
    H = params["w_hh_f"].shape[1]
    C = params["fc_w"].shape[0]
    V, _ = params["embedding"].shape
    C_pad = max(128, ((C + 127) // 128) * 128)
    V_pad = ((V + 7) // 8) * 8

    emb = jnp.zeros((V_pad, params["embedding"].shape[1]), jnp.float32).at[:V].set(
        params["embedding"].astype(jnp.float32))

    # Folded tables, done in f32 (exact input projection; biases summed in).
    gproj_f = emb @ params["w_ih_f"].T + (params["b_ih_f"] + params["b_hh_f"])[None, :]
    gproj_b = emb @ params["w_ih_b"].T + (params["b_ih_b"] + params["b_hh_b"])[None, :]

    fc_w = jnp.zeros((2 * H, C_pad), jnp.float32).at[:, :C].set(params["fc_w"].T)
    fc_b = jnp.zeros((1, C_pad), jnp.float32).at[0, :C].set(params["fc_b"])

    return {
        "gproj_f": gproj_f.astype(jnp.float32),            # (V_pad, 4H)
        "gproj_b": gproj_b.astype(jnp.float32),            # (V_pad, 4H)
        "whh_f": params["w_hh_f"].T.astype(jnp.bfloat16),  # (H, 4H)
        "wfc": fc_w.astype(jnp.bfloat16),                  # (2H, C_pad)
        "bfc": fc_b,                                       # (1, C_pad)
        "class_num": C,
        "hidden": H,
    }


# ------------------------------ JAX wrapper -------------------------------- #
def textrnn_forward(x_ids, prep):
    """x_ids: int32 (B, T) token ids.  Returns (B, class_num) float32 logits."""
    B, T = x_ids.shape
    H = prep["hidden"]
    C = prep["class_num"]
    C_pad = prep["wfc"].shape[1]

    B_pad = ((B + B_BLK - 1) // B_BLK) * B_BLK
    if B_pad != B:
        # pad with token 0 (always in-bounds); padded rows are sliced off below
        x_ids = jnp.zeros((B_pad, T), x_ids.dtype).at[:B].set(x_ids)
    ids_flat = x_ids.reshape(B_pad * T).astype(jnp.int32)
    num_blocks = B_pad // B_BLK

    grid_spec = pltpu.PrefetchScalarGridSpec(
        num_scalar_prefetch=1,
        grid=(num_blocks,),
        in_specs=[
            pl.BlockSpec(prep["gproj_f"].shape, lambda i, ids: (0, 0)),
            pl.BlockSpec(prep["gproj_b"].shape, lambda i, ids: (0, 0)),
            pl.BlockSpec(prep["whh_f"].shape, lambda i, ids: (0, 0)),
            pl.BlockSpec(prep["wfc"].shape, lambda i, ids: (0, 0)),
            pl.BlockSpec(prep["bfc"].shape, lambda i, ids: (0, 0)),
        ],
        out_specs=pl.BlockSpec((B_BLK, C_pad), lambda i, ids: (i, 0)),
        scratch_shapes=[
            pltpu.VMEM((T * B_BLK, 4 * H), jnp.float32),   # xproj (time-major)
            pltpu.VMEM((B_BLK, 4 * H), jnp.float32),       # reverse-dir gates at t = T-1
        ],
    )

    out = pl.pallas_call(
        _lstm_fc_kernel,
        out_shape=jax.ShapeDtypeStruct((B_pad, C_pad), jnp.float32),
        grid_spec=grid_spec,
        compiler_params=pltpu.CompilerParams(
            dimension_semantics=("parallel",)),            # v7x: both TensorCores
    )(ids_flat, prep["gproj_f"], prep["gproj_b"], prep["whh_f"],
      prep["wfc"], prep["bfc"])
    return out[:B, :C]


# ------------------------- pure-JAX reference (check) ----------------------- #
def _reference_forward(x_ids, params):
    embed = params["embedding"][x_ids]            # (B, T, E) f32
    B, T, _ = embed.shape
    H = params["w_hh_f"].shape[1]

    def cell(x_t, h, c, wih, whh, bih, bhh):
        g = x_t @ wih.T + h @ whh.T + bih + bhh
        i, f, gg, o = jnp.split(g, 4, axis=-1)
        c = jax.nn.sigmoid(f) * c + jax.nn.sigmoid(i) * jnp.tanh(gg)
        h = jax.nn.sigmoid(o) * jnp.tanh(c)
        return h, c

    def run(direction_inputs, wih, whh, bih, bhh):
        h = jnp.zeros((B, H), jnp.float32)
        c = jnp.zeros((B, H), jnp.float32)
        outs = []
        for t in range(direction_inputs.shape[1]):
            h, c = cell(direction_inputs[:, t, :], h, c, wih, whh, bih, bhh)
            outs.append(h)
        return jnp.stack(outs, axis=1)            # (B, T, H)

    out_f = run(embed, params["w_ih_f"], params["w_hh_f"], params["b_ih_f"], params["b_hh_f"])
    out_b = run(embed[:, ::-1, :], params["w_ih_b"], params["w_hh_b"],
                params["b_ih_b"], params["b_hh_b"])[:, ::-1, :]
    lstmout = jnp.concatenate([out_f, out_b], axis=-1)   # (B, T, 2H)
    fc_in = lstmout[:, -1, :]
    return fc_in @ params["fc_w"].T + params["fc_b"]


# --------------------------------- main ------------------------------------ #
def _init_params(key, vocab, embed_dim, hidden, class_num):
    ks = jax.random.split(key, 12)
    k_lstm = 1.0 / jnp.sqrt(hidden)
    k_fc = 1.0 / jnp.sqrt(2.0 * hidden)
    u = lambda k, shape, b: jax.random.uniform(k, shape, jnp.float32, -b, b)
    return {
        "embedding": jax.random.normal(ks[0], (vocab, embed_dim), jnp.float32),
        "w_ih_f": u(ks[1], (4 * hidden, embed_dim), k_lstm),
        "w_hh_f": u(ks[2], (4 * hidden, hidden), k_lstm),
        "b_ih_f": u(ks[3], (4 * hidden,), k_lstm),
        "b_hh_f": u(ks[4], (4 * hidden,), k_lstm),
        "w_ih_b": u(ks[5], (4 * hidden, embed_dim), k_lstm),
        "w_hh_b": u(ks[6], (4 * hidden, hidden), k_lstm),
        "b_ih_b": u(ks[7], (4 * hidden,), k_lstm),
        "b_hh_b": u(ks[8], (4 * hidden,), k_lstm),
        "fc_w": u(ks[9], (class_num, 2 * hidden), k_fc),
        "fc_b": u(ks[10], (class_num,), k_fc),
    }


if __name__ == "__main__":
    # Shapes consistent with the module: vocabulary_size=50, embedding_dim=32,
    # class_num=4, hidden_size=128 (fixed in module), batch=16, seq_len=8.
    # (args.static / multichannel / dropout do not affect this forward pass.)
    VOCAB, EMB, HID, CLS = 50, 32, 128, 4
    B, T = 16, 8

    key = jax.random.PRNGKey(0)
    k_param, k_data = jax.random.split(key)
    params = _init_params(k_param, VOCAB, EMB, HID, CLS)
    x_ids = jax.random.randint(k_data, (B, T), 0, VOCAB, dtype=jnp.int32)

    prep = prepare_params(params)                 # one-time weight fold / transpose / pad / cast

    out = jax.block_until_ready(textrnn_forward(x_ids, prep))
    ref = jax.block_until_ready(_reference_forward(x_ids, params))

    assert out.shape == (B, CLS)
    # bf16 MXU operands (f32 accumulation / f32 state) => looser tolerance vs f32 reference.
    assert jnp.allclose(out, ref, atol=3e-2, rtol=3e-2), "mismatch vs pure-JAX reference"
    print("KERNEL_OK")
</pallas_src>

<mosaic_0001>
module attributes {stable_mosaic.version = 11 : i64} {
  func.func @_lstm_fc_kernel(%arg0: i32, %arg1: memref<128xi32, #tpu.memory_space<smem>>, %arg2: memref<56x512xf32, #tpu.memory_space<vmem>>, %arg3: memref<56x512xf32, #tpu.memory_space<vmem>>, %arg4: memref<128x512xbf16, #tpu.memory_space<vmem>>, %arg5: memref<256x128xbf16, #tpu.memory_space<vmem>>, %arg6: memref<1x128xf32, #tpu.memory_space<vmem>>, %arg7: memref<8x128xf32, #tpu.memory_space<vmem>>, %arg8: memref<64x512xf32, #tpu.memory_space<vmem>>, %arg9: memref<8x512xf32, #tpu.memory_space<vmem>>) attributes {dimension_semantics = [#tpu.dimension_semantics<parallel>], iteration_bounds = array<i64: 2>, scalar_prefetch = 1 : i64, scratch_operands = 2 : i64, tpu.core_type = #tpu.core_type<tc>, window_params = [{pipeline_mode = #tpu.pipeline_mode<synchronous>, transform_indices = @transform_0, window_bounds = array<i64: 56, 512>}, {pipeline_mode = #tpu.pipeline_mode<synchronous>, transform_indices = @transform_1, window_bounds = array<i64: 56, 512>}, {pipeline_mode = #tpu.pipeline_mode<synchronous>, transform_indices = @transform_2, window_bounds = array<i64: 128, 512>}, {pipeline_mode = #tpu.pipeline_mode<synchronous>, transform_indices = @transform_3, window_bounds = array<i64: 256, 128>}, {pipeline_mode = #tpu.pipeline_mode<synchronous>, transform_indices = @transform_4, window_bounds = array<i64: 1, 128>}, {transform_indices = @transform_5, window_bounds = array<i64: 8, 128>}]} {
    %c8_i32 = arith.constant 8 : i32
    %0 = arith.muli %arg0, %c8_i32 : i32
    %c0_i32 = arith.constant 0 : i32
    %1 = arith.addi %0, %c0_i32 : i32
    %c8_i32_0 = arith.constant 8 : i32
    %2 = arith.muli %1, %c8_i32_0 : i32
    %c0_i32_1 = arith.constant 0 : i32
    %3 = arith.addi %2, %c0_i32_1 : i32
    %4 = arith.index_cast %3 : i32 to index
    %5 = memref.load %arg1[%4] : memref<128xi32, #tpu.memory_space<smem>>
    %6 = arith.index_cast %5 : i32 to index
    %c0 = arith.constant 0 : index
    %7 = vector.load %arg2[%6, %c0] : memref<56x512xf32, #tpu.memory_space<vmem>>, vector<1x512xf32>
    %c0_2 = arith.constant 0 : index
    %c0_3 = arith.constant 0 : index
    %8 = vector.load %arg8[%c0_2, %c0_3] : memref<64x512xf32, #tpu.memory_space<vmem>>, vector<1x512xf32>
    tpu.vector_store %arg8[%c0_2, %c0_3], %7 {strides = array<i32>} : memref<64x512xf32, #tpu.memory_space<vmem>>, vector<1x512xf32>,
    %c1_i32 = arith.constant 1 : i32
    %9 = arith.addi %2, %c1_i32 : i32
    %10 = arith.index_cast %9 : i32 to index
    %11 = memref.load %arg1[%10] : memref<128xi32, #tpu.memory_space<smem>>
    %12 = arith.index_cast %11 : i32 to index
    %c0_4 = arith.constant 0 : index
    %13 = vector.load %arg2[%12, %c0_4] : memref<56x512xf32, #tpu.memory_space<vmem>>, vector<1x512xf32>
    %c8 = arith.constant 8 : index
    %c0_5 = arith.constant 0 : index
    %14 = vector.load %arg8[%c8, %c0_5] : memref<64x512xf32, #tpu.memory_space<vmem>>, vector<1x512xf32>
    tpu.vector_store %arg8[%c8, %c0_5], %13 {strides = array<i32>} : memref<64x512xf32, #tpu.memory_space<vmem>>, vector<1x512xf32>,
    %c2_i32 = arith.constant 2 : i32
    %15 = arith.addi %2, %c2_i32 : i32
    %16 = arith.index_cast %15 : i32 to index
    %17 = memref.load %arg1[%16] : memref<128xi32, #tpu.memory_space<smem>>
    %18 = arith.index_cast %17 : i32 to index
    %c0_6 = arith.constant 0 : index
    %19 = vector.load %arg2[%18, %c0_6] : memref<56x512xf32, #tpu.memory_space<vmem>>, vector<1x512xf32>
    %c16 = arith.constant 16 : index
    %c0_7 = arith.constant 0 : index
    %20 = vector.load %arg8[%c16, %c0_7] : memref<64x512xf32, #tpu.memory_space<vmem>>, vector<1x512xf32>
    tpu.vector_store %arg8[%c16, %c0_7], %19 {strides = array<i32>} : memref<64x512xf32, #tpu.memory_space<vmem>>, vector<1x512xf32>,
    %c3_i32 = arith.constant 3 : i32
    %21 = arith.addi %2, %c3_i32 : i32
    %22 = arith.index_cast %21 : i32 to index
    %23 = memref.load %arg1[%22] : memref<128xi32, #tpu.memory_space<smem>>
    %24 = arith.index_cast %23 : i32 to index
    %c0_8 = arith.constant 0 : index
    %25 = vector.load %arg2[%24, %c0_8] : memref<56x512xf32, #tpu.memory_space<vmem>>, vector<1x512xf32>
    %c24 = arith.constant 24 : index
    %c0_9 = arith.constant 0 : index
    %26 = vector.load %arg8[%c24, %c0_9] : memref<64x512xf32, #tpu.memory_space<vmem>>, vector<1x512xf32>
    tpu.vector_store %arg8[%c24, %c0_9], %25 {strides = array<i32>} : memref<64x512xf32, #tpu.memory_space<vmem>>, vector<1x512xf32>,
    %c4_i32 = arith.constant 4 : i32
    %27 = arith.addi %2, %c4_i32 : i32
    %28 = arith.index_cast %27 : i32 to index
    %29 = memref.load %arg1[%28] : memref<128xi32, #tpu.memory_space<smem>>
    %30 = arith.index_cast %29 : i32 to index
    %c0_10 = arith.constant 0 : index
    %31 = vector.load %arg2[%30, %c0_10] : memref<56x512xf32, #tpu.memory_space<vmem>>, vector<1x512xf32>
    %c32 = arith.constant 32 : index
    %c0_11 = arith.constant 0 : index
    %32 = vector.load %arg8[%c32, %c0_11] : memref<64x512xf32, #tpu.memory_space<vmem>>, vector<1x512xf32>
    tpu.vector_store %arg8[%c32, %c0_11], %31 {strides = array<i32>} : memref<64x512xf32, #tpu.memory_space<vmem>>, vector<1x512xf32>,
    %c5_i32 = arith.constant 5 : i32
    %33 = arith.addi %2, %c5_i32 : i32
    %34 = arith.index_cast %33 : i32 to index
    %35 = memref.load %arg1[%34] : memref<128xi32, #tpu.memory_space<smem>>
    %36 = arith.index_cast %35 : i32 to index
    %c0_12 = arith.constant 0 : index
    %37 = vector.load %arg2[%36, %c0_12] : memref<56x512xf32, #tpu.memory_space<vmem>>, vector<1x512xf32>
    %c40 = arith.constant 40 : index
    %c0_13 = arith.constant 0 : index
    %38 = vector.load %arg8[%c40, %c0_13] : memref<64x512xf32, #tpu.memory_space<vmem>>, vector<1x512xf32>
    tpu.vector_store %arg8[%c40, %c0_13], %37 {strides = array<i32>} : memref<64x512xf32, #tpu.memory_space<vmem>>, vector<1x512xf32>,
    %c6_i32 = arith.constant 6 : i32
    %39 = arith.addi %2, %c6_i32 : i32
    %40 = arith.index_cast %39 : i32 to index
    %41 = memref.load %arg1[%40] : memref<128xi32, #tpu.memory_space<smem>>
    %42 = arith.index_cast %41 : i32 to index
    %c0_14 = arith.constant 0 : index
    %43 = vector.load %arg2[%42, %c0_14] : memref<56x512xf32, #tpu.memory_space<vmem>>, vector<1x512xf32>
    %c48 = arith.constant 48 : index
    %c0_15 = arith.constant 0 : index
    %44 = vector.load %arg8[%c48, %c0_15] : memref<64x512xf32, #tpu.memory_space<vmem>>, vector<1x512xf32>
    tpu.vector_store %arg8[%c48, %c0_15], %43 {strides = array<i32>} : memref<64x512xf32, #tpu.memory_space<vmem>>, vector<1x512xf32>,
    %c7_i32 = arith.constant 7 : i32
    %45 = arith.addi %2, %c7_i32 : i32
    %46 = arith.index_cast %45 : i32 to index
    %47 = memref.load %arg1[%46] : memref<128xi32, #tpu.memory_space<smem>>
    %48 = arith.index_cast %47 : i32 to index
    %c0_16 = arith.constant 0 : index
    %49 = vector.load %arg2[%48, %c0_16] : memref<56x512xf32, #tpu.memory_space<vmem>>, vector<1x512xf32>
    %c56 = arith.constant 56 : index
    %c0_17 = arith.constant 0 : index
    %50 = vector.load %arg8[%c56, %c0_17] : memref<64x512xf32, #tpu.memory_space<vmem>>, vector<1x512xf32>
    tpu.vector_store %arg8[%c56, %c0_17], %49 {strides = array<i32>} : memref<64x512xf32, #tpu.memory_space<vmem>>, vector<1x512xf32>,
    %c8_i32_18 = arith.constant 8 : i32
    %51 = arith.addi %2, %c8_i32_18 : i32
    %c1_i32_19 = arith.constant 1 : i32
    %52 = arith.subi %51, %c1_i32_19 : i32
    %53 = arith.index_cast %52 : i32 to index
    %54 = memref.load %arg1[%53] : memref<128xi32, #tpu.memory_space<smem>>
    %55 = arith.index_cast %54 : i32 to index
    %c0_20 = arith.constant 0 : index
    %56 = vector.load %arg3[%55, %c0_20] : memref<56x512xf32, #tpu.memory_space<vmem>>, vector<1x512xf32>
    %c0_21 = arith.constant 0 : index
    %c0_22 = arith.constant 0 : index
    %57 = vector.load %arg9[%c0_21, %c0_22] : memref<8x512xf32, #tpu.memory_space<vmem>>, vector<1x512xf32>
    tpu.vector_store %arg9[%c0_21, %c0_22], %56 {strides = array<i32>} : memref<8x512xf32, #tpu.memory_space<vmem>>, vector<1x512xf32>,
    %c1_i32_23 = arith.constant 1 : i32
    %58 = arith.addi %0, %c1_i32_23 : i32
    %c8_i32_24 = arith.constant 8 : i32
    %59 = arith.muli %58, %c8_i32_24 : i32
    %c0_i32_25 = arith.constant 0 : i32
    %60 = arith.addi %59, %c0_i32_25 : i32
    %61 = arith.index_cast %60 : i32 to index
    %62 = memref.load %arg1[%61] : memref<128xi32, #tpu.memory_space<smem>>
    %63 = arith.index_cast %62 : i32 to index
    %c0_26 = arith.constant 0 : index
    %64 = vector.load %arg2[%63, %c0_26] : memref<56x512xf32, #tpu.memory_space<vmem>>, vector<1x512xf32>
    %c1 = arith.constant 1 : index
    %c0_27 = arith.constant 0 : index
    %65 = vector.load %arg8[%c1, %c0_27] : memref<64x512xf32, #tpu.memory_space<vmem>>, vector<1x512xf32>
    tpu.vector_store %arg8[%c1, %c0_27], %64 {strides = array<i32>} : memref<64x512xf32, #tpu.memory_space<vmem>>, vector<1x512xf32>,
    %c1_i32_28 = arith.constant 1 : i32
    %66 = arith.addi %59, %c1_i32_28 : i32
    %67 = arith.index_cast %66 : i32 to index
    %68 = memref.load %arg1[%67] : memref<128xi32, #tpu.memory_space<smem>>
    %69 = arith.index_cast %68 : i32 to index
    %c0_29 = arith.constant 0 : index
    %70 = vector.load %arg2[%69, %c0_29] : memref<56x512xf32, #tpu.memory_space<vmem>>, vector<1x512xf32>
    %c9 = arith.constant 9 : index
    %c0_30 = arith.constant 0 : index
    %71 = vector.load %arg8[%c9, %c0_30] : memref<64x512xf32, #tpu.memory_space<vmem>>, vector<1x512xf32>
    tpu.vector_store %arg8[%c9, %c0_30], %70 {strides = array<i32>} : memref<64x512xf32, #tpu.memory_space<vmem>>, vector<1x512xf32>,
    %c2_i32_31 = arith.constant 2 : i32
    %72 = arith.addi %59, %c2_i32_31 : i32
    %73 = arith.index_cast %72 : i32 to index
    %74 = memref.load %arg1[%73] : memref<128xi32, #tpu.memory_space<smem>>
    %75 = arith.index_cast %74 : i32 to index
    %c0_32 = arith.constant 0 : index
    %76 = vector.load %arg2[%75, %c0_32] : memref<56x512xf32, #tpu.memory_space<vmem>>, vector<1x512xf32>
    %c17 = arith.constant 17 : index
    %c0_33 = arith.constant 0 : index
    %77 = vector.load %arg8[%c17, %c0_33] : memref<64x512xf32, #tpu.memory_space<vmem>>, vector<1x512xf32>
    tpu.vector_store %arg8[%c17, %c0_33], %76 {strides = array<i32>} : memref<64x512xf32, #tpu.memory_space<vmem>>, vector<1x512xf32>,
    %c3_i32_34 = arith.constant 3 : i32
    %78 = arith.addi %59, %c3_i32_34 : i32
    %79 = arith.index_cast %78 : i32 to index
    %80 = memref.load %arg1[%79] : memref<128xi32, #tpu.memory_space<smem>>
    %81 = arith.index_cast %80 : i32 to index
    %c0_35 = arith.constant 0 : index
    %82 = vector.load %arg2[%81, %c0_35] : memref<56x512xf32, #tpu.memory_space<vmem>>, vector<1x512xf32>
    %c25 = arith.constant 25 : index
    %c0_36 = arith.constant 0 : index
    %83 = vector.load %arg8[%c25, %c0_36] : memref<64x512xf32, #tpu.memory_space<vmem>>, vector<1x512xf32>
    tpu.vector_store %arg8[%c25, %c0_36], %82 {strides = array<i32>} : memref<64x512xf32, #tpu.memory_space<vmem>>, vector<1x512xf32>,
    %c4_i32_37 = arith.constant 4 : i32
    %84 = arith.addi %59, %c4_i32_37 : i32
    %85 = arith.index_cast %84 : i32 to index
    %86 = memref.load %arg1[%85] : memref<128xi32, #tpu.memory_space<smem>>
    %87 = arith.index_cast %86 : i32 to index
    %c0_38 = arith.constant 0 : index
    %88 = vector.load %arg2[%87, %c0_38] : memref<56x512xf32, #tpu.memory_space<vmem>>, vector<1x512xf32>
    %c33 = arith.constant 33 : index
    %c0_39 = arith.constant 0 : index
    %89 = vector.load %arg8[%c33, %c0_39] : memref<64x512xf32, #tpu.memory_space<vmem>>, vector<1x512xf32>
    tpu.vector_store %arg8[%c33, %c0_39], %88 {strides = array<i32>} : memref<64x512xf32, #tpu.memory_space<vmem>>, vector<1x512xf32>,
    %c5_i32_40 = arith.constant 5 : i32
    %90 = arith.addi %59, %c5_i32_40 : i32
    %91 = arith.index_cast %90 : i32 to index
    %92 = memref.load %arg1[%91] : memref<128xi32, #tpu.memory_space<smem>>
    %93 = arith.index_cast %92 : i32 to index
    %c0_41 = arith.constant 0 : index
    %94 = vector.load %arg2[%93, %c0_41] : memref<56x512xf32, #tpu.memory_space<vmem>>, vector<1x512xf32>
    %c41 = arith.constant 41 : index
    %c0_42 = arith.constant 0 : index
    %95 = vector.load %arg8[%c41, %c0_42] : memref<64x512xf32, #tpu.memory_space<vmem>>, vector<1x512xf32>
    tpu.vector_store %arg8[%c41, %c0_42], %94 {strides = array<i32>} : memref<64x512xf32, #tpu.memory_space<vmem>>, vector<1x512xf32>,
    %c6_i32_43 = arith.constant 6 : i32
    %96 = arith.addi %59, %c6_i32_43 : i32
    %97 = arith.index_cast %96 : i32 to index
    %98 = memref.load %arg1[%97] : memref<128xi32, #tpu.memory_space<smem>>
    %99 = arith.index_cast %98 : i32 to index
    %c0_44 = arith.constant 0 : index
    %100 = vector.load %arg2[%99, %c0_44] : memref<56x512xf32, #tpu.memory_space<vmem>>, vector<1x512xf32>
    %c49 = arith.constant 49 : index
    %c0_45 = arith.constant 0 : index
    %101 = vector.load %arg8[%c49, %c0_45] : memref<64x512xf32, #tpu.memory_space<vmem>>, vector<1x512xf32>
    tpu.vector_store %arg8[%c49, %c0_45], %100 {strides = array<i32>} : memref<64x512xf32, #tpu.memory_space<vmem>>, vector<1x512xf32>,
    %c7_i32_46 = arith.constant 7 : i32
    %102 = arith.addi %59, %c7_i32_46 : i32
    %103 = arith.index_cast %102 : i32 to index
    %104 = memref.load %arg1[%103] : memref<128xi32, #tpu.memory_space<smem>>
    %105 = arith.index_cast %104 : i32 to index
    %c0_47 = arith.constant 0 : index
    %106 = vector.load %arg2[%105, %c0_47] : memref<56x512xf32, #tpu.memory_space<vmem>>, vector<1x512xf32>
    %c57 = arith.constant 57 : index
    %c0_48 = arith.constant 0 : index
    %107 = vector.load %arg8[%c57, %c0_48] : memref<64x512xf32, #tpu.memory_space<vmem>>, vector<1x512xf32>
    tpu.vector_store %arg8[%c57, %c0_48], %106 {strides = array<i32>} : memref<64x512xf32, #tpu.memory_space<vmem>>, vector<1x512xf32>,
    %c8_i32_49 = arith.constant 8 : i32
    %108 = arith.addi %59, %c8_i32_49 : i32
    %c1_i32_50 = arith.constant 1 : i32
    %109 = arith.subi %108, %c1_i32_50 : i32
    %110 = arith.index_cast %109 : i32 to index
    %111 = memref.load %arg1[%110] : memref<128xi32, #tpu.memory_space<smem>>
    %112 = arith.index_cast %111 : i32 to index
    %c0_51 = arith.constant 0 : index
    %113 = vector.load %arg3[%112, %c0_51] : memref<56x512xf32, #tpu.memory_space<vmem>>, vector<1x512xf32>
    %c1_52 = arith.constant 1 : index
    %c0_53 = arith.constant 0 : index
    %114 = vector.load %arg9[%c1_52, %c0_53] : memref<8x512xf32, #tpu.memory_space<vmem>>, vector<1x512xf32>
    tpu.vector_store %arg9[%c1_52, %c0_53], %113 {strides = array<i32>} : memref<8x512xf32, #tpu.memory_space<vmem>>, vector<1x512xf32>,
    %c2_i32_54 = arith.constant 2 : i32
    %115 = arith.addi %0, %c2_i32_54 : i32
    %c8_i32_55 = arith.constant 8 : i32
    %116 = arith.muli %115, %c8_i32_55 : i32
    %c0_i32_56 = arith.constant 0 : i32
    %117 = arith.addi %116, %c0_i32_56 : i32
    %118 = arith.index_cast %117 : i32 to index
    %119 = memref.load %arg1[%118] : memref<128xi32, #tpu.memory_space<smem>>
    %120 = arith.index_cast %119 : i32 to index
    %c0_57 = arith.constant 0 : index
    %121 = vector.load %arg2[%120, %c0_57] : memref<56x512xf32, #tpu.memory_space<vmem>>, vector<1x512xf32>
    %c2 = arith.constant 2 : index
    %c0_58 = arith.constant 0 : index
    %122 = vector.load %arg8[%c2, %c0_58] : memref<64x512xf32, #tpu.memory_space<vmem>>, vector<1x512xf32>
    tpu.vector_store %arg8[%c2, %c0_58], %121 {strides = array<i32>} : memref<64x512xf32, #tpu.memory_space<vmem>>, vector<1x512xf32>,
    %c1_i32_59 = arith.constant 1 : i32
    %123 = arith.addi %116, %c1_i32_59 : i32
    %124 = arith.index_cast %123 : i32 to index
    %125 = memref.load %arg1[%124] : memref<128xi32, #tpu.memory_space<smem>>
    %126 = arith.index_cast %125 : i32 to index
    %c0_60 = arith.constant 0 : index
    %127 = vector.load %arg2[%126, %c0_60] : memref<56x512xf32, #tpu.memory_space<vmem>>, vector<1x512xf32>
    %c10 = arith.constant 10 : index
    %c0_61 = arith.constant 0 : index
    %128 = vector.load %arg8[%c10, %c0_61] : memref<64x512xf32, #tpu.memory_space<vmem>>, vector<1x512xf32>
    tpu.vector_store %arg8[%c10, %c0_61], %127 {strides = array<i32>} : memref<64x512xf32, #tpu.memory_space<vmem>>, vector<1x512xf32>,
    %c2_i32_62 = arith.constant 2 : i32
    %129 = arith.addi %116, %c2_i32_62 : i32
    %130 = arith.index_cast %129 : i32 to index
    %131 = memref.load %arg1[%130] : memref<128xi32, #tpu.memory_space<smem>>
    %132 = arith.index_cast %131 : i32 to index
    %c0_63 = arith.constant 0 : index
    %133 = vector.load %arg2[%132, %c0_63] : memref<56x512xf32, #tpu.memory_space<vmem>>, vector<1x512xf32>
    %c18 = arith.constant 18 : index
    %c0_64 = arith.constant 0 : index
    %134 = vector.load %arg8[%c18, %c0_64] : memref<64x512xf32, #tpu.memory_space<vmem>>, vector<1x512xf32>
    tpu.vector_store %arg8[%c18, %c0_64], %133 {strides = array<i32>} : memref<64x512xf32, #tpu.memory_space<vmem>>, vector<1x512xf32>,
    %c3_i32_65 = arith.constant 3 : i32
    %135 = arith.addi %116, %c3_i32_65 : i32
    %136 = arith.index_cast %135 : i32 to index
    %137 = memref.load %arg1[%136] : memref<128xi32, #tpu.memory_space<smem>>
    %138 = arith.index_cast %137 : i32 to index
    %c0_66 = arith.constant 0 : index
    %139 = vector.load %arg2[%138, %c0_66] : memref<56x512xf32, #tpu.memory_space<vmem>>, vector<1x512xf32>
    %c26 = arith.constant 26 : index
    %c0_67 = arith.constant 0 : index
    %140 = vector.load %arg8[%c26, %c0_67] : memref<64x512xf32, #tpu.memory_space<vmem>>, vector<1x512xf32>
    tpu.vector_store %arg8[%c26, %c0_67], %139 {strides = array<i32>} : memref<64x512xf32, #tpu.memory_space<vmem>>, vector<1x512xf32>,
    %c4_i32_68 = arith.constant 4 : i32
    %141 = arith.addi %116, %c4_i32_68 : i32
    %142 = arith.index_cast %141 : i32 to index
    %143 = memref.load %arg1[%142] : memref<128xi32, #tpu.memory_space<smem>>
    %144 = arith.index_cast %143 : i32 to index
    %c0_69 = arith.constant 0 : index
    %145 = vector.load %arg2[%144, %c0_69] : memref<56x512xf32, #tpu.memory_space<vmem>>, vector<1x512xf32>
    %c34 = arith.constant 34 : index
    %c0_70 = arith.constant 0 : index
    %146 = vector.load %arg8[%c34, %c0_70] : memref<64x512xf32, #tpu.memory_space<vmem>>, vector<1x512xf32>
    tpu.vector_store %arg8[%c34, %c0_70], %145 {strides = array<i32>} : memref<64x512xf32, #tpu.memory_space<vmem>>, vector<1x512xf32>,
    %c5_i32_71 = arith.constant 5 : i32
    %147 = arith.addi %116, %c5_i32_71 : i32
    %148 = arith.index_cast %147 : i32 to index
    %149 = memref.load %arg1[%148] : memref<128xi32, #tpu.memory_space<smem>>
    %150 = arith.index_cast %149 : i32 to index
    %c0_72 = arith.constant 0 : index
    %151 = vector.load %arg2[%150, %c0_72] : memref<56x512xf32, #tpu.memory_space<vmem>>, vector<1x512xf32>
    %c42 = arith.constant 42 : index
    %c0_73 = arith.constant 0 : index
    %152 = vector.load %arg8[%c42, %c0_73] : memref<64x512xf32, #tpu.memory_space<vmem>>, vector<1x512xf32>
    tpu.vector_store %arg8[%c42, %c0_73], %151 {strides = array<i32>} : memref<64x512xf32, #tpu.memory_space<vmem>>, vector<1x512xf32>,
    %c6_i32_74 = arith.constant 6 : i32
    %153 = arith.addi %116, %c6_i32_74 : i32
    %154 = arith.index_cast %153 : i32 to index
    %155 = memref.load %arg1[%154] : memref<128xi32, #tpu.memory_space<smem>>
    %156 = arith.index_cast %155 : i32 to index
    %c0_75 = arith.constant 0 : index
    %157 = vector.load %arg2[%156, %c0_75] : memref<56x512xf32, #tpu.memory_space<vmem>>, vector<1x512xf32>
    %c50 = arith.constant 50 : index
    %c0_76 = arith.constant 0 : index
    %158 = vector.load %arg8[%c50, %c0_76] : memref<64x512xf32, #tpu.memory_space<vmem>>, vector<1x512xf32>
    tpu.vector_store %arg8[%c50, %c0_76], %157 {strides = array<i32>} : memref<64x512xf32, #tpu.memory_space<vmem>>, vector<1x512xf32>,
    %c7_i32_77 = arith.constant 7 : i32
    %159 = arith.addi %116, %c7_i32_77 : i32
    %160 = arith.index_cast %159 : i32 to index
    %161 = memref.load %arg1[%160] : memref<128xi32, #tpu.memory_space<smem>>
    %162 = arith.index_cast %161 : i32 to index
    %c0_78 = arith.constant 0 : index
    %163 = vector.load %arg2[%162, %c0_78] : memref<56x512xf32, #tpu.memory_space<vmem>>, vector<1x512xf32>
    %c58 = arith.constant 58 : index
    %c0_79 = arith.constant 0 : index
    %164 = vector.load %arg8[%c58, %c0_79] : memref<64x512xf32, #tpu.memory_space<vmem>>, vector<1x512xf32>
    tpu.vector_store %arg8[%c58, %c0_79], %163 {strides = array<i32>} : memref<64x512xf32, #tpu.memory_space<vmem>>, vector<1x512xf32>,
    %c8_i32_80 = arith.constant 8 : i32
    %165 = arith.addi %116, %c8_i32_80 : i32
    %c1_i32_81 = arith.constant 1 : i32
    %166 = arith.subi %165, %c1_i32_81 : i32
    %167 = arith.index_cast %166 : i32 to index
    %168 = memref.load %arg1[%167] : memref<128xi32, #tpu.memory_space<smem>>
    %169 = arith.index_cast %168 : i32 to index
    %c0_82 = arith.constant 0 : index
    %170 = vector.load %arg3[%169, %c0_82] : memref<56x512xf32, #tpu.memory_space<vmem>>, vector<1x512xf32>
    %c2_83 = arith.constant 2 : index
    %c0_84 = arith.constant 0 : index
    %171 = vector.load %arg9[%c2_83, %c0_84] : memref<8x512xf32, #tpu.memory_space<vmem>>, vector<1x512xf32>
    tpu.vector_store %arg9[%c2_83, %c0_84], %170 {strides = array<i32>} : memref<8x512xf32, #tpu.memory_space<vmem>>, vector<1x512xf32>,
    %c3_i32_85 = arith.constant 3 : i32
    %172 = arith.addi %0, %c3_i32_85 : i32
    %c8_i32_86 = arith.constant 8 : i32
    %173 = arith.muli %172, %c8_i32_86 : i32
    %c0_i32_87 = arith.constant 0 : i32
    %174 = arith.addi %173, %c0_i32_87 : i32
    %175 = arith.index_cast %174 : i32 to index
    %176 = memref.load %arg1[%175] : memref<128xi32, #tpu.memory_space<smem>>
    %177 = arith.index_cast %176 : i32 to index
    %c0_88 = arith.constant 0 : index
    %178 = vector.load %arg2[%177, %c0_88] : memref<56x512xf32, #tpu.memory_space<vmem>>, vector<1x512xf32>
    %c3 = arith.constant 3 : index
    %c0_89 = arith.constant 0 : index
    %179 = vector.load %arg8[%c3, %c0_89] : memref<64x512xf32, #tpu.memory_space<vmem>>, vector<1x512xf32>
    tpu.vector_store %arg8[%c3, %c0_89], %178 {strides = array<i32>} : memref<64x512xf32, #tpu.memory_space<vmem>>, vector<1x512xf32>,
    %c1_i32_90 = arith.constant 1 : i32
    %180 = arith.addi %173, %c1_i32_90 : i32
    %181 = arith.index_cast %180 : i32 to index
    %182 = memref.load %arg1[%181] : memref<128xi32, #tpu.memory_space<smem>>
    %183 = arith.index_cast %182 : i32 to index
    %c0_91 = arith.constant 0 : index
    %184 = vector.load %arg2[%183, %c0_91] : memref<56x512xf32, #tpu.memory_space<vmem>>, vector<1x512xf32>
    %c11 = arith.constant 11 : index
    %c0_92 = arith.constant 0 : index
    %185 = vector.load %arg8[%c11, %c0_92] : memref<64x512xf32, #tpu.memory_space<vmem>>, vector<1x512xf32>
    tpu.vector_store %arg8[%c11, %c0_92], %184 {strides = array<i32>} : memref<64x512xf32, #tpu.memory_space<vmem>>, vector<1x512xf32>,
    %c2_i32_93 = arith.constant 2 : i32
    %186 = arith.addi %173, %c2_i32_93 : i32
    %187 = arith.index_cast %186 : i32 to index
    %188 = memref.load %arg1[%187] : memref<128xi32, #tpu.memory_space<smem>>
    %189 = arith.index_cast %188 : i32 to index
    %c0_94 = arith.constant 0 : index
    %190 = vector.load %arg2[%189, %c0_94] : memref<56x512xf32, #tpu.memory_space<vmem>>, vector<1x512xf32>
    %c19 = arith.constant 19 : index
    %c0_95 = arith.constant 0 : index
    %191 = vector.load %arg8[%c19, %c0_95] : memref<64x512xf32, #tpu.memory_space<vmem>>, vector<1x512xf32>
    tpu.vector_store %arg8[%c19, %c0_95], %190 {strides = array<i32>} : memref<64x512xf32, #tpu.memory_space<vmem>>, vector<1x512xf32>,
    %c3_i32_96 = arith.constant 3 : i32
    %192 = arith.addi %173, %c3_i32_96 : i32
    %193 = arith.index_cast %192 : i32 to index
    %194 = memref.load %arg1[%193] : memref<128xi32, #tpu.memory_space<smem>>
    %195 = arith.index_cast %194 : i32 to index
    %c0_97 = arith.constant 0 : index
    %196 = vector.load %arg2[%195, %c0_97] : memref<56x512xf32, #tpu.memory_space<vmem>>, vector<1x512xf32>
    %c27 = arith.constant 27 : index
    %c0_98 = arith.constant 0 : index
    %197 = vector.load %arg8[%c27, %c0_98] : memref<64x512xf32, #tpu.memory_space<vmem>>, vector<1x512xf32>
    tpu.vector_store %arg8[%c27, %c0_98], %196 {strides = array<i32>} : memref<64x512xf32, #tpu.memory_space<vmem>>, vector<1x512xf32>,
    %c4_i32_99 = arith.constant 4 : i32
    %198 = arith.addi %173, %c4_i32_99 : i32
    %199 = arith.index_cast %198 : i32 to index
    %200 = memref.load %arg1[%199] : memref<128xi32, #tpu.memory_space<smem>>
    %201 = arith.index_cast %200 : i32 to index
    %c0_100 = arith.constant 0 : index
    %202 = vector.load %arg2[%201, %c0_100] : memref<56x512xf32, #tpu.memory_space<vmem>>, vector<1x512xf32>
    %c35 = arith.constant 35 : index
    %c0_101 = arith.constant 0 : index
    %203 = vector.load %arg8[%c35, %c0_101] : memref<64x512xf32, #tpu.memory_space<vmem>>, vector<1x512xf32>
    tpu.vector_store %arg8[%c35, %c0_101], %202 {strides = array<i32>} : memref<64x512xf32, #tpu.memory_space<vmem>>, vector<1x512xf32>,
    %c5_i32_102 = arith.constant 5 : i32
    %204 = arith.addi %173, %c5_i32_102 : i32
    %205 = arith.index_cast %204 : i32 to index
    %206 = memref.load %arg1[%205] : memref<128xi32, #tpu.memory_space<smem>>
    %207 = arith.index_cast %206 : i32 to index
    %c0_103 = arith.constant 0 : index
    %208 = vector.load %arg2[%207, %c0_103] : memref<56x512xf32, #tpu.memory_space<vmem>>, vector<1x512xf32>
    %c43 = arith.constant 43 : index
    %c0_104 = arith.constant 0 : index
    %209 = vector.load %arg8[%c43, %c0_104] : memref<64x512xf32, #tpu.memory_space<vmem>>, vector<1x512xf32>
    tpu.vector_store %arg8[%c43, %c0_104], %208 {strides = array<i32>} : memref<64x512xf32, #tpu.memory_space<vmem>>, vector<1x512xf32>,
    %c6_i32_105 = arith.constant 6 : i32
    %210 = arith.addi %173, %c6_i32_105 : i32
    %211 = arith.index_cast %210 : i32 to index
    %212 = memref.load %arg1[%211] : memref<128xi32, #tpu.memory_space<smem>>
    %213 = arith.index_cast %212 : i32 to index
    %c0_106 = arith.constant 0 : index
    %214 = vector.load %arg2[%213, %c0_106] : memref<56x512xf32, #tpu.memory_space<vmem>>, vector<1x512xf32>
    %c51 = arith.constant 51 : index
    %c0_107 = arith.constant 0 : index
    %215 = vector.load %arg8[%c51, %c0_107] : memref<64x512xf32, #tpu.memory_space<vmem>>, vector<1x512xf32>
    tpu.vector_store %arg8[%c51, %c0_107], %214 {strides = array<i32>} : memref<64x512xf32, #tpu.memory_space<vmem>>, vector<1x512xf32>,
    %c7_i32_108 = arith.constant 7 : i32
    %216 = arith.addi %173, %c7_i32_108 : i32
    %217 = arith.index_cast %216 : i32 to index
    %218 = memref.load %arg1[%217] : memref<128xi32, #tpu.memory_space<smem>>
    %219 = arith.index_cast %218 : i32 to index
    %c0_109 = arith.constant 0 : index
    %220 = vector.load %arg2[%219, %c0_109] : memref<56x512xf32, #tpu.memory_space<vmem>>, vector<1x512xf32>
    %c59 = arith.constant 59 : index
    %c0_110 = arith.constant 0 : index
    %221 = vector.load %arg8[%c59, %c0_110] : memref<64x512xf32, #tpu.memory_space<vmem>>, vector<1x512xf32>
    tpu.vector_store %arg8[%c59, %c0_110], %220 {strides = array<i32>} : memref<64x512xf32, #tpu.memory_space<vmem>>, vector<1x512xf32>,
    %c8_i32_111 = arith.constant 8 : i32
    %222 = arith.addi %173, %c8_i32_111 : i32
    %c1_i32_112 = arith.constant 1 : i32
    %223 = arith.subi %222, %c1_i32_112 : i32
    %224 = arith.index_cast %223 : i32 to index
    %225 = memref.load %arg1[%224] : memref<128xi32, #tpu.memory_space<smem>>
    %226 = arith.index_cast %225 : i32 to index
    %c0_113 = arith.constant 0 : index
    %227 = vector.load %arg3[%226, %c0_113] : memref<56x512xf32, #tpu.memory_space<vmem>>, vector<1x512xf32>
    %c3_114 = arith.constant 3 : index
    %c0_115 = arith.constant 0 : index
    %228 = vector.load %arg9[%c3_114, %c0_115] : memref<8x512xf32, #tpu.memory_space<vmem>>, vector<1x512xf32>
    tpu.vector_store %arg9[%c3_114, %c0_115], %227 {strides = array<i32>} : memref<8x512xf32, #tpu.memory_space<vmem>>, vector<1x512xf32>,
    %c4_i32_116 = arith.constant 4 : i32
    %229 = arith.addi %0, %c4_i32_116 : i32
    %c8_i32_117 = arith.constant 8 : i32
    %230 = arith.muli %229, %c8_i32_117 : i32
    %c0_i32_118 = arith.constant 0 : i32
    %231 = arith.addi %230, %c0_i32_118 : i32
    %232 = arith.index_cast %231 : i32 to index
    %233 = memref.load %arg1[%232] : memref<128xi32, #tpu.memory_space<smem>>
    %234 = arith.index_cast %233 : i32 to index
    %c0_119 = arith.constant 0 : index
    %235 = vector.load %arg2[%234, %c0_119] : memref<56x512xf32, #tpu.memory_space<vmem>>, vector<1x512xf32>
    %c4 = arith.constant 4 : index
    %c0_120 = arith.constant 0 : index
    %236 = vector.load %arg8[%c4, %c0_120] : memref<64x512xf32, #tpu.memory_space<vmem>>, vector<1x512xf32>
    tpu.vector_store %arg8[%c4, %c0_120], %235 {strides = array<i32>} : memref<64x512xf32, #tpu.memory_space<vmem>>, vector<1x512xf32>,
    %c1_i32_121 = arith.constant 1 : i32
    %237 = arith.addi %230, %c1_i32_121 : i32
    %238 = arith.index_cast %237 : i32 to index
    %239 = memref.load %arg1[%238] : memref<128xi32, #tpu.memory_space<smem>>
    %240 = arith.index_cast %239 : i32 to index
    %c0_122 = arith.constant 0 : index
    %241 = vector.load %arg2[%240, %c0_122] : memref<56x512xf32, #tpu.memory_space<vmem>>, vector<1x512xf32>
    %c12 = arith.constant 12 : index
    %c0_123 = arith.constant 0 : index
    %242 = vector.load %arg8[%c12, %c0_123] : memref<64x512xf32, #tpu.memory_space<vmem>>, vector<1x512xf32>
    tpu.vector_store %arg8[%c12, %c0_123], %241 {strides = array<i32>} : memref<64x512xf32, #tpu.memory_space<vmem>>, vector<1x512xf32>,
    %c2_i32_124 = arith.constant 2 : i32
    %243 = arith.addi %230, %c2_i32_124 : i32
    %244 = arith.index_cast %243 : i32 to index
    %245 = memref.load %arg1[%244] : memref<128xi32, #tpu.memory_space<smem>>
    %246 = arith.index_cast %245 : i32 to index
    %c0_125 = arith.constant 0 : index
    %247 = vector.load %arg2[%246, %c0_125] : memref<56x512xf32, #tpu.memory_space<vmem>>, vector<1x512xf32>
    %c20 = arith.constant 20 : index
    %c0_126 = arith.constant 0 : index
    %248 = vector.load %arg8[%c20, %c0_126] : memref<64x512xf32, #tpu.memory_space<vmem>>, vector<1x512xf32>
    tpu.vector_store %arg8[%c20, %c0_126], %247 {strides = array<i32>} : memref<64x512xf32, #tpu.memory_space<vmem>>, vector<1x512xf32>,
    %c3_i32_127 = arith.constant 3 : i32
    %249 = arith.addi %230, %c3_i32_127 : i32
    %250 = arith.index_cast %249 : i32 to index
    %251 = memref.load %arg1[%250] : memref<128xi32, #tpu.memory_space<smem>>
    %252 = arith.index_cast %251 : i32 to index
    %c0_128 = arith.constant 0 : index
    %253 = vector.load %arg2[%252, %c0_128] : memref<56x512xf32, #tpu.memory_space<vmem>>, vector<1x512xf32>
    %c28 = arith.constant 28 : index
    %c0_129 = arith.constant 0 : index
    %254 = vector.load %arg8[%c28, %c0_129] : memref<64x512xf32, #tpu.memory_space<vmem>>, vector<1x512xf32>
    tpu.vector_store %arg8[%c28, %c0_129], %253 {strides = array<i32>} : memref<64x512xf32, #tpu.memory_space<vmem>>, vector<1x512xf32>,
    %c4_i32_130 = arith.constant 4 : i32
    %255 = arith.addi %230, %c4_i32_130 : i32
    %256 = arith.index_cast %255 : i32 to index
    %257 = memref.load %arg1[%256] : memref<128xi32, #tpu.memory_space<smem>>
    %258 = arith.index_cast %257 : i32 to index
    %c0_131 = arith.constant 0 : index
    %259 = vector.load %arg2[%258, %c0_131] : memref<56x512xf32, #tpu.memory_space<vmem>>, vector<1x512xf32>
    %c36 = arith.constant 36 : index
    %c0_132 = arith.constant 0 : index
    %260 = vector.load %arg8[%c36, %c0_132] : memref<64x512xf32, #tpu.memory_space<vmem>>, vector<1x512xf32>
    tpu.vector_store %arg8[%c36, %c0_132], %259 {strides = array<i32>} : memref<64x512xf32, #tpu.memory_space<vmem>>, vector<1x512xf32>,
    %c5_i32_133 = arith.constant 5 : i32
    %261 = arith.addi %230, %c5_i32_133 : i32
    %262 = arith.index_cast %261 : i32 to index
    %263 = memref.load %arg1[%262] : memref<128xi32, #tpu.memory_space<smem>>
    %264 = arith.index_cast %263 : i32 to index
    %c0_134 = arith.constant 0 : index
    %265 = vector.load %arg2[%264, %c0_134] : memref<56x512xf32, #tpu.memory_space<vmem>>, vector<1x512xf32>
    %c44 = arith.constant 44 : index
    %c0_135 = arith.constant 0 : index
    %266 = vector.load %arg8[%c44, %c0_135] : memref<64x512xf32, #tpu.memory_space<vmem>>, vector<1x512xf32>
    tpu.vector_store %arg8[%c44, %c0_135], %265 {strides = array<i32>} : memref<64x512xf32, #tpu.memory_space<vmem>>, vector<1x512xf32>,
    %c6_i32_136 = arith.constant 6 : i32
    %267 = arith.addi %230, %c6_i32_136 : i32
    %268 = arith.index_cast %267 : i32 to index
    %269 = memref.load %arg1[%268] : memref<128xi32, #tpu.memory_space<smem>>
    %270 = arith.index_cast %269 : i32 to index
    %c0_137 = arith.constant 0 : index
    %271 = vector.load %arg2[%270, %c0_137] : memref<56x512xf32, #tpu.memory_space<vmem>>, vector<1x512xf32>
    %c52 = arith.constant 52 : index
    %c0_138 = arith.constant 0 : index
    %272 = vector.load %arg8[%c52, %c0_138] : memref<64x512xf32, #tpu.memory_space<vmem>>, vector<1x512xf32>
    tpu.vector_store %arg8[%c52, %c0_138], %271 {strides = array<i32>} : memref<64x512xf32, #tpu.memory_space<vmem>>, vector<1x512xf32>,
    %c7_i32_139 = arith.constant 7 : i32
    %273 = arith.addi %230, %c7_i32_139 : i32
    %274 = arith.index_cast %273 : i32 to index
    %275 = memref.load %arg1[%274] : memref<128xi32, #tpu.memory_space<smem>>
    %276 = arith.index_cast %275 : i32 to index
    %c0_140 = arith.constant 0 : index
    %277 = vector.load %arg2[%276, %c0_140] : memref<56x512xf32, #tpu.memory_space<vmem>>, vector<1x512xf32>
    %c60 = arith.constant 60 : index
    %c0_141 = arith.constant 0 : index
    %278 = vector.load %arg8[%c60, %c0_141] : memref<64x512xf32, #tpu.memory_space<vmem>>, vector<1x512xf32>
    tpu.vector_store %arg8[%c60, %c0_141], %277 {strides = array<i32>} : memref<64x512xf32, #tpu.memory_space<vmem>>, vector<1x512xf32>,
    %c8_i32_142 = arith.constant 8 : i32
    %279 = arith.addi %230, %c8_i32_142 : i32
    %c1_i32_143 = arith.constant 1 : i32
    %280 = arith.subi %279, %c1_i32_143 : i32
    %281 = arith.index_cast %280 : i32 to index
    %282 = memref.load %arg1[%281] : memref<128xi32, #tpu.memory_space<smem>>
    %283 = arith.index_cast %282 : i32 to index
    %c0_144 = arith.constant 0 : index
    %284 = vector.load %arg3[%283, %c0_144] : memref<56x512xf32, #tpu.memory_space<vmem>>, vector<1x512xf32>
    %c4_145 = arith.constant 4 : index
    %c0_146 = arith.constant 0 : index
    %285 = vector.load %arg9[%c4_145, %c0_146] : memref<8x512xf32, #tpu.memory_space<vmem>>, vector<1x512xf32>
    tpu.vector_store %arg9[%c4_145, %c0_146], %284 {strides = array<i32>} : memref<8x512xf32, #tpu.memory_space<vmem>>, vector<1x512xf32>,
    %c5_i32_147 = arith.constant 5 : i32
    %286 = arith.addi %0, %c5_i32_147 : i32
    %c8_i32_148 = arith.constant 8 : i32
    %287 = arith.muli %286, %c8_i32_148 : i32
    %c0_i32_149 = arith.constant 0 : i32
    %288 = arith.addi %287, %c0_i32_149 : i32
    %289 = arith.index_cast %288 : i32 to index
    %290 = memref.load %arg1[%289] : memref<128xi32, #tpu.memory_space<smem>>
    %291 = arith.index_cast %290 : i32 to index
    %c0_150 = arith.constant 0 : index
    %292 = vector.load %arg2[%291, %c0_150] : memref<56x512xf32, #tpu.memory_space<vmem>>, vector<1x512xf32>
    %c5 = arith.constant 5 : index
    %c0_151 = arith.constant 0 : index
    %293 = vector.load %arg8[%c5, %c0_151] : memref<64x512xf32, #tpu.memory_space<vmem>>, vector<1x512xf32>
    tpu.vector_store %arg8[%c5, %c0_151], %292 {strides = array<i32>} : memref<64x512xf32, #tpu.memory_space<vmem>>, vector<1x512xf32>,
    %c1_i32_152 = arith.constant 1 : i32
    %294 = arith.addi %287, %c1_i32_152 : i32
    %295 = arith.index_cast %294 : i32 to index
    %296 = memref.load %arg1[%295] : memref<128xi32, #tpu.memory_space<smem>>
    %297 = arith.index_cast %296 : i32 to index
    %c0_153 = arith.constant 0 : index
    %298 = vector.load %arg2[%297, %c0_153] : memref<56x512xf32, #tpu.memory_space<vmem>>, vector<1x512xf32>
    %c13 = arith.constant 13 : index
    %c0_154 = arith.constant 0 : index
    %299 = vector.load %arg8[%c13, %c0_154] : memref<64x512xf32, #tpu.memory_space<vmem>>, vector<1x512xf32>
    tpu.vector_store %arg8[%c13, %c0_154], %298 {strides = array<i32>} : memref<64x512xf32, #tpu.memory_space<vmem>>, vector<1x512xf32>,
    %c2_i32_155 = arith.constant 2 : i32
    %300 = arith.addi %287, %c2_i32_155 : i32
    %301 = arith.index_cast %300 : i32 to index
    %302 = memref.load %arg1[%301] : memref<128xi32, #tpu.memory_space<smem>>
    %303 = arith.index_cast %302 : i32 to index
    %c0_156 = arith.constant 0 : index
    %304 = vector.load %arg2[%303, %c0_156] : memref<56x512xf32, #tpu.memory_space<vmem>>, vector<1x512xf32>
    %c21 = arith.constant 21 : index
    %c0_157 = arith.constant 0 : index
    %305 = vector.load %arg8[%c21, %c0_157] : memref<64x512xf32, #tpu.memory_space<vmem>>, vector<1x512xf32>
    tpu.vector_store %arg8[%c21, %c0_157], %304 {strides = array<i32>} : memref<64x512xf32, #tpu.memory_space<vmem>>, vector<1x512xf32>,
    %c3_i32_158 = arith.constant 3 : i32
    %306 = arith.addi %287, %c3_i32_158 : i32
    %307 = arith.index_cast %306 : i32 to index
    %308 = memref.load %arg1[%307] : memref<128xi32, #tpu.memory_space<smem>>
    %309 = arith.index_cast %308 : i32 to index
    %c0_159 = arith.constant 0 : index
    %310 = vector.load %arg2[%309, %c0_159] : memref<56x512xf32, #tpu.memory_space<vmem>>, vector<1x512xf32>
    %c29 = arith.constant 29 : index
    %c0_160 = arith.constant 0 : index
    %311 = vector.load %arg8[%c29, %c0_160] : memref<64x512xf32, #tpu.memory_space<vmem>>, vector<1x512xf32>
    tpu.vector_store %arg8[%c29, %c0_160], %310 {strides = array<i32>} : memref<64x512xf32, #tpu.memory_space<vmem>>, vector<1x512xf32>,
    %c4_i32_161 = arith.constant 4 : i32
    %312 = arith.addi %287, %c4_i32_161 : i32
    %313 = arith.index_cast %312 : i32 to index
    %314 = memref.load %arg1[%313] : memref<128xi32, #tpu.memory_space<smem>>
    %315 = arith.index_cast %314 : i32 to index
    %c0_162 = arith.constant 0 : index
    %316 = vector.load %arg2[%315, %c0_162] : memref<56x512xf32, #tpu.memory_space<vmem>>, vector<1x512xf32>
    %c37 = arith.constant 37 : index
    %c0_163 = arith.constant 0 : index
    %317 = vector.load %arg8[%c37, %c0_163] : memref<64x512xf32, #tpu.memory_space<vmem>>, vector<1x512xf32>
    tpu.vector_store %arg8[%c37, %c0_163], %316 {strides = array<i32>} : memref<64x512xf32, #tpu.memory_space<vmem>>, vector<1x512xf32>,
    %c5_i32_164 = arith.constant 5 : i32
    %318 = arith.addi %287, %c5_i32_164 : i32
    %319 = arith.index_cast %318 : i32 to index
    %320 = memref.load %arg1[%319] : memref<128xi32, #tpu.memory_space<smem>>
    %321 = arith.index_cast %320 : i32 to index
    %c0_165 = arith.constant 0 : index
    %322 = vector.load %arg2[%321, %c0_165] : memref<56x512xf32, #tpu.memory_space<vmem>>, vector<1x512xf32>
    %c45 = arith.constant 45 : index
    %c0_166 = arith.constant 0 : index
    %323 = vector.load %arg8[%c45, %c0_166] : memref<64x512xf32, #tpu.memory_space<vmem>>, vector<1x512xf32>
    tpu.vector_store %arg8[%c45, %c0_166], %322 {strides = array<i32>} : memref<64x512xf32, #tpu.memory_space<vmem>>, vector<1x512xf32>,
    %c6_i32_167 = arith.constant 6 : i32
    %324 = arith.addi %287, %c6_i32_167 : i32
    %325 = arith.index_cast %324 : i32 to index
    %326 = memref.load %arg1[%325] : memref<128xi32, #tpu.memory_space<smem>>
    %327 = arith.index_cast %326 : i32 to index
    %c0_168 = arith.constant 0 : index
    %328 = vector.load %arg2[%327, %c0_168] : memref<56x512xf32, #tpu.memory_space<vmem>>, vector<1x512xf32>
    %c53 = arith.constant 53 : index
    %c0_169 = arith.constant 0 : index
    %329 = vector.load %arg8[%c53, %c0_169] : memref<64x512xf32, #tpu.memory_space<vmem>>, vector<1x512xf32>
    tpu.vector_store %arg8[%c53, %c0_169], %328 {strides = array<i32>} : memref<64x512xf32, #tpu.memory_space<vmem>>, vector<1x512xf32>,
    %c7_i32_170 = arith.constant 7 : i32
    %330 = arith.addi %287, %c7_i32_170 : i32
    %331 = arith.index_cast %330 : i32 to index
    %332 = memref.load %arg1[%331] : memref<128xi32, #tpu.memory_space<smem>>
    %333 = arith.index_cast %332 : i32 to index
    %c0_171 = arith.constant 0 : index
    %334 = vector.load %arg2[%333, %c0_171] : memref<56x512xf32, #tpu.memory_space<vmem>>, vector<1x512xf32>
    %c61 = arith.constant 61 : index
    %c0_172 = arith.constant 0 : index
    %335 = vector.load %arg8[%c61, %c0_172] : memref<64x512xf32, #tpu.memory_space<vmem>>, vector<1x512xf32>
    tpu.vector_store %arg8[%c61, %c0_172], %334 {strides = array<i32>} : memref<64x512xf32, #tpu.memory_space<vmem>>, vector<1x512xf32>,
    %c8_i32_173 = arith.constant 8 : i32
    %336 = arith.addi %287, %c8_i32_173 : i32
    %c1_i32_174 = arith.constant 1 : i32
    %337 = arith.subi %336, %c1_i32_174 : i32
    %338 = arith.index_cast %337 : i32 to index
    %339 = memref.load %arg1[%338] : memref<128xi32, #tpu.memory_space<smem>>
    %340 = arith.index_cast %339 : i32 to index
    %c0_175 = arith.constant 0 : index
    %341 = vector.load %arg3[%340, %c0_175] : memref<56x512xf32, #tpu.memory_space<vmem>>, vector<1x512xf32>
    %c5_176 = arith.constant 5 : index
    %c0_177 = arith.constant 0 : index
    %342 = vector.load %arg9[%c5_176, %c0_177] : memref<8x512xf32, #tpu.memory_space<vmem>>, vector<1x512xf32>
    tpu.vector_store %arg9[%c5_176, %c0_177], %341 {strides = array<i32>} : memref<8x512xf32, #tpu.memory_space<vmem>>, vector<1x512xf32>,
    %c6_i32_178 = arith.constant 6 : i32
    %343 = arith.addi %0, %c6_i32_178 : i32
    %c8_i32_179 = arith.constant 8 : i32
    %344 = arith.muli %343, %c8_i32_179 : i32
    %c0_i32_180 = arith.constant 0 : i32
    %345 = arith.addi %344, %c0_i32_180 : i32
    %346 = arith.index_cast %345 : i32 to index
    %347 = memref.load %arg1[%346] : memref<128xi32, #tpu.memory_space<smem>>
    %348 = arith.index_cast %347 : i32 to index
    %c0_181 = arith.constant 0 : index
    %349 = vector.load %arg2[%348, %c0_181] : memref<56x512xf32, #tpu.memory_space<vmem>>, vector<1x512xf32>
    %c6 = arith.constant 6 : index
    %c0_182 = arith.constant 0 : index
    %350 = vector.load %arg8[%c6, %c0_182] : memref<64x512xf32, #tpu.memory_space<vmem>>, vector<1x512xf32>
    tpu.vector_store %arg8[%c6, %c0_182], %349 {strides = array<i32>} : memref<64x512xf32, #tpu.memory_space<vmem>>, vector<1x512xf32>,
    %c1_i32_183 = arith.constant 1 : i32
    %351 = arith.addi %344, %c1_i32_183 : i32
    %352 = arith.index_cast %351 : i32 to index
    %353 = memref.load %arg1[%352] : memref<128xi32, #tpu.memory_space<smem>>
    %354 = arith.index_cast %353 : i32 to index
    %c0_184 = arith.constant 0 : index
    %355 = vector.load %arg2[%354, %c0_184] : memref<56x512xf32, #tpu.memory_space<vmem>>, vector<1x512xf32>
    %c14 = arith.constant 14 : index
    %c0_185 = arith.constant 0 : index
    %356 = vector.load %arg8[%c14, %c0_185] : memref<64x512xf32, #tpu.memory_space<vmem>>, vector<1x512xf32>
    tpu.vector_store %arg8[%c14, %c0_185], %355 {strides = array<i32>} : memref<64x512xf32, #tpu.memory_space<vmem>>, vector<1x512xf32>,
    %c2_i32_186 = arith.constant 2 : i32
    %357 = arith.addi %344, %c2_i32_186 : i32
    %358 = arith.index_cast %357 : i32 to index
    %359 = memref.load %arg1[%358] : memref<128xi32, #tpu.memory_space<smem>>
    %360 = arith.index_cast %359 : i32 to index
    %c0_187 = arith.constant 0 : index
    %361 = vector.load %arg2[%360, %c0_187] : memref<56x512xf32, #tpu.memory_space<vmem>>, vector<1x512xf32>
    %c22 = arith.constant 22 : index
    %c0_188 = arith.constant 0 : index
    %362 = vector.load %arg8[%c22, %c0_188] : memref<64x512xf32, #tpu.memory_space<vmem>>, vector<1x512xf32>
    tpu.vector_store %arg8[%c22, %c0_188], %361 {strides = array<i32>} : memref<64x512xf32, #tpu.memory_space<vmem>>, vector<1x512xf32>,
    %c3_i32_189 = arith.constant 3 : i32
    %363 = arith.addi %344, %c3_i32_189 : i32
    %364 = arith.index_cast %363 : i32 to index
    %365 = memref.load %arg1[%364] : memref<128xi32, #tpu.memory_space<smem>>
    %366 = arith.index_cast %365 : i32 to index
    %c0_190 = arith.constant 0 : index
    %367 = vector.load %arg2[%366, %c0_190] : memref<56x512xf32, #tpu.memory_space<vmem>>, vector<1x512xf32>
    %c30 = arith.constant 30 : index
    %c0_191 = arith.constant 0 : index
    %368 = vector.load %arg8[%c30, %c0_191] : memref<64x512xf32, #tpu.memory_space<vmem>>, vector<1x512xf32>
    tpu.vector_store %arg8[%c30, %c0_191], %367 {strides = array<i32>} : memref<64x512xf32, #tpu.memory_space<vmem>>, vector<1x512xf32>,
    %c4_i32_192 = arith.constant 4 : i32
    %369 = arith.addi %344, %c4_i32_192 : i32
    %370 = arith.index_cast %369 : i32 to index
    %371 = memref.load %arg1[%370] : memref<128xi32, #tpu.memory_space<smem>>
    %372 = arith.index_cast %371 : i32 to index
    %c0_193 = arith.constant 0 : index
    %373 = vector.load %arg2[%372, %c0_193] : memref<56x512xf32, #tpu.memory_space<vmem>>, vector<1x512xf32>
    %c38 = arith.constant 38 : index
    %c0_194 = arith.constant 0 : index
    %374 = vector.load %arg8[%c38, %c0_194] : memref<64x512xf32, #tpu.memory_space<vmem>>, vector<1x512xf32>
    tpu.vector_store %arg8[%c38, %c0_194], %373 {strides = array<i32>} : memref<64x512xf32, #tpu.memory_space<vmem>>, vector<1x512xf32>,
    %c5_i32_195 = arith.constant 5 : i32
    %375 = arith.addi %344, %c5_i32_195 : i32
    %376 = arith.index_cast %375 : i32 to index
    %377 = memref.load %arg1[%376] : memref<128xi32, #tpu.memory_space<smem>>
    %378 = arith.index_cast %377 : i32 to index
    %c0_196 = arith.constant 0 : index
    %379 = vector.load %arg2[%378, %c0_196] : memref<56x512xf32, #tpu.memory_space<vmem>>, vector<1x512xf32>
    %c46 = arith.constant 46 : index
    %c0_197 = arith.constant 0 : index
    %380 = vector.load %arg8[%c46, %c0_197] : memref<64x512xf32, #tpu.memory_space<vmem>>, vector<1x512xf32>
    tpu.vector_store %arg8[%c46, %c0_197], %379 {strides = array<i32>} : memref<64x512xf32, #tpu.memory_space<vmem>>, vector<1x512xf32>,
    %c6_i32_198 = arith.constant 6 : i32
    %381 = arith.addi %344, %c6_i32_198 : i32
    %382 = arith.index_cast %381 : i32 to index
    %383 = memref.load %arg1[%382] : memref<128xi32, #tpu.memory_space<smem>>
    %384 = arith.index_cast %383 : i32 to index
    %c0_199 = arith.constant 0 : index
    %385 = vector.load %arg2[%384, %c0_199] : memref<56x512xf32, #tpu.memory_space<vmem>>, vector<1x512xf32>
    %c54 = arith.constant 54 : index
    %c0_200 = arith.constant 0 : index
    %386 = vector.load %arg8[%c54, %c0_200] : memref<64x512xf32, #tpu.memory_space<vmem>>, vector<1x512xf32>
    tpu.vector_store %arg8[%c54, %c0_200], %385 {strides = array<i32>} : memref<64x512xf32, #tpu.memory_space<vmem>>, vector<1x512xf32>,
    %c7_i32_201 = arith.constant 7 : i32
    %387 = arith.addi %344, %c7_i32_201 : i32
    %388 = arith.index_cast %387 : i32 to index
    %389 = memref.load %arg1[%388] : memref<128xi32, #tpu.memory_space<smem>>
    %390 = arith.index_cast %389 : i32 to index
    %c0_202 = arith.constant 0 : index
    %391 = vector.load %arg2[%390, %c0_202] : memref<56x512xf32, #tpu.memory_space<vmem>>, vector<1x512xf32>
    %c62 = arith.constant 62 : index
    %c0_203 = arith.constant 0 : index
    %392 = vector.load %arg8[%c62, %c0_203] : memref<64x512xf32, #tpu.memory_space<vmem>>, vector<1x512xf32>
    tpu.vector_store %arg8[%c62, %c0_203], %391 {strides = array<i32>} : memref<64x512xf32, #tpu.memory_space<vmem>>, vector<1x512xf32>,
    %c8_i32_204 = arith.constant 8 : i32
    %393 = arith.addi %344, %c8_i32_204 : i32
    %c1_i32_205 = arith.constant 1 : i32
    %394 = arith.subi %393, %c1_i32_205 : i32
    %395 = arith.index_cast %394 : i32 to index
    %396 = memref.load %arg1[%395] : memref<128xi32, #tpu.memory_space<smem>>
    %397 = arith.index_cast %396 : i32 to index
    %c0_206 = arith.constant 0 : index
    %398 = vector.load %arg3[%397, %c0_206] : memref<56x512xf32, #tpu.memory_space<vmem>>, vector<1x512xf32>
    %c6_207 = arith.constant 6 : index
    %c0_208 = arith.constant 0 : index
    %399 = vector.load %arg9[%c6_207, %c0_208] : memref<8x512xf32, #tpu.memory_space<vmem>>, vector<1x512xf32>
    tpu.vector_store %arg9[%c6_207, %c0_208], %398 {strides = array<i32>} : memref<8x512xf32, #tpu.memory_space<vmem>>, vector<1x512xf32>,
    %c7_i32_209 = arith.constant 7 : i32
    %400 = arith.addi %0, %c7_i32_209 : i32
    %c8_i32_210 = arith.constant 8 : i32
    %401 = arith.muli %400, %c8_i32_210 : i32
    %c0_i32_211 = arith.constant 0 : i32
    %402 = arith.addi %401, %c0_i32_211 : i32
    %403 = arith.index_cast %402 : i32 to index
    %404 = memref.load %arg1[%403] : memref<128xi32, #tpu.memory_space<smem>>
    %405 = arith.index_cast %404 : i32 to index
    %c0_212 = arith.constant 0 : index
    %406 = vector.load %arg2[%405, %c0_212] : memref<56x512xf32, #tpu.memory_space<vmem>>, vector<1x512xf32>
    %c7 = arith.constant 7 : index
    %c0_213 = arith.constant 0 : index
    %407 = vector.load %arg8[%c7, %c0_213] : memref<64x512xf32, #tpu.memory_space<vmem>>, vector<1x512xf32>
    tpu.vector_store %arg8[%c7, %c0_213], %406 {strides = array<i32>} : memref<64x512xf32, #tpu.memory_space<vmem>>, vector<1x512xf32>,
    %c1_i32_214 = arith.constant 1 : i32
    %408 = arith.addi %401, %c1_i32_214 : i32
    %409 = arith.index_cast %408 : i32 to index
    %410 = memref.load %arg1[%409] : memref<128xi32, #tpu.memory_space<smem>>
    %411 = arith.index_cast %410 : i32 to index
    %c0_215 = arith.constant 0 : index
    %412 = vector.load %arg2[%411, %c0_215] : memref<56x512xf32, #tpu.memory_space<vmem>>, vector<1x512xf32>
    %c15 = arith.constant 15 : index
    %c0_216 = arith.constant 0 : index
    %413 = vector.load %arg8[%c15, %c0_216] : memref<64x512xf32, #tpu.memory_space<vmem>>, vector<1x512xf32>
    tpu.vector_store %arg8[%c15, %c0_216], %412 {strides = array<i32>} : memref<64x512xf32, #tpu.memory_space<vmem>>, vector<1x512xf32>,
    %c2_i32_217 = arith.constant 2 : i32
    %414 = arith.addi %401, %c2_i32_217 : i32
    %415 = arith.index_cast %414 : i32 to index
    %416 = memref.load %arg1[%415] : memref<128xi32, #tpu.memory_space<smem>>
    %417 = arith.index_cast %416 : i32 to index
    %c0_218 = arith.constant 0 : index
    %418 = vector.load %arg2[%417, %c0_218] : memref<56x512xf32, #tpu.memory_space<vmem>>, vector<1x512xf32>
    %c23 = arith.constant 23 : index
    %c0_219 = arith.constant 0 : index
    %419 = vector.load %arg8[%c23, %c0_219] : memref<64x512xf32, #tpu.memory_space<vmem>>, vector<1x512xf32>
    tpu.vector_store %arg8[%c23, %c0_219], %418 {strides = array<i32>} : memref<64x512xf32, #tpu.memory_space<vmem>>, vector<1x512xf32>,
    %c3_i32_220 = arith.constant 3 : i32
    %420 = arith.addi %401, %c3_i32_220 : i32
    %421 = arith.index_cast %420 : i32 to index
    %422 = memref.load %arg1[%421] : memref<128xi32, #tpu.memory_space<smem>>
    %423 = arith.index_cast %422 : i32 to index
    %c0_221 = arith.constant 0 : index
    %424 = vector.load %arg2[%423, %c0_221] : memref<56x512xf32, #tpu.memory_space<vmem>>, vector<1x512xf32>
    %c31 = arith.constant 31 : index
    %c0_222 = arith.constant 0 : index
    %425 = vector.load %arg8[%c31, %c0_222] : memref<64x512xf32, #tpu.memory_space<vmem>>, vector<1x512xf32>
    tpu.vector_store %arg8[%c31, %c0_222], %424 {strides = array<i32>} : memref<64x512xf32, #tpu.memory_space<vmem>>, vector<1x512xf32>,
    %c4_i32_223 = arith.constant 4 : i32
    %426 = arith.addi %401, %c4_i32_223 : i32
    %427 = arith.index_cast %426 : i32 to index
    %428 = memref.load %arg1[%427] : memref<128xi32, #tpu.memory_space<smem>>
    %429 = arith.index_cast %428 : i32 to index
    %c0_224 = arith.constant 0 : index
    %430 = vector.load %arg2[%429, %c0_224] : memref<56x512xf32, #tpu.memory_space<vmem>>, vector<1x512xf32>
    %c39 = arith.constant 39 : index
    %c0_225 = arith.constant 0 : index
    %431 = vector.load %arg8[%c39, %c0_225] : memref<64x512xf32, #tpu.memory_space<vmem>>, vector<1x512xf32>
    tpu.vector_store %arg8[%c39, %c0_225], %430 {strides = array<i32>} : memref<64x512xf32, #tpu.memory_space<vmem>>, vector<1x512xf32>,
    %c5_i32_226 = arith.constant 5 : i32
    %432 = arith.addi %401, %c5_i32_226 : i32
    %433 = arith.index_cast %432 : i32 to index
    %434 = memref.load %arg1[%433] : memref<128xi32, #tpu.memory_space<smem>>
    %435 = arith.index_cast %434 : i32 to index
    %c0_227 = arith.constant 0 : index
    %436 = vector.load %arg2[%435, %c0_227] : memref<56x512xf32, #tpu.memory_space<vmem>>, vector<1x512xf32>
    %c47 = arith.constant 47 : index
    %c0_228 = arith.constant 0 : index
    %437 = vector.load %arg8[%c47, %c0_228] : memref<64x512xf32, #tpu.memory_space<vmem>>, vector<1x512xf32>
    tpu.vector_store %arg8[%c47, %c0_228], %436 {strides = array<i32>} : memref<64x512xf32, #tpu.memory_space<vmem>>, vector<1x512xf32>,
    %c6_i32_229 = arith.constant 6 : i32
    %438 = arith.addi %401, %c6_i32_229 : i32
    %439 = arith.index_cast %438 : i32 to index
    %440 = memref.load %arg1[%439] : memref<128xi32, #tpu.memory_space<smem>>
    %441 = arith.index_cast %440 : i32 to index
    %c0_230 = arith.constant 0 : index
    %442 = vector.load %arg2[%441, %c0_230] : memref<56x512xf32, #tpu.memory_space<vmem>>, vector<1x512xf32>
    %c55 = arith.constant 55 : index
    %c0_231 = arith.constant 0 : index
    %443 = vector.load %arg8[%c55, %c0_231] : memref<64x512xf32, #tpu.memory_space<vmem>>, vector<1x512xf32>
    tpu.vector_store %arg8[%c55, %c0_231], %442 {strides = array<i32>} : memref<64x512xf32, #tpu.memory_space<vmem>>, vector<1x512xf32>,
    %c7_i32_232 = arith.constant 7 : i32
    %444 = arith.addi %401, %c7_i32_232 : i32
    %445 = arith.index_cast %444 : i32 to index
    %446 = memref.load %arg1[%445] : memref<128xi32, #tpu.memory_space<smem>>
    %447 = arith.index_cast %446 : i32 to index
    %c0_233 = arith.constant 0 : index
    %448 = vector.load %arg2[%447, %c0_233] : memref<56x512xf32, #tpu.memory_space<vmem>>, vector<1x512xf32>
    %c63 = arith.constant 63 : index
    %c0_234 = arith.constant 0 : index
    %449 = vector.load %arg8[%c63, %c0_234] : memref<64x512xf32, #tpu.memory_space<vmem>>, vector<1x512xf32>
    tpu.vector_store %arg8[%c63, %c0_234], %448 {strides = array<i32>} : memref<64x512xf32, #tpu.memory_space<vmem>>, vector<1x512xf32>,
    %c8_i32_235 = arith.constant 8 : i32
    %450 = arith.addi %401, %c8_i32_235 : i32
    %c1_i32_236 = arith.constant 1 : i32
    %451 = arith.subi %450, %c1_i32_236 : i32
    %452 = arith.index_cast %451 : i32 to index
    %453 = memref.load %arg1[%452] : memref<128xi32, #tpu.memory_space<smem>>
    %454 = arith.index_cast %453 : i32 to index
    %c0_237 = arith.constant 0 : index
    %455 = vector.load %arg3[%454, %c0_237] : memref<56x512xf32, #tpu.memory_space<vmem>>, vector<1x512xf32>
    %c7_238 = arith.constant 7 : index
    %c0_239 = arith.constant 0 : index
    %456 = vector.load %arg9[%c7_238, %c0_239] : memref<8x512xf32, #tpu.memory_space<vmem>>, vector<1x512xf32>
    tpu.vector_store %arg9[%c7_238, %c0_239], %455 {strides = array<i32>} : memref<8x512xf32, #tpu.memory_space<vmem>>, vector<1x512xf32>,
    %cst = arith.constant 0.000000e+00 : f32
    %457 = vector.broadcast %cst : f32 to vector<8x128xf32>
    %c0_240 = arith.constant 0 : index
    %c0_241 = arith.constant 0 : index
    %458 = vector.load %arg9[%c0_240, %c0_241] : memref<8x512xf32, #tpu.memory_space<vmem>>, vector<8x512xf32>
    %459 = vector.extract_strided_slice %458 {offsets = [0, 0], sizes = [8, 128], strides = [1, 1]} : vector<8x512xf32> to vector<8x128xf32>
    %cst_242 = arith.constant 5.000000e-01 : f32
    %460 = vector.broadcast %cst_242 : f32 to vector<8x128xf32>
    %461 = arith.mulf %460, %459 : vector<8x128xf32>
    %462 = math.tanh %461 : vector<8x128xf32>
    %cst_243 = arith.constant 5.000000e-01 : f32
    %463 = vector.broadcast %cst_243 : f32 to vector<8x128xf32>
    %464 = arith.mulf %463, %462 : vector<8x128xf32>
    %cst_244 = arith.constant 5.000000e-01 : f32
    %465 = vector.broadcast %cst_244 : f32 to vector<8x128xf32>
    %466 = arith.addf %464, %465 : vector<8x128xf32>
    %467 = vector.extract_strided_slice %458 {offsets = [0, 128], sizes = [8, 128], strides = [1, 1]} : vector<8x512xf32> to vector<8x128xf32>
    %cst_245 = arith.constant 5.000000e-01 : f32
    %468 = vector.broadcast %cst_245 : f32 to vector<8x128xf32>
    %469 = arith.mulf %468, %467 : vector<8x128xf32>
    %470 = math.tanh %469 : vector<8x128xf32>
    %cst_246 = arith.constant 5.000000e-01 : f32
    %471 = vector.broadcast %cst_246 : f32 to vector<8x128xf32>
    %472 = arith.mulf %471, %470 : vector<8x128xf32>
    %cst_247 = arith.constant 5.000000e-01 : f32
    %473 = vector.broadcast %cst_247 : f32 to vector<8x128xf32>
    %474 = arith.addf %472, %473 : vector<8x128xf32>
    %475 = vector.extract_strided_slice %458 {offsets = [0, 256], sizes = [8, 128], strides = [1, 1]} : vector<8x512xf32> to vector<8x128xf32>
    %476 = math.tanh %475 : vector<8x128xf32>
    %477 = vector.extract_strided_slice %458 {offsets = [0, 384], sizes = [8, 128], strides = [1, 1]} : vector<8x512xf32> to vector<8x128xf32>
    %cst_248 = arith.constant 5.000000e-01 : f32
    %478 = vector.broadcast %cst_248 : f32 to vector<8x128xf32>
    %479 = arith.mulf %478, %477 : vector<8x128xf32>
    %480 = math.tanh %479 : vector<8x128xf32>
    %cst_249 = arith.constant 5.000000e-01 : f32
    %481 = vector.broadcast %cst_249 : f32 to vector<8x128xf32>
    %482 = arith.mulf %481, %480 : vector<8x128xf32>
    %cst_250 = arith.constant 5.000000e-01 : f32
    %483 = vector.broadcast %cst_250 : f32 to vector<8x128xf32>
    %484 = arith.addf %482, %483 : vector<8x128xf32>
    %485 = arith.mulf %474, %457 : vector<8x128xf32>
    %486 = arith.mulf %466, %476 : vector<8x128xf32>
    %487 = arith.addf %485, %486 : vector<8x128xf32>
    %488 = math.tanh %487 : vector<8x128xf32>
    %489 = arith.mulf %484, %488 : vector<8x128xf32>
    %c0_251 = arith.constant 0 : index
    %c0_252 = arith.constant 0 : index
    %490 = vector.load %arg4[%c0_251, %c0_252] : memref<128x512xbf16, #tpu.memory_space<vmem>>, vector<128x512xbf16>
    %c0_253 = arith.constant 0 : index
    %c0_254 = arith.constant 0 : index
    %491 = vector.load %arg8[%c0_253, %c0_254] : memref<64x512xf32, #tpu.memory_space<vmem>>, vector<8x512xf32>
    %492 = vector.extract_strided_slice %491 {offsets = [0, 0], sizes = [8, 128], strides = [1, 1]} : vector<8x512xf32> to vector<8x128xf32>
    %cst_255 = arith.constant 5.000000e-01 : f32
    %493 = vector.broadcast %cst_255 : f32 to vector<8x128xf32>
    %494 = arith.mulf %493, %492 : vector<8x128xf32>
    %495 = math.tanh %494 : vector<8x128xf32>
    %cst_256 = arith.constant 5.000000e-01 : f32
    %496 = vector.broadcast %cst_256 : f32 to vector<8x128xf32>
    %497 = arith.mulf %496, %495 : vector<8x128xf32>
    %cst_257 = arith.constant 5.000000e-01 : f32
    %498 = vector.broadcast %cst_257 : f32 to vector<8x128xf32>
    %499 = arith.addf %497, %498 : vector<8x128xf32>
    %500 = vector.extract_strided_slice %491 {offsets = [0, 128], sizes = [8, 128], strides = [1, 1]} : vector<8x512xf32> to vector<8x128xf32>
    %cst_258 = arith.constant 5.000000e-01 : f32
    %501 = vector.broadcast %cst_258 : f32 to vector<8x128xf32>
    %502 = arith.mulf %501, %500 : vector<8x128xf32>
    %503 = math.tanh %502 : vector<8x128xf32>
    %cst_259 = arith.constant 5.000000e-01 : f32
    %504 = vector.broadcast %cst_259 : f32 to vector<8x128xf32>
    %505 = arith.mulf %504, %503 : vector<8x128xf32>
    %cst_260 = arith.constant 5.000000e-01 : f32
    %506 = vector.broadcast %cst_260 : f32 to vector<8x128xf32>
    %507 = arith.addf %505, %506 : vector<8x128xf32>
    %508 = vector.extract_strided_slice %491 {offsets = [0, 256], sizes = [8, 128], strides = [1, 1]} : vector<8x512xf32> to vector<8x128xf32>
    %509 = math.tanh %508 : vector<8x128xf32>
    %510 = vector.extract_strided_slice %491 {offsets = [0, 384], sizes = [8, 128], strides = [1, 1]} : vector<8x512xf32> to vector<8x128xf32>
    %cst_261 = arith.constant 5.000000e-01 : f32
    %511 = vector.broadcast %cst_261 : f32 to vector<8x128xf32>
    %512 = arith.mulf %511, %510 : vector<8x128xf32>
    %513 = math.tanh %512 : vector<8x128xf32>
    %cst_262 = arith.constant 5.000000e-01 : f32
    %514 = vector.broadcast %cst_262 : f32 to vector<8x128xf32>
    %515 = arith.mulf %514, %513 : vector<8x128xf32>
    %cst_263 = arith.constant 5.000000e-01 : f32
    %516 = vector.broadcast %cst_263 : f32 to vector<8x128xf32>
    %517 = arith.addf %515, %516 : vector<8x128xf32>
    %518 = arith.mulf %507, %457 : vector<8x128xf32>
    %519 = arith.mulf %499, %509 : vector<8x128xf32>
    %520 = arith.addf %518, %519 : vector<8x128xf32>
    %521 = math.tanh %520 : vector<8x128xf32>
    %522 = arith.mulf %517, %521 : vector<8x128xf32>
    %c8_264 = arith.constant 8 : index
    %c0_265 = arith.constant 0 : index
    %523 = vector.load %arg8[%c8_264, %c0_265] : memref<64x512xf32, #tpu.memory_space<vmem>>, vector<8x512xf32>
    %524 = arith.truncf %522 : vector<8x128xf32> to vector<8x128xbf16>
    %cst_266 = arith.constant dense<0.000000e+00> : vector<8x512xf32>
    %525 = tpu.matmul %524, %490, %cst_266 {dimension_numbers = #tpu.dot_dimension_numbers<[1], [0], [0], [1], [0, 0, 1, 1], [], []>} : vector<8x128xbf16>, vector<128x512xbf16>, vector<8x512xf32> -> vector<8x512xf32>
    %526 = arith.addf %523, %525 : vector<8x512xf32>
    %527 = vector.extract_strided_slice %526 {offsets = [0, 0], sizes = [8, 128], strides = [1, 1]} : vector<8x512xf32> to vector<8x128xf32>
    %cst_267 = arith.constant 5.000000e-01 : f32
    %528 = vector.broadcast %cst_267 : f32 to vector<8x128xf32>
    %529 = arith.mulf %528, %527 : vector<8x128xf32>
    %530 = math.tanh %529 : vector<8x128xf32>
    %cst_268 = arith.constant 5.000000e-01 : f32
    %531 = vector.broadcast %cst_268 : f32 to vector<8x128xf32>
    %532 = arith.mulf %531, %530 : vector<8x128xf32>
    %cst_269 = arith.constant 5.000000e-01 : f32
    %533 = vector.broadcast %cst_269 : f32 to vector<8x128xf32>
    %534 = arith.addf %532, %533 : vector<8x128xf32>
    %535 = vector.extract_strided_slice %526 {offsets = [0, 128], sizes = [8, 128], strides = [1, 1]} : vector<8x512xf32> to vector<8x128xf32>
    %cst_270 = arith.constant 5.000000e-01 : f32
    %536 = vector.broadcast %cst_270 : f32 to vector<8x128xf32>
    %537 = arith.mulf %536, %535 : vector<8x128xf32>
    %538 = math.tanh %537 : vector<8x128xf32>
    %cst_271 = arith.constant 5.000000e-01 : f32
    %539 = vector.broadcast %cst_271 : f32 to vector<8x128xf32>
    %540 = arith.mulf %539, %538 : vector<8x128xf32>
    %cst_272 = arith.constant 5.000000e-01 : f32
    %541 = vector.broadcast %cst_272 : f32 to vector<8x128xf32>
    %542 = arith.addf %540, %541 : vector<8x128xf32>
    %543 = vector.extract_strided_slice %526 {offsets = [0, 256], sizes = [8, 128], strides = [1, 1]} : vector<8x512xf32> to vector<8x128xf32>
    %544 = math.tanh %543 : vector<8x128xf32>
    %545 = vector.extract_strided_slice %526 {offsets = [0, 384], sizes = [8, 128], strides = [1, 1]} : vector<8x512xf32> to vector<8x128xf32>
    %cst_273 = arith.constant 5.000000e-01 : f32
    %546 = vector.broadcast %cst_273 : f32 to vector<8x128xf32>
    %547 = arith.mulf %546, %545 : vector<8x128xf32>
    %548 = math.tanh %547 : vector<8x128xf32>
    %cst_274 = arith.constant 5.000000e-01 : f32
    %549 = vector.broadcast %cst_274 : f32 to vector<8x128xf32>
    %550 = arith.mulf %549, %548 : vector<8x128xf32>
    %cst_275 = arith.constant 5.000000e-01 : f32
    %551 = vector.broadcast %cst_275 : f32 to vector<8x128xf32>
    %552 = arith.addf %550, %551 : vector<8x128xf32>
    %553 = arith.mulf %542, %520 : vector<8x128xf32>
    %554 = arith.mulf %534, %544 : vector<8x128xf32>
    %555 = arith.addf %553, %554 : vector<8x128xf32>
    %556 = math.tanh %555 : vector<8x128xf32>
    %557 = arith.mulf %552, %556 : vector<8x128xf32>
    %c16_276 = arith.constant 16 : index
    %c0_277 = arith.constant 0 : index
    %558 = vector.load %arg8[%c16_276, %c0_277] : memref<64x512xf32, #tpu.memory_space<vmem>>, vector<8x512xf32>
    %559 = arith.truncf %557 : vector<8x128xf32> to vector<8x128xbf16>
    %cst_278 = arith.constant dense<0.000000e+00> : vector<8x512xf32>
    %560 = tpu.matmul %559, %490, %cst_278 {dimension_numbers = #tpu.dot_dimension_numbers<[1], [0], [0], [1], [0, 0, 1, 1], [], []>} : vector<8x128xbf16>, vector<128x512xbf16>, vector<8x512xf32> -> vector<8x512xf32>
    %561 = arith.addf %558, %560 : vector<8x512xf32>
    %562 = vector.extract_strided_slice %561 {offsets = [0, 0], sizes = [8, 128], strides = [1, 1]} : vector<8x512xf32> to vector<8x128xf32>
    %cst_279 = arith.constant 5.000000e-01 : f32
    %563 = vector.broadcast %cst_279 : f32 to vector<8x128xf32>
    %564 = arith.mulf %563, %562 : vector<8x128xf32>
    %565 = math.tanh %564 : vector<8x128xf32>
    %cst_280 = arith.constant 5.000000e-01 : f32
    %566 = vector.broadcast %cst_280 : f32 to vector<8x128xf32>
    %567 = arith.mulf %566, %565 : vector<8x128xf32>
    %cst_281 = arith.constant 5.000000e-01 : f32
    %568 = vector.broadcast %cst_281 : f32 to vector<8x128xf32>
    %569 = arith.addf %567, %568 : vector<8x128xf32>
    %570 = vector.extract_strided_slice %561 {offsets = [0, 128], sizes = [8, 128], strides = [1, 1]} : vector<8x512xf32> to vector<8x128xf32>
    %cst_282 = arith.constant 5.000000e-01 : f32
    %571 = vector.broadcast %cst_282 : f32 to vector<8x128xf32>
    %572 = arith.mulf %571, %570 : vector<8x128xf32>
    %573 = math.tanh %572 : vector<8x128xf32>
    %cst_283 = arith.constant 5.000000e-01 : f32
    %574 = vector.broadcast %cst_283 : f32 to vector<8x128xf32>
    %575 = arith.mulf %574, %573 : vector<8x128xf32>
    %cst_284 = arith.constant 5.000000e-01 : f32
    %576 = vector.broadcast %cst_284 : f32 to vector<8x128xf32>
    %577 = arith.addf %575, %576 : vector<8x128xf32>
    %578 = vector.extract_strided_slice %561 {offsets = [0, 256], sizes = [8, 128], strides = [1, 1]} : vector<8x512xf32> to vector<8x128xf32>
    %579 = math.tanh %578 : vector<8x128xf32>
    %580 = vector.extract_strided_slice %561 {offsets = [0, 384], sizes = [8, 128], strides = [1, 1]} : vector<8x512xf32> to vector<8x128xf32>
    %cst_285 = arith.constant 5.000000e-01 : f32
    %581 = vector.broadcast %cst_285 : f32 to vector<8x128xf32>
    %582 = arith.mulf %581, %580 : vector<8x128xf32>
    %583 = math.tanh %582 : vector<8x128xf32>
    %cst_286 = arith.constant 5.000000e-01 : f32
    %584 = vector.broadcast %cst_286 : f32 to vector<8x128xf32>
    %585 = arith.mulf %584, %583 : vector<8x128xf32>
    %cst_287 = arith.constant 5.000000e-01 : f32
    %586 = vector.broadcast %cst_287 : f32 to vector<8x128xf32>
    %587 = arith.addf %585, %586 : vector<8x128xf32>
    %588 = arith.mulf %577, %555 : vector<8x128xf32>
    %589 = arith.mulf %569, %579 : vector<8x128xf32>
    %590 = arith.addf %588, %589 : vector<8x128xf32>
    %591 = math.tanh %590 : vector<8x128xf32>
    %592 = arith.mulf %587, %591 : vector<8x128xf32>
    %c24_288 = arith.constant 24 : index
    %c0_289 = arith.constant 0 : index
    %593 = vector.load %arg8[%c24_288, %c0_289] : memref<64x512xf32, #tpu.memory_space<vmem>>, vector<8x512xf32>
    %594 = arith.truncf %592 : vector<8x128xf32> to vector<8x128xbf16>
    %cst_290 = arith.constant dense<0.000000e+00> : vector<8x512xf32>
    %595 = tpu.matmul %594, %490, %cst_290 {dimension_numbers = #tpu.dot_dimension_numbers<[1], [0], [0], [1], [0, 0, 1, 1], [], []>} : vector<8x128xbf16>, vector<128x512xbf16>, vector<8x512xf32> -> vector<8x512xf32>
    %596 = arith.addf %593, %595 : vector<8x512xf32>
    %597 = vector.extract_strided_slice %596 {offsets = [0, 0], sizes = [8, 128], strides = [1, 1]} : vector<8x512xf32> to vector<8x128xf32>
    %cst_291 = arith.constant 5.000000e-01 : f32
    %598 = vector.broadcast %cst_291 : f32 to vector<8x128xf32>
    %599 = arith.mulf %598, %597 : vector<8x128xf32>
    %600 = math.tanh %599 : vector<8x128xf32>
    %cst_292 = arith.constant 5.000000e-01 : f32
    %601 = vector.broadcast %cst_292 : f32 to vector<8x128xf32>
    %602 = arith.mulf %601, %600 : vector<8x128xf32>
    %cst_293 = arith.constant 5.000000e-01 : f32
    %603 = vector.broadcast %cst_293 : f32 to vector<8x128xf32>
    %604 = arith.addf %602, %603 : vector<8x128xf32>
    %605 = vector.extract_strided_slice %596 {offsets = [0, 128], sizes = [8, 128], strides = [1, 1]} : vector<8x512xf32> to vector<8x128xf32>
    %cst_294 = arith.constant 5.000000e-01 : f32
    %606 = vector.broadcast %cst_294 : f32 to vector<8x128xf32>
    %607 = arith.mulf %606, %605 : vector<8x128xf32>
    %608 = math.tanh %607 : vector<8x128xf32>
    %cst_295 = arith.constant 5.000000e-01 : f32
    %609 = vector.broadcast %cst_295 : f32 to vector<8x128xf32>
    %610 = arith.mulf %609, %608 : vector<8x128xf32>
    %cst_296 = arith.constant 5.000000e-01 : f32
    %611 = vector.broadcast %cst_296 : f32 to vector<8x128xf32>
    %612 = arith.addf %610, %611 : vector<8x128xf32>
    %613 = vector.extract_strided_slice %596 {offsets = [0, 256], sizes = [8, 128], strides = [1, 1]} : vector<8x512xf32> to vector<8x128xf32>
    %614 = math.tanh %613 : vector<8x128xf32>
    %615 = vector.extract_strided_slice %596 {offsets = [0, 384], sizes = [8, 128], strides = [1, 1]} : vector<8x512xf32> to vector<8x128xf32>
    %cst_297 = arith.constant 5.000000e-01 : f32
    %616 = vector.broadcast %cst_297 : f32 to vector<8x128xf32>
    %617 = arith.mulf %616, %615 : vector<8x128xf32>
    %618 = math.tanh %617 : vector<8x128xf32>
    %cst_298 = arith.constant 5.000000e-01 : f32
    %619 = vector.broadcast %cst_298 : f32 to vector<8x128xf32>
    %620 = arith.mulf %619, %618 : vector<8x128xf32>
    %cst_299 = arith.constant 5.000000e-01 : f32
    %621 = vector.broadcast %cst_299 : f32 to vector<8x128xf32>
    %622 = arith.addf %620, %621 : vector<8x128xf32>
    %623 = arith.mulf %612, %590 : vector<8x128xf32>
    %624 = arith.mulf %604, %614 : vector<8x128xf32>
    %625 = arith.addf %623, %624 : vector<8x128xf32>
    %626 = math.tanh %625 : vector<8x128xf32>
    %627 = arith.mulf %622, %626 : vector<8x128xf32>
    %c32_300 = arith.constant 32 : index
    %c0_301 = arith.constant 0 : index
    %628 = vector.load %arg8[%c32_300, %c0_301] : memref<64x512xf32, #tpu.memory_space<vmem>>, vector<8x512xf32>
    %629 = arith.truncf %627 : vector<8x128xf32> to vector<8x128xbf16>
    %cst_302 = arith.constant dense<0.000000e+00> : vector<8x512xf32>
    %630 = tpu.matmul %629, %490, %cst_302 {dimension_numbers = #tpu.dot_dimension_numbers<[1], [0], [0], [1], [0, 0, 1, 1], [], []>} : vector<8x128xbf16>, vector<128x512xbf16>, vector<8x512xf32> -> vector<8x512xf32>
    %631 = arith.addf %628, %630 : vector<8x512xf32>
    %632 = vector.extract_strided_slice %631 {offsets = [0, 0], sizes = [8, 128], strides = [1, 1]} : vector<8x512xf32> to vector<8x128xf32>
    %cst_303 = arith.constant 5.000000e-01 : f32
    %633 = vector.broadcast %cst_303 : f32 to vector<8x128xf32>
    %634 = arith.mulf %633, %632 : vector<8x128xf32>
    %635 = math.tanh %634 : vector<8x128xf32>
    %cst_304 = arith.constant 5.000000e-01 : f32
    %636 = vector.broadcast %cst_304 : f32 to vector<8x128xf32>
    %637 = arith.mulf %636, %635 : vector<8x128xf32>
    %cst_305 = arith.constant 5.000000e-01 : f32
    %638 = vector.broadcast %cst_305 : f32 to vector<8x128xf32>
    %639 = arith.addf %637, %638 : vector<8x128xf32>
    %640 = vector.extract_strided_slice %631 {offsets = [0, 128], sizes = [8, 128], strides = [1, 1]} : vector<8x512xf32> to vector<8x128xf32>
    %cst_306 = arith.constant 5.000000e-01 : f32
    %641 = vector.broadcast %cst_306 : f32 to vector<8x128xf32>
    %642 = arith.mulf %641, %640 : vector<8x128xf32>
    %643 = math.tanh %642 : vector<8x128xf32>
    %cst_307 = arith.constant 5.000000e-01 : f32
    %644 = vector.broadcast %cst_307 : f32 to vector<8x128xf32>
    %645 = arith.mulf %644, %643 : vector<8x128xf32>
    %cst_308 = arith.constant 5.000000e-01 : f32
    %646 = vector.broadcast %cst_308 : f32 to vector<8x128xf32>
    %647 = arith.addf %645, %646 : vector<8x128xf32>
    %648 = vector.extract_strided_slice %631 {offsets = [0, 256], sizes = [8, 128], strides = [1, 1]} : vector<8x512xf32> to vector<8x128xf32>
    %649 = math.tanh %648 : vector<8x128xf32>
    %650 = vector.extract_strided_slice %631 {offsets = [0, 384], sizes = [8, 128], strides = [1, 1]} : vector<8x512xf32> to vector<8x128xf32>
    %cst_309 = arith.constant 5.000000e-01 : f32
    %651 = vector.broadcast %cst_309 : f32 to vector<8x128xf32>
    %652 = arith.mulf %651, %650 : vector<8x128xf32>
    %653 = math.tanh %652 : vector<8x128xf32>
    %cst_310 = arith.constant 5.000000e-01 : f32
    %654 = vector.broadcast %cst_310 : f32 to vector<8x128xf32>
    %655 = arith.mulf %654, %653 : vector<8x128xf32>
    %cst_311 = arith.constant 5.000000e-01 : f32
    %656 = vector.broadcast %cst_311 : f32 to vector<8x128xf32>
    %657 = arith.addf %655, %656 : vector<8x128xf32>
    %658 = arith.mulf %647, %625 : vector<8x128xf32>
    %659 = arith.mulf %639, %649 : vector<8x128xf32>
    %660 = arith.addf %658, %659 : vector<8x128xf32>
    %661 = math.tanh %660 : vector<8x128xf32>
    %662 = arith.mulf %657, %661 : vector<8x128xf32>
    %c40_312 = arith.constant 40 : index
    %c0_313 = arith.constant 0 : index
    %663 = vector.load %arg8[%c40_312, %c0_313] : memref<64x512xf32, #tpu.memory_space<vmem>>, vector<8x512xf32>
    %664 = arith.truncf %662 : vector<8x128xf32> to vector<8x128xbf16>
    %cst_314 = arith.constant dense<0.000000e+00> : vector<8x512xf32>
    %665 = tpu.matmul %664, %490, %cst_314 {dimension_numbers = #tpu.dot_dimension_numbers<[1], [0], [0], [1], [0, 0, 1, 1], [], []>} : vector<8x128xbf16>, vector<128x512xbf16>, vector<8x512xf32> -> vector<8x512xf32>
    %666 = arith.addf %663, %665 : vector<8x512xf32>
    %667 = vector.extract_strided_slice %666 {offsets = [0, 0], sizes = [8, 128], strides = [1, 1]} : vector<8x512xf32> to vector<8x128xf32>
    %cst_315 = arith.constant 5.000000e-01 : f32
    %668 = vector.broadcast %cst_315 : f32 to vector<8x128xf32>
    %669 = arith.mulf %668, %667 : vector<8x128xf32>
    %670 = math.tanh %669 : vector<8x128xf32>
    %cst_316 = arith.constant 5.000000e-01 : f32
    %671 = vector.broadcast %cst_316 : f32 to vector<8x128xf32>
    %672 = arith.mulf %671, %670 : vector<8x128xf32>
    %cst_317 = arith.constant 5.000000e-01 : f32
    %673 = vector.broadcast %cst_317 : f32 to vector<8x128xf32>
    %674 = arith.addf %672, %673 : vector<8x128xf32>
    %675 = vector.extract_strided_slice %666 {offsets = [0, 128], sizes = [8, 128], strides = [1, 1]} : vector<8x512xf32> to vector<8x128xf32>
    %cst_318 = arith.constant 5.000000e-01 : f32
    %676 = vector.broadcast %cst_318 : f32 to vector<8x128xf32>
    %677 = arith.mulf %676, %675 : vector<8x128xf32>
    %678 = math.tanh %677 : vector<8x128xf32>
    %cst_319 = arith.constant 5.000000e-01 : f32
    %679 = vector.broadcast %cst_319 : f32 to vector<8x128xf32>
    %680 = arith.mulf %679, %678 : vector<8x128xf32>
    %cst_320 = arith.constant 5.000000e-01 : f32
    %681 = vector.broadcast %cst_320 : f32 to vector<8x128xf32>
    %682 = arith.addf %680, %681 : vector<8x128xf32>
    %683 = vector.extract_strided_slice %666 {offsets = [0, 256], sizes = [8, 128], strides = [1, 1]} : vector<8x512xf32> to vector<8x128xf32>
    %684 = math.tanh %683 : vector<8x128xf32>
    %685 = vector.extract_strided_slice %666 {offsets = [0, 384], sizes = [8, 128], strides = [1, 1]} : vector<8x512xf32> to vector<8x128xf32>
    %cst_321 = arith.constant 5.000000e-01 : f32
    %686 = vector.broadcast %cst_321 : f32 to vector<8x128xf32>
    %687 = arith.mulf %686, %685 : vector<8x128xf32>
    %688 = math.tanh %687 : vector<8x128xf32>
    %cst_322 = arith.constant 5.000000e-01 : f32
    %689 = vector.broadcast %cst_322 : f32 to vector<8x128xf32>
    %690 = arith.mulf %689, %688 : vector<8x128xf32>
    %cst_323 = arith.constant 5.000000e-01 : f32
    %691 = vector.broadcast %cst_323 : f32 to vector<8x128xf32>
    %692 = arith.addf %690, %691 : vector<8x128xf32>
    %693 = arith.mulf %682, %660 : vector<8x128xf32>
    %694 = arith.mulf %674, %684 : vector<8x128xf32>
    %695 = arith.addf %693, %694 : vector<8x128xf32>
    %696 = math.tanh %695 : vector<8x128xf32>
    %697 = arith.mulf %692, %696 : vector<8x128xf32>
    %c48_324 = arith.constant 48 : index
    %c0_325 = arith.constant 0 : index
    %698 = vector.load %arg8[%c48_324, %c0_325] : memref<64x512xf32, #tpu.memory_space<vmem>>, vector<8x512xf32>
    %699 = arith.truncf %697 : vector<8x128xf32> to vector<8x128xbf16>
    %cst_326 = arith.constant dense<0.000000e+00> : vector<8x512xf32>
    %700 = tpu.matmul %699, %490, %cst_326 {dimension_numbers = #tpu.dot_dimension_numbers<[1], [0], [0], [1], [0, 0, 1, 1], [], []>} : vector<8x128xbf16>, vector<128x512xbf16>, vector<8x512xf32> -> vector<8x512xf32>
    %701 = arith.addf %698, %700 : vector<8x512xf32>
    %702 = vector.extract_strided_slice %701 {offsets = [0, 0], sizes = [8, 128], strides = [1, 1]} : vector<8x512xf32> to vector<8x128xf32>
    %cst_327 = arith.constant 5.000000e-01 : f32
    %703 = vector.broadcast %cst_327 : f32 to vector<8x128xf32>
    %704 = arith.mulf %703, %702 : vector<8x128xf32>
    %705 = math.tanh %704 : vector<8x128xf32>
    %cst_328 = arith.constant 5.000000e-01 : f32
    %706 = vector.broadcast %cst_328 : f32 to vector<8x128xf32>
    %707 = arith.mulf %706, %705 : vector<8x128xf32>
    %cst_329 = arith.constant 5.000000e-01 : f32
    %708 = vector.broadcast %cst_329 : f32 to vector<8x128xf32>
    %709 = arith.addf %707, %708 : vector<8x128xf32>
    %710 = vector.extract_strided_slice %701 {offsets = [0, 128], sizes = [8, 128], strides = [1, 1]} : vector<8x512xf32> to vector<8x128xf32>
    %cst_330 = arith.constant 5.000000e-01 : f32
    %711 = vector.broadcast %cst_330 : f32 to vector<8x128xf32>
    %712 = arith.mulf %711, %710 : vector<8x128xf32>
    %713 = math.tanh %712 : vector<8x128xf32>
    %cst_331 = arith.constant 5.000000e-01 : f32
    %714 = vector.broadcast %cst_331 : f32 to vector<8x128xf32>
    %715 = arith.mulf %714, %713 : vector<8x128xf32>
    %cst_332 = arith.constant 5.000000e-01 : f32
    %716 = vector.broadcast %cst_332 : f32 to vector<8x128xf32>
    %717 = arith.addf %715, %716 : vector<8x128xf32>
    %718 = vector.extract_strided_slice %701 {offsets = [0, 256], sizes = [8, 128], strides = [1, 1]} : vector<8x512xf32> to vector<8x128xf32>
    %719 = math.tanh %718 : vector<8x128xf32>
    %720 = vector.extract_strided_slice %701 {offsets = [0, 384], sizes = [8, 128], strides = [1, 1]} : vector<8x512xf32> to vector<8x128xf32>
    %cst_333 = arith.constant 5.000000e-01 : f32
    %721 = vector.broadcast %cst_333 : f32 to vector<8x128xf32>
    %722 = arith.mulf %721, %720 : vector<8x128xf32>
    %723 = math.tanh %722 : vector<8x128xf32>
    %cst_334 = arith.constant 5.000000e-01 : f32
    %724 = vector.broadcast %cst_334 : f32 to vector<8x128xf32>
    %725 = arith.mulf %724, %723 : vector<8x128xf32>
    %cst_335 = arith.constant 5.000000e-01 : f32
    %726 = vector.broadcast %cst_335 : f32 to vector<8x128xf32>
    %727 = arith.addf %725, %726 : vector<8x128xf32>
    %728 = arith.mulf %717, %695 : vector<8x128xf32>
    %729 = arith.mulf %709, %719 : vector<8x128xf32>
    %730 = arith.addf %728, %729 : vector<8x128xf32>
    %731 = math.tanh %730 : vector<8x128xf32>
    %732 = arith.mulf %727, %731 : vector<8x128xf32>
    %c56_336 = arith.constant 56 : index
    %c0_337 = arith.constant 0 : index
    %733 = vector.load %arg8[%c56_336, %c0_337] : memref<64x512xf32, #tpu.memory_space<vmem>>, vector<8x512xf32>
    %734 = arith.truncf %732 : vector<8x128xf32> to vector<8x128xbf16>
    %cst_338 = arith.constant dense<0.000000e+00> : vector<8x512xf32>
    %735 = tpu.matmul %734, %490, %cst_338 {dimension_numbers = #tpu.dot_dimension_numbers<[1], [0], [0], [1], [0, 0, 1, 1], [], []>} : vector<8x128xbf16>, vector<128x512xbf16>, vector<8x512xf32> -> vector<8x512xf32>
    %736 = arith.addf %733, %735 : vector<8x512xf32>
    %737 = vector.extract_strided_slice %736 {offsets = [0, 0], sizes = [8, 128], strides = [1, 1]} : vector<8x512xf32> to vector<8x128xf32>
    %cst_339 = arith.constant 5.000000e-01 : f32
    %738 = vector.broadcast %cst_339 : f32 to vector<8x128xf32>
    %739 = arith.mulf %738, %737 : vector<8x128xf32>
    %740 = math.tanh %739 : vector<8x128xf32>
    %cst_340 = arith.constant 5.000000e-01 : f32
    %741 = vector.broadcast %cst_340 : f32 to vector<8x128xf32>
    %742 = arith.mulf %741, %740 : vector<8x128xf32>
    %cst_341 = arith.constant 5.000000e-01 : f32
    %743 = vector.broadcast %cst_341 : f32 to vector<8x128xf32>
    %744 = arith.addf %742, %743 : vector<8x128xf32>
    %745 = vector.extract_strided_slice %736 {offsets = [0, 128], sizes = [8, 128], strides = [1, 1]} : vector<8x512xf32> to vector<8x128xf32>
    %cst_342 = arith.constant 5.000000e-01 : f32
    %746 = vector.broadcast %cst_342 : f32 to vector<8x128xf32>
    %747 = arith.mulf %746, %745 : vector<8x128xf32>
    %748 = math.tanh %747 : vector<8x128xf32>
    %cst_343 = arith.constant 5.000000e-01 : f32
    %749 = vector.broadcast %cst_343 : f32 to vector<8x128xf32>
    %750 = arith.mulf %749, %748 : vector<8x128xf32>
    %cst_344 = arith.constant 5.000000e-01 : f32
    %751 = vector.broadcast %cst_344 : f32 to vector<8x128xf32>
    %752 = arith.addf %750, %751 : vector<8x128xf32>
    %753 = vector.extract_strided_slice %736 {offsets = [0, 256], sizes = [8, 128], strides = [1, 1]} : vector<8x512xf32> to vector<8x128xf32>
    %754 = math.tanh %753 : vector<8x128xf32>
    %755 = vector.extract_strided_slice %736 {offsets = [0, 384], sizes = [8, 128], strides = [1, 1]} : vector<8x512xf32> to vector<8x128xf32>
    %cst_345 = arith.constant 5.000000e-01 : f32
    %756 = vector.broadcast %cst_345 : f32 to vector<8x128xf32>
    %757 = arith.mulf %756, %755 : vector<8x128xf32>
    %758 = math.tanh %757 : vector<8x128xf32>
    %cst_346 = arith.constant 5.000000e-01 : f32
    %759 = vector.broadcast %cst_346 : f32 to vector<8x128xf32>
    %760 = arith.mulf %759, %758 : vector<8x128xf32>
    %cst_347 = arith.constant 5.000000e-01 : f32
    %761 = vector.broadcast %cst_347 : f32 to vector<8x128xf32>
    %762 = arith.addf %760, %761 : vector<8x128xf32>
    %763 = arith.mulf %752, %730 : vector<8x128xf32>
    %764 = arith.mulf %744, %754 : vector<8x128xf32>
    %765 = arith.addf %763, %764 : vector<8x128xf32>
    %766 = math.tanh %765 : vector<8x128xf32>
    %767 = arith.mulf %762, %766 : vector<8x128xf32>
    %768 = arith.truncf %767 : vector<8x128xf32> to vector<8x128xbf16>
    %769 = arith.truncf %489 : vector<8x128xf32> to vector<8x128xbf16>
    %770 = tpu.concatenate %768, %769 in 1 : vector<8x128xbf16>, vector<8x128xbf16> -> vector<8x256xbf16>
    %c0_348 = arith.constant 0 : index
    %c0_349 = arith.constant 0 : index
    %771 = vector.load %arg5[%c0_348, %c0_349] : memref<256x128xbf16, #tpu.memory_space<vmem>>, vector<256x128xbf16>
    %cst_350 = arith.constant dense<0.000000e+00> : vector<8x128xf32>
    %772 = tpu.matmul %770, %771, %cst_350 {dimension_numbers = #tpu.dot_dimension_numbers<[1], [0], [0], [1], [0, 0, 1, 1], [], []>} : vector<8x256xbf16>, vector<256x128xbf16>, vector<8x128xf32> -> vector<8x128xf32>
    %c0_351 = arith.constant 0 : index
    %c0_352 = arith.constant 0 : index
    %773 = vector.load %arg6[%c0_351, %c0_352] : memref<1x128xf32, #tpu.memory_space<vmem>>, vector<1x128xf32>
    %774 = vector.broadcast %773 : vector<1x128xf32> to vector<8x128xf32>
    %775 = arith.addf %772, %774 : vector<8x128xf32>
    %c0_353 = arith.constant 0 : index
    %c0_354 = arith.constant 0 : index
    %776 = vector.load %arg7[%c0_353, %c0_354] : memref<8x128xf32, #tpu.memory_space<vmem>>, vector<8x128xf32>
    tpu.vector_store %arg7[%c0_353, %c0_354], %775 {strides = array<i32>} : memref<8x128xf32, #tpu.memory_space<vmem>>, vector<8x128xf32>,
    return
  }
  func.func @transform_0(%arg0: i32, %arg1: memref<128xi32, #tpu.memory_space<smem>>) -> (i32, i32) {
    %c0_i32 = arith.constant 0 : i32
    %c0_i32_0 = arith.constant 0 : i32
    %c0_i32_1 = arith.constant 0 : i32
    return %c0_i32, %c0_i32_0 : i32, i32
  }
  func.func @transform_1(%arg0: i32, %arg1: memref<128xi32, #tpu.memory_space<smem>>) -> (i32, i32) {
    %c0_i32 = arith.constant 0 : i32
    %c0_i32_0 = arith.constant 0 : i32
    %c0_i32_1 = arith.constant 0 : i32
    return %c0_i32, %c0_i32_0 : i32, i32
  }
  func.func @transform_2(%arg0: i32, %arg1: memref<128xi32, #tpu.memory_space<smem>>) -> (i32, i32) {
    %c0_i32 = arith.constant 0 : i32
    %c0_i32_0 = arith.constant 0 : i32
    %c0_i32_1 = arith.constant 0 : i32
    return %c0_i32, %c0_i32_0 : i32, i32
  }
  func.func @transform_3(%arg0: i32, %arg1: memref<128xi32, #tpu.memory_space<smem>>) -> (i32, i32) {
    %c0_i32 = arith.constant 0 : i32
    %c0_i32_0 = arith.constant 0 : i32
    %c0_i32_1 = arith.constant 0 : i32
    return %c0_i32, %c0_i32_0 : i32, i32
  }
  func.func @transform_4(%arg0: i32, %arg1: memref<128xi32, #tpu.memory_space<smem>>) -> (i32, i32) {
    %c0_i32 = arith.constant 0 : i32
    %c0_i32_0 = arith.constant 0 : i32
    %c0_i32_1 = arith.constant 0 : i32
    return %c0_i32, %c0_i32_0 : i32, i32
  }
  func.func @transform_5(%arg0: i32, %arg1: memref<128xi32, #tpu.memory_space<smem>>) -> (i32, i32) {
    %c0_i32 = arith.constant 0 : i32
    %c0_i32_0 = arith.constant 0 : i32
    return %arg0, %c0_i32 : i32, i32
  }
}

</mosaic_0001>

<llo_original>
// kernel: tpu_custom_call.1
$region0: #{tpu_custom_call.1}
  #allocation0 [shape = 'u32[]', space=smem, size = 0x4, offset = 0x4, fixed_abs, tag = 'smem constant byte address 0x4 - core index']
  #allocation1 [shape = 'u32[144,128]{1,0:T(1,128)}', space=vmem, size = 0x12000, scoped, tag = 'internal scratch']
  #allocation2 [shape = 'f32[64,512]{1,0:T(8,128)}', space=vmem, size = 0x20000, scoped, tag = 'scratch operand']
  #allocation3 [shape = 'f32[8,512]{1,0:T(8,128)}', space=vmem, size = 0x4000, scoped, tag = 'scratch operand']
  #allocation4 [shape = 's32[1]{0}', space=sflag, size = 0x4, scoped, tag = 'scoped memory for tpu_custom_call.1']
  #allocation5 [shape = 'u8[512]{0}', space=smem, size = 0x200, scoped, tag = 'prefetched SMEM operand 0']
  %s0 = inlined_call_operand.hbm [shape: s32[128], index: 0, kind: input, shape index: {}]
  %s1 = inlined_call_operand.hbm [shape: f32[56,512], index: 1, kind: input, shape index: {}]
  %s2 = inlined_call_operand.hbm [shape: f32[56,512], index: 2, kind: input, shape index: {}]
  %s3 = inlined_call_operand.hbm [shape: bf16[128,512], index: 3, kind: input, shape index: {}]
  %s4 = inlined_call_operand.hbm [shape: bf16[256,128], index: 4, kind: input, shape index: {}]
  %s5 = inlined_call_operand.vmem [shape: f32[1,128], index: 5, kind: input, shape index: {}]
  %s6 = inlined_call_operand.hbm [shape: f32[16,128], index: 6, kind: output, shape index: {}]
  %s7 = sld [smem:[#allocation0]]
  $region69: #{tpu_custom_call.1} parent=0
    _
  %s9 = ssub.s32 1, %s7
  %s10 = scalar_select 0, %s9, %s7
  %12 = dma.hbm_to_smem %s0, 16, [#allocation5], [#allocation4]
  %13 = dma.done [#allocation4], 16
  %14 = sfence
  $region1: #{tpu_custom_call.1} parent=0
    #allocation6 [shape = 'u8[114688]{0}', space=vmem, size = 0x1c000, scoped, tag = 'input window, operand 1, single buffered']
    #allocation7 [shape = 's32[2]{0}', space=sflag, size = 0x8, scoped, tag = 'scoped memory for tpu_custom_call.1']
    #allocation8 [shape = 's32[2]{0}', space=sflag, size = 0x8, scoped, tag = 'scoped memory for tpu_custom_call.1']
    #allocation9 [shape = 'u8[114688]{0}', space=vmem, size = 0x1c000, scoped, tag = 'input window, operand 2, single buffered']
    #allocation10 [shape = 's32[1]{0}', space=sflag, size = 0x4, scoped, tag = 'scoped memory for tpu_custom_call.1']
    #allocation11 [shape = 'u8[131072]{0}', space=vmem, size = 0x20000, scoped, tag = 'input window, operand 3, single buffered']
    #allocation12 [shape = 'u8[65536]{0}', space=vmem, size = 0x10000, scoped, tag = 'input window, operand 4, single buffered']
    #allocation13 [shape = 's32[1]{0}', space=sflag, size = 0x4, scoped, tag = 'scoped memory for tpu_custom_call.1']
    #allocation14 [shape = 'u8[8192]{0}', space=vmem, size = 0x2000, scoped, tag = 'output window, operand 0']
    %15 = vsyncpa [#allocation7], 0
    %16 = vsyncpa [#allocation10], 0
    %17 = vsyncpa [#allocation13], 0
    %18 = vsyncpa [#allocation8], 0
    %s19 = scalar_lea.sflag [#allocation8], 1
    %20 = vsyncpa %s19, 0
    loop: start=0, step=1, limit=4
    $region2: #{tpu_custom_call.1} parent=1 // loop_pre_header
      _
    $region3: #{tpu_custom_call.1} parent=1 // loop_header
      %s22 = sphi 0, %s26
      %p23 = scmp.ge.s32.totalorder %s22, 4
      %s30 = sphi 0, %s30
      %s32 = sphi 0, %s30
      %s33 = sphi 0, %s32
      %s47 = sphi 0, %s33
      %s51 = sphi 0, %s51
      %s53 = sphi 0, %s51
      %s54 = sphi 0, %s53
      %s68 = sphi 0, %s54
      %s72 = sphi 0, %s72
      %s74 = sphi 0, %s72
      %s75 = sphi 0, %s74
      %s89 = sphi 0, %s75
      %s93 = sphi 0, %s93
      %s95 = sphi 0, %s93
      %s96 = sphi 0, %s95
      %s110 = sphi 0, %s96
      %s114 = sphi 0, %s114
      %s116 = sphi 0, %s114
      %s117 = sphi 0, %s116
      %s131 = sphi 0, %s117
      %s137 = sphi 0, %s139
      %s140 = sphi 0, %s137
      %s141 = sphi 0, %s140
      %s157 = sphi 0, %s141
    $region4: #{tpu_custom_call.1} parent=1 // loop_header_branch
      %25 = sbr.rel (%p23) target = $region8
    $region5: #{tpu_custom_call.1} parent=1 // loop_body
      %s27 = ssub.s32 %s22, 1
      %s28 = ssub.s32 %s22, 2
      %s29 = sadd.s32 %s22, 1
      %s31 = sadd.s32 %s30, 1
      %p34 = scmp.eq.s32.totalorder %s22, 1
      %p35 = scmp.ne.s32.totalorder %s30, %s32
      %p36 = scmp.eq.s32.totalorder %s22, 0
      %p37 = por %p35, %p36
      %p38 = scmp.ne.s32.totalorder %s30, %s32
      %p39 = scmp.eq.s32.totalorder %s27, 1
      %p40 = por %p38, %p39
      %p41 = scmp.ne.s32.totalorder %s32, %s33
      %p42 = scmp.eq.s32.totalorder %s27, 0
      %p43 = por %p41, %p42
      %p44 = scmp.ne.s32.totalorder %s32, %s33
      %p45 = scmp.eq.s32.totalorder %s28, 1
      %p46 = por %p44, %p45
      %p48 = scmp.ne.s32.totalorder %s33, %s47
      %p49 = scmp.eq.s32.totalorder %s28, 0
      %p50 = por %p48, %p49
      %s52 = sadd.s32 %s51, 1
      %p55 = scmp.eq.s32.totalorder %s22, 1
      %p56 = scmp.ne.s32.totalorder %s51, %s53
      %p57 = scmp.eq.s32.totalorder %s22, 0
      %p58 = por %p56, %p57
      %p59 = scmp.ne.s32.totalorder %s51, %s53
      %p60 = scmp.eq.s32.totalorder %s27, 1
      %p61 = por %p59, %p60
      %p62 = scmp.ne.s32.totalorder %s53, %s54
      %p63 = scmp.eq.s32.totalorder %s27, 0
      %p64 = por %p62, %p63
      %p65 = scmp.ne.s32.totalorder %s53, %s54
      %p66 = scmp.eq.s32.totalorder %s28, 1
      %p67 = por %p65, %p66
      %p69 = scmp.ne.s32.totalorder %s54, %s68
      %p70 = scmp.eq.s32.totalorder %s28, 0
      %p71 = por %p69, %p70
      %s73 = sadd.s32 %s72, 1
      %p76 = scmp.eq.s32.totalorder %s22, 1
      %p77 = scmp.ne.s32.totalorder %s72, %s74
      %p78 = scmp.eq.s32.totalorder %s22, 0
      %p79 = por %p77, %p78
      %p80 = scmp.ne.s32.totalorder %s72, %s74
      %p81 = scmp.eq.s32.totalorder %s27, 1
      %p82 = por %p80, %p81
      %p83 = scmp.ne.s32.totalorder %s74, %s75
      %p84 = scmp.eq.s32.totalorder %s27, 0
      %p85 = por %p83, %p84
      %p86 = scmp.ne.s32.totalorder %s74, %s75
      %p87 = scmp.eq.s32.totalorder %s28, 1
      %p88 = por %p86, %p87
      %p90 = scmp.ne.s32.totalorder %s75, %s89
      %p91 = scmp.eq.s32.totalorder %s28, 0
      %p92 = por %p90, %p91
      %s94 = sadd.s32 %s93, 1
      %p97 = scmp.eq.s32.totalorder %s22, 1
      %p98 = scmp.ne.s32.totalorder %s93, %s95
      %p99 = scmp.eq.s32.totalorder %s22, 0
      %p100 = por %p98, %p99
      %p101 = scmp.ne.s32.totalorder %s93, %s95
      %p102 = scmp.eq.s32.totalorder %s27, 1
      %p103 = por %p101, %p102
      %p104 = scmp.ne.s32.totalorder %s95, %s96
      %p105 = scmp.eq.s32.totalorder %s27, 0
      %p106 = por %p104, %p105
      %p107 = scmp.ne.s32.totalorder %s95, %s96
      %p108 = scmp.eq.s32.totalorder %s28, 1
      %p109 = por %p107, %p108
      %p111 = scmp.ne.s32.totalorder %s96, %s110
      %p112 = scmp.eq.s32.totalorder %s28, 0
      %p113 = por %p111, %p112
      %s115 = sadd.s32 %s114, 1
      %p118 = scmp.eq.s32.totalorder %s22, 1
      %p119 = scmp.ne.s32.totalorder %s114, %s116
      %p120 = scmp.eq.s32.totalorder %s22, 0
      %p121 = por %p119, %p120
      %p122 = scmp.ne.s32.totalorder %s114, %s116
      %p123 = scmp.eq.s32.totalorder %s27, 1
      %p124 = por %p122, %p123
      %p125 = scmp.ne.s32.totalorder %s116, %s117
      %p126 = scmp.eq.s32.totalorder %s27, 0
      %p127 = por %p125, %p126
      %p128 = scmp.ne.s32.totalorder %s116, %s117
      %p129 = scmp.eq.s32.totalorder %s28, 1
      %p130 = por %p128, %p129
      %p132 = scmp.ne.s32.totalorder %s117, %s131
      %p133 = scmp.eq.s32.totalorder %s28, 0
      %p134 = por %p132, %p133
      %s135 = ssub.s32 %s22, %s29
      %p136 = scmp.eq.s32.totalorder %s135, 0
      %s138 = sadd.s32 %s137, 1
      %s139 = scalar_select %p136, %s137, %s138
      %p142 = pneg %p136
      %p143 = scmp.eq.s32.totalorder %s22, 1
      %p144 = por %p142, %p143
      %p145 = scmp.ne.s32.totalorder %s137, %s140
      %p146 = scmp.eq.s32.totalorder %s22, 0
      %p147 = por %p145, %p146
      %p148 = scmp.ne.s32.totalorder %s137, %s140
      %p149 = scmp.eq.s32.totalorder %s27, 1
      %p150 = por %p148, %p149
      %p151 = scmp.ne.s32.totalorder %s140, %s141
      %p152 = scmp.eq.s32.totalorder %s27, 0
      %p153 = por %p151, %p152
      %p154 = scmp.ne.s32.totalorder %s140, %s141
      %p155 = scmp.eq.s32.totalorder %s28, 1
      %p156 = por %p154, %p155
      %p158 = scmp.ne.s32.totalorder %s141, %s157
      %p159 = scmp.eq.s32.totalorder %s28, 0
      %p160 = por %p158, %p159
      %p161 = scmp.le.s32.totalorder 1, %s22
      %p162 = scmp.lt.s32.totalorder %s22, 3
      %p163 = pnand %p161, %p162
      %p164 = pneg %p163
      // Predicated region
      $region9: #{tpu_custom_call.1} parent=5 // pred_check
        _
      $region10: #{tpu_custom_call.1} parent=5 // pred_check_branch
        %166 = sbr.rel (%p163) target = $region12
      $region11: #{tpu_custom_call.1} parent=5 // pred_region
        %s167 = ssub.s32 %s22, 1
        // Predicated region
        $region13: #{tpu_custom_call.1} parent=11 // pred_check
          %p168 = pneg %p43
        $region14: #{tpu_custom_call.1} parent=11 // pred_check_branch
          %170 = sbr.rel (%p168) target = $region16
        $region15: #{tpu_custom_call.1} parent=11 // pred_region
          %s172 = ssub.s32 3584, 3584
          %173 = vsyncadd [#allocation7], %s172
          %s174 = sshll.u32 [#allocation6], 4
          %s175 = int_to_ptr.vmem [resolvable:$true] %s174
          %180 = dma.hbm_to_vmem [thread:$0]  %s1, 3584, %s175, [#allocation7], 512, 512, 32
        $region16: #{tpu_custom_call.1} parent=11 // pred_fallthru
          _
        // Predicated region
        $region17: #{tpu_custom_call.1} parent=11 // pred_check
          %p181 = pneg %p64
        $region18: #{tpu_custom_call.1} parent=11 // pred_check_branch
          %183 = sbr.rel (%p181) target = $region20
        $region19: #{tpu_custom_call.1} parent=11 // pred_region
          %s185 = ssub.s32 3584, 3584
          %186 = vsyncadd [#allocation10], %s185
          %s187 = sshll.u32 [#allocation9], 4
          %s188 = int_to_ptr.vmem [resolvable:$true] %s187
          %193 = dma.hbm_to_vmem [thread:$0]  %s2, 3584, %s188, [#allocation10], 512, 512, 32
        $region20: #{tpu_custom_call.1} parent=11 // pred_fallthru
          _
        // Predicated region
        $region21: #{tpu_custom_call.1} parent=11 // pred_check
          %p194 = pneg %p85
        $region22: #{tpu_custom_call.1} parent=11 // pred_check_branch
          %196 = sbr.rel (%p194) target = $region24
        $region23: #{tpu_custom_call.1} parent=11 // pred_region
          %s198 = ssub.s32 4096, 4096
          %199 = vsyncadd [#allocation10], %s198
          %s200 = sshll.u32 [#allocation11], 4
          %s201 = int_to_ptr.vmem [resolvable:$true] %s200
          %206 = dma.hbm_to_vmem [thread:$0]  %s3, 4096, %s201, [#allocation10], 256, 256, 16
        $region24: #{tpu_custom_call.1} parent=11 // pred_fallthru
          _
        // Predicated region
        $region25: #{tpu_custom_call.1} parent=11 // pred_check
          %p207 = pneg %p106
        $region26: #{tpu_custom_call.1} parent=11 // pred_check_branch
          %209 = sbr.rel (%p207) target = $region28
        $region27: #{tpu_custom_call.1} parent=11 // pred_region
          %s211 = ssub.s32 2048, 2048
          %212 = vsyncadd [#allocation13], %s211
          %s213 = sshll.u32 [#allocation12], 4
          %s214 = int_to_ptr.vmem [resolvable:$true] %s213
          %219 = dma.hbm_to_vmem [thread:$0]  %s4, 2048, %s214, [#allocation13], 64, 64, 4
        $region28: #{tpu_custom_call.1} parent=11 // pred_fallthru
          _
        // Predicated region
        $region29: #{tpu_custom_call.1} parent=11 // pred_check
          %p220 = pneg %p127
        $region30: #{tpu_custom_call.1} parent=11 // pred_check_branch
          %222 = sbr.rel (%p220) target = $region32
        $region31: #{tpu_custom_call.1} parent=11 // pred_region
          _
        $region32: #{tpu_custom_call.1} parent=11 // pred_fallthru
          _
      $region12: #{tpu_custom_call.1} parent=5 // pred_fallthru
        _
      %p223 = scmp.lt.s32.totalorder %s22, 2
      // Predicated region
      $region33: #{tpu_custom_call.1} parent=5 // pred_check
        %p224 = pneg %p223
      $region34: #{tpu_custom_call.1} parent=5 // pred_check_branch
        %226 = sbr.rel (%p224) target = $region36
      $region35: #{tpu_custom_call.1} parent=5 // pred_region
        _
      $region36: #{tpu_custom_call.1} parent=5 // pred_fallthru
        _
      %p227 = scmp.le.s32.totalorder 1, %s22
      %p228 = scmp.lt.s32.totalorder %s22, 3
      %p229 = pnand %p227, %p228
      %p230 = pneg %p229
      // Predicated region
      $region37: #{tpu_custom_call.1} parent=5 // pred_check
        _
      $region38: #{tpu_custom_call.1} parent=5 // pred_check_branch
        %232 = sbr.rel (%p229) target = $region40
      $region39: #{tpu_custom_call.1} parent=5 // pred_region
        %s233 = ssub.s32 %s22, 1
        // Predicated region
        $region41: #{tpu_custom_call.1} parent=39 // pred_check
          %p234 = pneg %p43
        $region42: #{tpu_custom_call.1} parent=39 // pred_check_branch
          %236 = sbr.rel (%p234) target = $region44
        $region43: #{tpu_custom_call.1} parent=39 // pred_region
          %237 = dma.done [#allocation7], 3584
        $region44: #{tpu_custom_call.1} parent=39 // pred_fallthru
          _
        // Predicated region
        $region45: #{tpu_custom_call.1} parent=39 // pred_check
          %p238 = pneg %p64
        $region46: #{tpu_custom_call.1} parent=39 // pred_check_branch
          %240 = sbr.rel (%p238) target = $region48
        $region47: #{tpu_custom_call.1} parent=39 // pred_region
          %241 = dma.done [#allocation10], 3584
        $region48: #{tpu_custom_call.1} parent=39 // pred_fallthru
          _
        // Predicated region
        $region49: #{tpu_custom_call.1} parent=39 // pred_check
          %p242 = pneg %p85
        $region50: #{tpu_custom_call.1} parent=39 // pred_check_branch
          %244 = sbr.rel (%p242) target = $region52
        $region51: #{tpu_custom_call.1} parent=39 // pred_region
          %245 = dma.done [#allocation10], 4096
        $region52: #{tpu_custom_call.1} parent=39 // pred_fallthru
          _
        // Predicated region
        $region53: #{tpu_custom_call.1} parent=39 // pred_check
          %p246 = pneg %p106
        $region54: #{tpu_custom_call.1} parent=39 // pred_check_branch
          %248 = sbr.rel (%p246) target = $region56
        $region55: #{tpu_custom_call.1} parent=39 // pred_region
          %249 = dma.done [#allocation13], 2048
        $region56: #{tpu_custom_call.1} parent=39 // pred_fallthru
          _
        %p250 = pneg %p43
        %p251 = pneg %p40
        %p252 = pneg %p64
        %p253 = pneg %p61
        %p254 = pneg %p85
        %p255 = pneg %p82
        %p256 = pneg %p106
        %p257 = pneg %p103
        %p258 = pneg %p127
        %p259 = pneg %p124
        %p260 = pneg %p153
        %p261 = pneg %p150
        %s262 = sand.u32 %s140, 1
        %s263 = scalar_lea.sflag [#allocation8], %s262
        %s264 = sand.u32 %s140, 1
        %s265 = smul.addr %s264, 8
        %s266 = scalar_lea.vmem [#allocation14], %s265
        %s268 = smul.u32 %s27, 8
        %s269 = smul.u32 %s27, 64
        %s270 = sld [smem:[#allocation5 + %s269]]
        %s271 = sshra.s32 %s270, 3
        %s272 = sand.u32 %s270, 7
        %s273 = sshra.s32 %s270, 3
        %s274 = sand.u32 %s270, 7
        %s275 = smul.u32 %s271, 4
        %s276 = smul.u32 %s275, 8
        %s277 = sadd.s32 %s276, %s274
        %s278 = scalar_lea.vmem [#allocation6], %s277
        %v279 = vld [vmem:[%s278] ss:$8 sm:$0xf]
        %v280 = vlaneseq
        %vm281 = vcmp.ge.s32.totalorder %v280, 0
        %vm282 = vcmp.lt.s32.totalorder %v280, 512
        %vm283 = vmand %vm281, %vm282
        %284 = vst.msk [vmem:[#allocation2] ss:$8 sm:$0xf] %vm283, %v279
        %285 = vst.msk [vmem:[#allocation2] ss:$8 sm:$0x0] %vm283, %v279
        %s286 = sadd.s32 %s269, 1
        %s287 = sld [smem:[#allocation5 + %s286]]
        %s288 = sshra.s32 %s287, 3
        %s289 = sand.u32 %s287, 7
        %s290 = sshra.s32 %s287, 3
        %s291 = sand.u32 %s287, 7
        %s292 = smul.u32 %s288, 4
        %s293 = smul.u32 %s292, 8
        %s294 = sadd.s32 %s293, %s291
        %s295 = scalar_lea.vmem [#allocation6], %s294
        %v296 = vld [vmem:[%s295] ss:$8 sm:$0xf]
        %s297 = scalar_lea.vmem [#allocation2], 32
        %298 = vst.msk [vmem:[%s297] ss:$8 sm:$0xf] %vm283, %v296
        %299 = vst.msk [vmem:[%s297] ss:$8 sm:$0x0] %vm283, %v296
        %s300 = sadd.s32 %s269, 2
        %s301 = sld [smem:[#allocation5 + %s300]]
        %s302 = sshra.s32 %s301, 3
        %s303 = sand.u32 %s301, 7
        %s304 = sshra.s32 %s301, 3
        %s305 = sand.u32 %s301, 7
        %s306 = smul.u32 %s302, 4
        %s307 = smul.u32 %s306, 8
        %s308 = sadd.s32 %s307, %s305
        %s309 = scalar_lea.vmem [#allocation6], %s308
        %v310 = vld [vmem:[%s309] ss:$8 sm:$0xf]
        %s311 = scalar_lea.vmem [#allocation2], 64
        %312 = vst.msk [vmem:[%s311] ss:$8 sm:$0xf] %vm283, %v310
        %313 = vst.msk [vmem:[%s311] ss:$8 sm:$0x0] %vm283, %v310
        %s314 = sadd.s32 %s269, 3
        %s315 = sld [smem:[#allocation5 + %s314]]
        %s316 = sshra.s32 %s315, 3
        %s317 = sand.u32 %s315, 7
        %s318 = sshra.s32 %s315, 3
        %s319 = sand.u32 %s315, 7
        %s320 = smul.u32 %s316, 4
        %s321 = smul.u32 %s320, 8
        %s322 = sadd.s32 %s321, %s319
        %s323 = scalar_lea.vmem [#allocation6], %s322
        %v324 = vld [vmem:[%s323] ss:$8 sm:$0xf]
        %s325 = scalar_lea.vmem [#allocation2], 96
        %326 = vst.msk [vmem:[%s325] ss:$8 sm:$0xf] %vm283, %v324
        %327 = vst.msk [vmem:[%s325] ss:$8 sm:$0x0] %vm283, %v324
        %s328 = sadd.s32 %s269, 4
        %s329 = sld [smem:[#allocation5 + %s328]]
        %s330 = sshra.s32 %s329, 3
        %s331 = sand.u32 %s329, 7
        %s332 = sshra.s32 %s329, 3
        %s333 = sand.u32 %s329, 7
        %s334 = smul.u32 %s330, 4
        %s335 = smul.u32 %s334, 8
        %s336 = sadd.s32 %s335, %s333
        %s337 = scalar_lea.vmem [#allocation6], %s336
        %v338 = vld [vmem:[%s337] ss:$8 sm:$0xf]
        %s339 = scalar_lea.vmem [#allocation2], 128
        %340 = vst.msk [vmem:[%s339] ss:$8 sm:$0xf] %vm283, %v338
        %341 = vst.msk [vmem:[%s339] ss:$8 sm:$0x0] %vm283, %v338
        %s342 = sadd.s32 %s269, 5
        %s343 = sld [smem:[#allocation5 + %s342]]
        %s344 = sshra.s32 %s343, 3
        %s345 = sand.u32 %s343, 7
        %s346 = sshra.s32 %s343, 3
        %s347 = sand.u32 %s343, 7
        %s348 = smul.u32 %s344, 4
        %s349 = smul.u32 %s348, 8
        %s350 = sadd.s32 %s349, %s347
        %s351 = scalar_lea.vmem [#allocation6], %s350
        %v352 = vld [vmem:[%s351] ss:$8 sm:$0xf]
        %s353 = scalar_lea.vmem [#allocation2], 160
        %354 = vst.msk [vmem:[%s353] ss:$8 sm:$0xf] %vm283, %v352
        %355 = vst.msk [vmem:[%s353] ss:$8 sm:$0x0] %vm283, %v352
        %s356 = sadd.s32 %s269, 6
        %s357 = sld [smem:[#allocation5 + %s356]]
        %s358 = sshra.s32 %s357, 3
        %s359 = sand.u32 %s357, 7
        %s360 = sshra.s32 %s357, 3
        %s361 = sand.u32 %s357, 7
        %s362 = smul.u32 %s358, 4
        %s363 = smul.u32 %s362, 8
        %s364 = sadd.s32 %s363, %s361
        %s365 = scalar_lea.vmem [#allocation6], %s364
        %v366 = vld [vmem:[%s365] ss:$8 sm:$0xf]
        %s367 = scalar_lea.vmem [#allocation2], 192
        %368 = vst.msk [vmem:[%s367] ss:$8 sm:$0xf] %vm283, %v366
        %369 = vst.msk [vmem:[%s367] ss:$8 sm:$0x0] %vm283, %v366
        %s370 = sadd.s32 %s269, 7
        %s371 = sld [smem:[#allocation5 + %s370]]
        %s372 = sshra.s32 %s371, 3
        %s373 = sand.u32 %s371, 7
        %s374 = sshra.s32 %s371, 3
        %s375 = sand.u32 %s371, 7
        %s376 = smul.u32 %s372, 4
        %s377 = smul.u32 %s376, 8
        %s378 = sadd.s32 %s377, %s375
        %s379 = scalar_lea.vmem [#allocation6], %s378
        %v380 = vld [vmem:[%s379] ss:$8 sm:$0xf]
        %s381 = scalar_lea.vmem [#allocation2], 224
        %382 = vst.msk [vmem:[%s381] ss:$8 sm:$0xf] %vm283, %v380
        %383 = vst.msk [vmem:[%s381] ss:$8 sm:$0x0] %vm283, %v380
        %s384 = sld [smem:[#allocation5 + %s370]]
        %s385 = sshra.s32 %s384, 3
        %s386 = sand.u32 %s384, 7
        %s387 = sshra.s32 %s384, 3
        %s388 = sand.u32 %s384, 7
        %s389 = smul.u32 %s385, 4
        %s390 = smul.u32 %s389, 8
        %s391 = sadd.s32 %s390, %s388
        %s392 = scalar_lea.vmem [#allocation9], %s391
        %v393 = vld [vmem:[%s392] ss:$8 sm:$0xf]
        %394 = vst.msk [vmem:[#allocation3] ss:$8 sm:$0xf] %vm283, %v393
        %395 = vst.msk [vmem:[#allocation3] ss:$8 sm:$0x0] %vm283, %v393
        %s396 = sadd.s32 %s268, 1
        %s397 = smul.u32 %s396, 8
        %s398 = sld [smem:[#allocation5 + %s397]]
        %s399 = sshra.s32 %s398, 3
        %s400 = sand.u32 %s398, 7
        %s401 = sshra.s32 %s398, 3
        %s402 = sand.u32 %s398, 7
        %s403 = smul.u32 %s399, 4
        %s404 = smul.u32 %s403, 8
        %s405 = sadd.s32 %s404, %s402
        %s406 = scalar_lea.vmem [#allocation6], %s405
        %v407 = vld [vmem:[%s406] ss:$8 sm:$0xf]
        %s408 = scalar_lea.vmem [#allocation2], 1
        %409 = vst.msk [vmem:[%s408] ss:$8 sm:$0xf] %vm283, %v407
        %410 = vst.msk [vmem:[%s408] ss:$8 sm:$0x0] %vm283, %v407
        %s411 = sadd.s32 %s397, 1
        %s412 = sld [smem:[#allocation5 + %s411]]
        %s413 = sshra.s32 %s412, 3
        %s414 = sand.u32 %s412, 7
        %s415 = sshra.s32 %s412, 3
        %s416 = sand.u32 %s412, 7
        %s417 = smul.u32 %s413, 4
        %s418 = smul.u32 %s417, 8
        %s419 = sadd.s32 %s418, %s416
        %s420 = scalar_lea.vmem [#allocation6], %s419
        %v421 = vld [vmem:[%s420] ss:$8 sm:$0xf]
        %s422 = scalar_lea.vmem [#allocation2], 33
        %423 = vst.msk [vmem:[%s422] ss:$8 sm:$0xf] %vm283, %v421
        %424 = vst.msk [vmem:[%s422] ss:$8 sm:$0x0] %vm283, %v421
        %s425 = sadd.s32 %s397, 2
        %s426 = sld [smem:[#allocation5 + %s425]]
        %s427 = sshra.s32 %s426, 3
        %s428 = sand.u32 %s426, 7
        %s429 = sshra.s32 %s426, 3
        %s430 = sand.u32 %s426, 7
        %s431 = smul.u32 %s427, 4
        %s432 = smul.u32 %s431, 8
        %s433 = sadd.s32 %s432, %s430
        %s434 = scalar_lea.vmem [#allocation6], %s433
        %v435 = vld [vmem:[%s434] ss:$8 sm:$0xf]
        %s436 = scalar_lea.vmem [#allocation2], 65
        %437 = vst.msk [vmem:[%s436] ss:$8 sm:$0xf] %vm283, %v435
        %438 = vst.msk [vmem:[%s436] ss:$8 sm:$0x0] %vm283, %v435
        %s439 = sadd.s32 %s397, 3
        %s440 = sld [smem:[#allocation5 + %s439]]
        %s441 = sshra.s32 %s440, 3
        %s442 = sand.u32 %s440, 7
        %s443 = sshra.s32 %s440, 3
        %s444 = sand.u32 %s440, 7
        %s445 = smul.u32 %s441, 4
        %s446 = smul.u32 %s445, 8
        %s447 = sadd.s32 %s446, %s444
        %s448 = scalar_lea.vmem [#allocation6], %s447
        %v449 = vld [vmem:[%s448] ss:$8 sm:$0xf]
        %s450 = scalar_lea.vmem [#allocation2], 97
        %451 = vst.msk [vmem:[%s450] ss:$8 sm:$0xf] %vm283, %v449
        %452 = vst.msk [vmem:[%s450] ss:$8 sm:$0x0] %vm283, %v449
        %s453 = sadd.s32 %s397, 4
        %s454 = sld [smem:[#allocation5 + %s453]]
        %s455 = sshra.s32 %s454, 3
        %s456 = sand.u32 %s454, 7
        %s457 = sshra.s32 %s454, 3
        %s458 = sand.u32 %s454, 7
        %s459 = smul.u32 %s455, 4
        %s460 = smul.u32 %s459, 8
        %s461 = sadd.s32 %s460, %s458
        %s462 = scalar_lea.vmem [#allocation6], %s461
        %v463 = vld [vmem:[%s462] ss:$8 sm:$0xf]
        %s464 = scalar_lea.vmem [#allocation2], 129
        %465 = vst.msk [vmem:[%s464] ss:$8 sm:$0xf] %vm283, %v463
        %466 = vst.msk [vmem:[%s464] ss:$8 sm:$0x0] %vm283, %v463
        %s467 = sadd.s32 %s397, 5
        %s468 = sld [smem:[#allocation5 + %s467]]
        %s469 = sshra.s32 %s468, 3
        %s470 = sand.u32 %s468, 7
        %s471 = sshra.s32 %s468, 3
        %s472 = sand.u32 %s468, 7
        %s473 = smul.u32 %s469, 4
        %s474 = smul.u32 %s473, 8
        %s475 = sadd.s32 %s474, %s472
        %s476 = scalar_lea.vmem [#allocation6], %s475
        %v477 = vld [vmem:[%s476] ss:$8 sm:$0xf]
        %s478 = scalar_lea.vmem [#allocation2], 161
        %479 = vst.msk [vmem:[%s478] ss:$8 sm:$0xf] %vm283, %v477
        %480 = vst.msk [vmem:[%s478] ss:$8 sm:$0x0] %vm283, %v477
        %s481 = sadd.s32 %s397, 6
        %s482 = sld [smem:[#allocation5 + %s481]]
        %s483 = sshra.s32 %s482, 3
        %s484 = sand.u32 %s482, 7
        %s485 = sshra.s32 %s482, 3
        %s486 = sand.u32 %s482, 7
        %s487 = smul.u32 %s483, 4
        %s488 = smul.u32 %s487, 8
        %s489 = sadd.s32 %s488, %s486
        %s490 = scalar_lea.vmem [#allocation6], %s489
        %v491 = vld [vmem:[%s490] ss:$8 sm:$0xf]
        %s492 = scalar_lea.vmem [#allocation2], 193
        %493 = vst.msk [vmem:[%s492] ss:$8 sm:$0xf] %vm283, %v491
        %494 = vst.msk [vmem:[%s492] ss:$8 sm:$0x0] %vm283, %v491
        %s495 = sadd.s32 %s397, 7
        %s496 = sld [smem:[#allocation5 + %s495]]
        %s497 = sshra.s32 %s496, 3
        %s498 = sand.u32 %s496, 7
        %s499 = sshra.s32 %s496, 3
        %s500 = sand.u32 %s496, 7
        %s501 = smul.u32 %s497, 4
        %s502 = smul.u32 %s501, 8
        %s503 = sadd.s32 %s502, %s500
        %s504 = scalar_lea.vmem [#allocation6], %s503
        %v505 = vld [vmem:[%s504] ss:$8 sm:$0xf]
        %s506 = scalar_lea.vmem [#allocation2], 225
        %507 = vst.msk [vmem:[%s506] ss:$8 sm:$0xf] %vm283, %v505
        %508 = vst.msk [vmem:[%s506] ss:$8 sm:$0x0] %vm283, %v505
        %s509 = sld [smem:[#allocation5 + %s495]]
        %s510 = sshra.s32 %s509, 3
        %s511 = sand.u32 %s509, 7
        %s512 = sshra.s32 %s509, 3
        %s513 = sand.u32 %s509, 7
        %s514 = smul.u32 %s510, 4
        %s515 = smul.u32 %s514, 8
        %s516 = sadd.s32 %s515, %s513
        %s517 = scalar_lea.vmem [#allocation9], %s516
        %v518 = vld [vmem:[%s517] ss:$8 sm:$0xf]
        %s519 = scalar_lea.vmem [#allocation3], 1
        %520 = vst.msk [vmem:[%s519] ss:$8 sm:$0xf] %vm283, %v518
        %521 = vst.msk [vmem:[%s519] ss:$8 sm:$0x0] %vm283, %v518
        %s522 = sadd.s32 %s268, 2
        %s523 = smul.u32 %s522, 8
        %s524 = sld [smem:[#allocation5 + %s523]]
        %s525 = sshra.s32 %s524, 3
        %s526 = sand.u32 %s524, 7
        %s527 = sshra.s32 %s524, 3
        %s528 = sand.u32 %s524, 7
        %s529 = smul.u32 %s525, 4
        %s530 = smul.u32 %s529, 8
        %s531 = sadd.s32 %s530, %s528
        %s532 = scalar_lea.vmem [#allocation6], %s531
        %v533 = vld [vmem:[%s532] ss:$8 sm:$0xf]
        %s534 = scalar_lea.vmem [#allocation2], 2
        %535 = vst.msk [vmem:[%s534] ss:$8 sm:$0xf] %vm283, %v533
        %536 = vst.msk [vmem:[%s534] ss:$8 sm:$0x0] %vm283, %v533
        %s537 = sadd.s32 %s523, 1
        %s538 = sld [smem:[#allocation5 + %s537]]
        %s539 = sshra.s32 %s538, 3
        %s540 = sand.u32 %s538, 7
        %s541 = sshra.s32 %s538, 3
        %s542 = sand.u32 %s538, 7
        %s543 = smul.u32 %s539, 4
        %s544 = smul.u32 %s543, 8
        %s545 = sadd.s32 %s544, %s542
        %s546 = scalar_lea.vmem [#allocation6], %s545
        %v547 = vld [vmem:[%s546] ss:$8 sm:$0xf]
        %s548 = scalar_lea.vmem [#allocation2], 34
        %549 = vst.msk [vmem:[%s548] ss:$8 sm:$0xf] %vm283, %v547
        %550 = vst.msk [vmem:[%s548] ss:$8 sm:$0x0] %vm283, %v547
        %s551 = sadd.s32 %s523, 2
        %s552 = sld [smem:[#allocation5 + %s551]]
        %s553 = sshra.s32 %s552, 3
        %s554 = sand.u32 %s552, 7
        %s555 = sshra.s32 %s552, 3
        %s556 = sand.u32 %s552, 7
        %s557 = smul.u32 %s553, 4
        %s558 = smul.u32 %s557, 8
        %s559 = sadd.s32 %s558, %s556
        %s560 = scalar_lea.vmem [#allocation6], %s559
        %v561 = vld [vmem:[%s560] ss:$8 sm:$0xf]
        %s562 = scalar_lea.vmem [#allocation2], 66
        %563 = vst.msk [vmem:[%s562] ss:$8 sm:$0xf] %vm283, %v561
        %564 = vst.msk [vmem:[%s562] ss:$8 sm:$0x0] %vm283, %v561
        %s565 = sadd.s32 %s523, 3
        %s566 = sld [smem:[#allocation5 + %s565]]
        %s567 = sshra.s32 %s566, 3
        %s568 = sand.u32 %s566, 7
        %s569 = sshra.s32 %s566, 3
        %s570 = sand.u32 %s566, 7
        %s571 = smul.u32 %s567, 4
        %s572 = smul.u32 %s571, 8
        %s573 = sadd.s32 %s572, %s570
        %s574 = scalar_lea.vmem [#allocation6], %s573
        %v575 = vld [vmem:[%s574] ss:$8 sm:$0xf]
        %s576 = scalar_lea.vmem [#allocation2], 98
        %577 = vst.msk [vmem:[%s576] ss:$8 sm:$0xf] %vm283, %v575
        %578 = vst.msk [vmem:[%s576] ss:$8 sm:$0x0] %vm283, %v575
        %s579 = sadd.s32 %s523, 4
        %s580 = sld [smem:[#allocation5 + %s579]]
        %s581 = sshra.s32 %s580, 3
        %s582 = sand.u32 %s580, 7
        %s583 = sshra.s32 %s580, 3
        %s584 = sand.u32 %s580, 7
        %s585 = smul.u32 %s581, 4
        %s586 = smul.u32 %s585, 8
        %s587 = sadd.s32 %s586, %s584
        %s588 = scalar_lea.vmem [#allocation6], %s587
        %v589 = vld [vmem:[%s588] ss:$8 sm:$0xf]
        %s590 = scalar_lea.vmem [#allocation2], 130
        %591 = vst.msk [vmem:[%s590] ss:$8 sm:$0xf] %vm283, %v589
        %592 = vst.msk [vmem:[%s590] ss:$8 sm:$0x0] %vm283, %v589
        %s593 = sadd.s32 %s523, 5
        %s594 = sld [smem:[#allocation5 + %s593]]
        %s595 = sshra.s32 %s594, 3
        %s596 = sand.u32 %s594, 7
        %s597 = sshra.s32 %s594, 3
        %s598 = sand.u32 %s594, 7
        %s599 = smul.u32 %s595, 4
        %s600 = smul.u32 %s599, 8
        %s601 = sadd.s32 %s600, %s598
        %s602 = scalar_lea.vmem [#allocation6], %s601
        %v603 = vld [vmem:[%s602] ss:$8 sm:$0xf]
        %s604 = scalar_lea.vmem [#allocation2], 162
        %605 = vst.msk [vmem:[%s604] ss:$8 sm:$0xf] %vm283, %v603
        %606 = vst.msk [vmem:[%s604] ss:$8 sm:$0x0] %vm283, %v603
        %s607 = sadd.s32 %s523, 6
        %s608 = sld [smem:[#allocation5 + %s607]]
        %s609 = sshra.s32 %s608, 3
        %s610 = sand.u32 %s608, 7
        %s611 = sshra.s32 %s608, 3
        %s612 = sand.u32 %s608, 7
        %s613 = smul.u32 %s609, 4
        %s614 = smul.u32 %s613, 8
        %s615 = sadd.s32 %s614, %s612
        %s616 = scalar_lea.vmem [#allocation6], %s615
        %v617 = vld [vmem:[%s616] ss:$8 sm:$0xf]
        %s618 = scalar_lea.vmem [#allocation2], 194
        %619 = vst.msk [vmem:[%s618] ss:$8 sm:$0xf] %vm283, %v617
        %620 = vst.msk [vmem:[%s618] ss:$8 sm:$0x0] %vm283, %v617
        %s621 = sadd.s32 %s523, 7
        %s622 = sld [smem:[#allocation5 + %s621]]
        %s623 = sshra.s32 %s622, 3
        %s624 = sand.u32 %s622, 7
        %s625 = sshra.s32 %s622, 3
        %s626 = sand.u32 %s622, 7
        %s627 = smul.u32 %s623, 4
        %s628 = smul.u32 %s627, 8
        %s629 = sadd.s32 %s628, %s626
        %s630 = scalar_lea.vmem [#allocation6], %s629
        %v631 = vld [vmem:[%s630] ss:$8 sm:$0xf]
        %s632 = scalar_lea.vmem [#allocation2], 226
        %633 = vst.msk [vmem:[%s632] ss:$8 sm:$0xf] %vm283, %v631
        %634 = vst.msk [vmem:[%s632] ss:$8 sm:$0x0] %vm283, %v631
        %s635 = sld [smem:[#allocation5 + %s621]]
        %s636 = sshra.s32 %s635, 3
        %s637 = sand.u32 %s635, 7
        %s638 = sshra.s32 %s635, 3
        %s639 = sand.u32 %s635, 7
        %s640 = smul.u32 %s636, 4
        %s641 = smul.u32 %s640, 8
        %s642 = sadd.s32 %s641, %s639
        %s643 = scalar_lea.vmem [#allocation9], %s642
        %v644 = vld [vmem:[%s643] ss:$8 sm:$0xf]
        %s645 = scalar_lea.vmem [#allocation3], 2
        %646 = vst.msk [vmem:[%s645] ss:$8 sm:$0xf] %vm283, %v644
        %647 = vst.msk [vmem:[%s645] ss:$8 sm:$0x0] %vm283, %v644
        %s648 = sadd.s32 %s268, 3
        %s649 = smul.u32 %s648, 8
        %s650 = sld [smem:[#allocation5 + %s649]]
        %s651 = sshra.s32 %s650, 3
        %s652 = sand.u32 %s650, 7
        %s653 = sshra.s32 %s650, 3
        %s654 = sand.u32 %s650, 7
        %s655 = smul.u32 %s651, 4
        %s656 = smul.u32 %s655, 8
        %s657 = sadd.s32 %s656, %s654
        %s658 = scalar_lea.vmem [#allocation6], %s657
        %v659 = vld [vmem:[%s658] ss:$8 sm:$0xf]
        %s660 = scalar_lea.vmem [#allocation2], 3
        %661 = vst.msk [vmem:[%s660] ss:$8 sm:$0xf] %vm283, %v659
        %662 = vst.msk [vmem:[%s660] ss:$8 sm:$0x0] %vm283, %v659
        %s663 = sadd.s32 %s649, 1
        %s664 = sld [smem:[#allocation5 + %s663]]
        %s665 = sshra.s32 %s664, 3
        %s666 = sand.u32 %s664, 7
        %s667 = sshra.s32 %s664, 3
        %s668 = sand.u32 %s664, 7
        %s669 = smul.u32 %s665, 4
        %s670 = smul.u32 %s669, 8
        %s671 = sadd.s32 %s670, %s668
        %s672 = scalar_lea.vmem [#allocation6], %s671
        %v673 = vld [vmem:[%s672] ss:$8 sm:$0xf]
        %s674 = scalar_lea.vmem [#allocation2], 35
        %675 = vst.msk [vmem:[%s674] ss:$8 sm:$0xf] %vm283, %v673
        %676 = vst.msk [vmem:[%s674] ss:$8 sm:$0x0] %vm283, %v673
        %s677 = sadd.s32 %s649, 2
        %s678 = sld [smem:[#allocation5 + %s677]]
        %s679 = sshra.s32 %s678, 3
        %s680 = sand.u32 %s678, 7
        %s681 = sshra.s32 %s678, 3
        %s682 = sand.u32 %s678, 7
        %s683 = smul.u32 %s679, 4
        %s684 = smul.u32 %s683, 8
        %s685 = sadd.s32 %s684, %s682
        %s686 = scalar_lea.vmem [#allocation6], %s685
        %v687 = vld [vmem:[%s686] ss:$8 sm:$0xf]
        %s688 = scalar_lea.vmem [#allocation2], 67
        %689 = vst.msk [vmem:[%s688] ss:$8 sm:$0xf] %vm283, %v687
        %690 = vst.msk [vmem:[%s688] ss:$8 sm:$0x0] %vm283, %v687
        %s691 = sadd.s32 %s649, 3
        %s692 = sld [smem:[#allocation5 + %s691]]
        %s693 = sshra.s32 %s692, 3
        %s694 = sand.u32 %s692, 7
        %s695 = sshra.s32 %s692, 3
        %s696 = sand.u32 %s692, 7
        %s697 = smul.u32 %s693, 4
        %s698 = smul.u32 %s697, 8
        %s699 = sadd.s32 %s698, %s696
        %s700 = scalar_lea.vmem [#allocation6], %s699
        %v701 = vld [vmem:[%s700] ss:$8 sm:$0xf]
        %s702 = scalar_lea.vmem [#allocation2], 99
        %703 = vst.msk [vmem:[%s702] ss:$8 sm:$0xf] %vm283, %v701
        %704 = vst.msk [vmem:[%s702] ss:$8 sm:$0x0] %vm283, %v701
        %s705 = sadd.s32 %s649, 4
        %s706 = sld [smem:[#allocation5 + %s705]]
        %s707 = sshra.s32 %s706, 3
        %s708 = sand.u32 %s706, 7
        %s709 = sshra.s32 %s706, 3
        %s710 = sand.u32 %s706, 7
        %s711 = smul.u32 %s707, 4
        %s712 = smul.u32 %s711, 8
        %s713 = sadd.s32 %s712, %s710
        %s714 = scalar_lea.vmem [#allocation6], %s713
        %v715 = vld [vmem:[%s714] ss:$8 sm:$0xf]
        %s716 = scalar_lea.vmem [#allocation2], 131
        %717 = vst.msk [vmem:[%s716] ss:$8 sm:$0xf] %vm283, %v715
        %718 = vst.msk [vmem:[%s716] ss:$8 sm:$0x0] %vm283, %v715
        %s719 = sadd.s32 %s649, 5
        %s720 = sld [smem:[#allocation5 + %s719]]
        %s721 = sshra.s32 %s720, 3
        %s722 = sand.u32 %s720, 7
        %s723 = sshra.s32 %s720, 3
        %s724 = sand.u32 %s720, 7
        %s725 = smul.u32 %s721, 4
        %s726 = smul.u32 %s725, 8
        %s727 = sadd.s32 %s726, %s724
        %s728 = scalar_lea.vmem [#allocation6], %s727
        %v729 = vld [vmem:[%s728] ss:$8 sm:$0xf]
        %s730 = scalar_lea.vmem [#allocation2], 163
        %731 = vst.msk [vmem:[%s730] ss:$8 sm:$0xf] %vm283, %v729
        %732 = vst.msk [vmem:[%s730] ss:$8 sm:$0x0] %vm283, %v729
        %s733 = sadd.s32 %s649, 6
        %s734 = sld [smem:[#allocation5 + %s733]]
        %s735 = sshra.s32 %s734, 3
        %s736 = sand.u32 %s734, 7
        %s737 = sshra.s32 %s734, 3
        %s738 = sand.u32 %s734, 7
        %s739 = smul.u32 %s735, 4
        %s740 = smul.u32 %s739, 8
        %s741 = sadd.s32 %s740, %s738
        %s742 = scalar_lea.vmem [#allocation6], %s741
        %v743 = vld [vmem:[%s742] ss:$8 sm:$0xf]
        %s744 = scalar_lea.vmem [#allocation2], 195
        %745 = vst.msk [vmem:[%s744] ss:$8 sm:$0xf] %vm283, %v743
        %746 = vst.msk [vmem:[%s744] ss:$8 sm:$0x0] %vm283, %v743
        %s747 = sadd.s32 %s649, 7
        %s748 = sld [smem:[#allocation5 + %s747]]
        %s749 = sshra.s32 %s748, 3
        %s750 = sand.u32 %s748, 7
        %s751 = sshra.s32 %s748, 3
        %s752 = sand.u32 %s748, 7
        %s753 = smul.u32 %s749, 4
        %s754 = smul.u32 %s753, 8
        %s755 = sadd.s32 %s754, %s752
        %s756 = scalar_lea.vmem [#allocation6], %s755
        %v757 = vld [vmem:[%s756] ss:$8 sm:$0xf]
        %s758 = scalar_lea.vmem [#allocation2], 227
        %759 = vst.msk [vmem:[%s758] ss:$8 sm:$0xf] %vm283, %v757
        %760 = vst.msk [vmem:[%s758] ss:$8 sm:$0x0] %vm283, %v757
        %s761 = sld [smem:[#allocation5 + %s747]]
        %s762 = sshra.s32 %s761, 3
        %s763 = sand.u32 %s761, 7
        %s764 = sshra.s32 %s761, 3
        %s765 = sand.u32 %s761, 7
        %s766 = smul.u32 %s762, 4
        %s767 = smul.u32 %s766, 8
        %s768 = sadd.s32 %s767, %s765
        %s769 = scalar_lea.vmem [#allocation9], %s768
        %v770 = vld [vmem:[%s769] ss:$8 sm:$0xf]
        %s771 = scalar_lea.vmem [#allocation3], 3
        %772 = vst.msk [vmem:[%s771] ss:$8 sm:$0xf] %vm283, %v770
        %773 = vst.msk [vmem:[%s771] ss:$8 sm:$0x0] %vm283, %v770
        %s774 = sadd.s32 %s268, 4
        %s775 = smul.u32 %s774, 8
        %s776 = sld [smem:[#allocation5 + %s775]]
        %s777 = sshra.s32 %s776, 3
        %s778 = sand.u32 %s776, 7
        %s779 = sshra.s32 %s776, 3
        %s780 = sand.u32 %s776, 7
        %s781 = smul.u32 %s777, 4
        %s782 = smul.u32 %s781, 8
        %s783 = sadd.s32 %s782, %s780
        %s784 = scalar_lea.vmem [#allocation6], %s783
        %v785 = vld [vmem:[%s784] ss:$8 sm:$0xf]
        %s786 = scalar_lea.vmem [#allocation2], 4
        %787 = vst.msk [vmem:[%s786] ss:$8 sm:$0xf] %vm283, %v785
        %788 = vst.msk [vmem:[%s786] ss:$8 sm:$0x0] %vm283, %v785
        %s789 = sadd.s32 %s775, 1
        %s790 = sld [smem:[#allocation5 + %s789]]
        %s791 = sshra.s32 %s790, 3
        %s792 = sand.u32 %s790, 7
        %s793 = sshra.s32 %s790, 3
        %s794 = sand.u32 %s790, 7
        %s795 = smul.u32 %s791, 4
        %s796 = smul.u32 %s795, 8
        %s797 = sadd.s32 %s796, %s794
        %s798 = scalar_lea.vmem [#allocation6], %s797
        %v799 = vld [vmem:[%s798] ss:$8 sm:$0xf]
        %s800 = scalar_lea.vmem [#allocation2], 36
        %801 = vst.msk [vmem:[%s800] ss:$8 sm:$0xf] %vm283, %v799
        %802 = vst.msk [vmem:[%s800] ss:$8 sm:$0x0] %vm283, %v799
        %s803 = sadd.s32 %s775, 2
        %s804 = sld [smem:[#allocation5 + %s803]]
        %s805 = sshra.s32 %s804, 3
        %s806 = sand.u32 %s804, 7
        %s807 = sshra.s32 %s804, 3
        %s808 = sand.u32 %s804, 7
        %s809 = smul.u32 %s805, 4
        %s810 = smul.u32 %s809, 8
        %s811 = sadd.s32 %s810, %s808
        %s812 = scalar_lea.vmem [#allocation6], %s811
        %v813 = vld [vmem:[%s812] ss:$8 sm:$0xf]
        %s814 = scalar_lea.vmem [#allocation2], 68
        %815 = vst.msk [vmem:[%s814] ss:$8 sm:$0xf] %vm283, %v813
        %816 = vst.msk [vmem:[%s814] ss:$8 sm:$0x0] %vm283, %v813
        %s817 = sadd.s32 %s775, 3
        %s818 = sld [smem:[#allocation5 + %s817]]
        %s819 = sshra.s32 %s818, 3
        %s820 = sand.u32 %s818, 7
        %s821 = sshra.s32 %s818, 3
        %s822 = sand.u32 %s818, 7
        %s823 = smul.u32 %s819, 4
        %s824 = smul.u32 %s823, 8
        %s825 = sadd.s32 %s824, %s822
        %s826 = scalar_lea.vmem [#allocation6], %s825
        %v827 = vld [vmem:[%s826] ss:$8 sm:$0xf]
        %s828 = scalar_lea.vmem [#allocation2], 100
        %829 = vst.msk [vmem:[%s828] ss:$8 sm:$0xf] %vm283, %v827
        %830 = vst.msk [vmem:[%s828] ss:$8 sm:$0x0] %vm283, %v827
        %s831 = sadd.s32 %s775, 4
        %s832 = sld [smem:[#allocation5 + %s831]]
        %s833 = sshra.s32 %s832, 3
        %s834 = sand.u32 %s832, 7
        %s835 = sshra.s32 %s832, 3
        %s836 = sand.u32 %s832, 7
        %s837 = smul.u32 %s833, 4
        %s838 = smul.u32 %s837, 8
        %s839 = sadd.s32 %s838, %s836
        %s840 = scalar_lea.vmem [#allocation6], %s839
        %v841 = vld [vmem:[%s840] ss:$8 sm:$0xf]
        %s842 = scalar_lea.vmem [#allocation2], 132
        %843 = vst.msk [vmem:[%s842] ss:$8 sm:$0xf] %vm283, %v841
        %844 = vst.msk [vmem:[%s842] ss:$8 sm:$0x0] %vm283, %v841
        %s845 = sadd.s32 %s775, 5
        %s846 = sld [smem:[#allocation5 + %s845]]
        %s847 = sshra.s32 %s846, 3
        %s848 = sand.u32 %s846, 7
        %s849 = sshra.s32 %s846, 3
        %s850 = sand.u32 %s846, 7
        %s851 = smul.u32 %s847, 4
        %s852 = smul.u32 %s851, 8
        %s853 = sadd.s32 %s852, %s850
        %s854 = scalar_lea.vmem [#allocation6], %s853
        %v855 = vld [vmem:[%s854] ss:$8 sm:$0xf]
        %s856 = scalar_lea.vmem [#allocation2], 164
        %857 = vst.msk [vmem:[%s856] ss:$8 sm:$0xf] %vm283, %v855
        %858 = vst.msk [vmem:[%s856] ss:$8 sm:$0x0] %vm283, %v855
        %s859 = sadd.s32 %s775, 6
        %s860 = sld [smem:[#allocation5 + %s859]]
        %s861 = sshra.s32 %s860, 3
        %s862 = sand.u32 %s860, 7
        %s863 = sshra.s32 %s860, 3
        %s864 = sand.u32 %s860, 7
        %s865 = smul.u32 %s861, 4
        %s866 = smul.u32 %s865, 8
        %s867 = sadd.s32 %s866, %s864
        %s868 = scalar_lea.vmem [#allocation6], %s867
        %v869 = vld [vmem:[%s868] ss:$8 sm:$0xf]
        %s870 = scalar_lea.vmem [#allocation2], 196
        %871 = vst.msk [vmem:[%s870] ss:$8 sm:$0xf] %vm283, %v869
        %872 = vst.msk [vmem:[%s870] ss:$8 sm:$0x0] %vm283, %v869
        %s873 = sadd.s32 %s775, 7
        %s874 = sld [smem:[#allocation5 + %s873]]
        %s875 = sshra.s32 %s874, 3
        %s876 = sand.u32 %s874, 7
        %s877 = sshra.s32 %s874, 3
        %s878 = sand.u32 %s874, 7
        %s879 = smul.u32 %s875, 4
        %s880 = smul.u32 %s879, 8
        %s881 = sadd.s32 %s880, %s878
        %s882 = scalar_lea.vmem [#allocation6], %s881
        %v883 = vld [vmem:[%s882] ss:$8 sm:$0xf]
        %s884 = scalar_lea.vmem [#allocation2], 228
        %885 = vst.msk [vmem:[%s884] ss:$8 sm:$0xf] %vm283, %v883
        %886 = vst.msk [vmem:[%s884] ss:$8 sm:$0x0] %vm283, %v883
        %s887 = sld [smem:[#allocation5 + %s873]]
        %s888 = sshra.s32 %s887, 3
        %s889 = sand.u32 %s887, 7
        %s890 = sshra.s32 %s887, 3
        %s891 = sand.u32 %s887, 7
        %s892 = smul.u32 %s888, 4
        %s893 = smul.u32 %s892, 8
        %s894 = sadd.s32 %s893, %s891
        %s895 = scalar_lea.vmem [#allocation9], %s894
        %v896 = vld [vmem:[%s895] ss:$8 sm:$0xf]
        %s897 = scalar_lea.vmem [#allocation3], 4
        %898 = vst.msk [vmem:[%s897] ss:$8 sm:$0xf] %vm283, %v896
        %899 = vst.msk [vmem:[%s897] ss:$8 sm:$0x0] %vm283, %v896
        %s900 = sadd.s32 %s268, 5
        %s901 = smul.u32 %s900, 8
        %s902 = sld [smem:[#allocation5 + %s901]]
        %s903 = sshra.s32 %s902, 3
        %s904 = sand.u32 %s902, 7
        %s905 = sshra.s32 %s902, 3
        %s906 = sand.u32 %s902, 7
        %s907 = smul.u32 %s903, 4
        %s908 = smul.u32 %s907, 8
        %s909 = sadd.s32 %s908, %s906
        %s910 = scalar_lea.vmem [#allocation6], %s909
        %v911 = vld [vmem:[%s910] ss:$8 sm:$0xf]
        %s912 = scalar_lea.vmem [#allocation2], 5
        %913 = vst.msk [vmem:[%s912] ss:$8 sm:$0xf] %vm283, %v911
        %914 = vst.msk [vmem:[%s912] ss:$8 sm:$0x0] %vm283, %v911
        %s915 = sadd.s32 %s901, 1
        %s916 = sld [smem:[#allocation5 + %s915]]
        %s917 = sshra.s32 %s916, 3
        %s918 = sand.u32 %s916, 7
        %s919 = sshra.s32 %s916, 3
        %s920 = sand.u32 %s916, 7
        %s921 = smul.u32 %s917, 4
        %s922 = smul.u32 %s921, 8
        %s923 = sadd.s32 %s922, %s920
        %s924 = scalar_lea.vmem [#allocation6], %s923
        %v925 = vld [vmem:[%s924] ss:$8 sm:$0xf]
        %s926 = scalar_lea.vmem [#allocation2], 37
        %927 = vst.msk [vmem:[%s926] ss:$8 sm:$0xf] %vm283, %v925
        %928 = vst.msk [vmem:[%s926] ss:$8 sm:$0x0] %vm283, %v925
        %s929 = sadd.s32 %s901, 2
        %s930 = sld [smem:[#allocation5 + %s929]]
        %s931 = sshra.s32 %s930, 3
        %s932 = sand.u32 %s930, 7
        %s933 = sshra.s32 %s930, 3
        %s934 = sand.u32 %s930, 7
        %s935 = smul.u32 %s931, 4
        %s936 = smul.u32 %s935, 8
        %s937 = sadd.s32 %s936, %s934
        %s938 = scalar_lea.vmem [#allocation6], %s937
        %v939 = vld [vmem:[%s938] ss:$8 sm:$0xf]
        %s940 = scalar_lea.vmem [#allocation2], 69
        %941 = vst.msk [vmem:[%s940] ss:$8 sm:$0xf] %vm283, %v939
        %942 = vst.msk [vmem:[%s940] ss:$8 sm:$0x0] %vm283, %v939
        %s943 = sadd.s32 %s901, 3
        %s944 = sld [smem:[#allocation5 + %s943]]
        %s945 = sshra.s32 %s944, 3
        %s946 = sand.u32 %s944, 7
        %s947 = sshra.s32 %s944, 3
        %s948 = sand.u32 %s944, 7
        %s949 = smul.u32 %s945, 4
        %s950 = smul.u32 %s949, 8
        %s951 = sadd.s32 %s950, %s948
        %s952 = scalar_lea.vmem [#allocation6], %s951
        %v953 = vld [vmem:[%s952] ss:$8 sm:$0xf]
        %s954 = scalar_lea.vmem [#allocation2], 101
        %955 = vst.msk [vmem:[%s954] ss:$8 sm:$0xf] %vm283, %v953
        %956 = vst.msk [vmem:[%s954] ss:$8 sm:$0x0] %vm283, %v953
        %s957 = sadd.s32 %s901, 4
        %s958 = sld [smem:[#allocation5 + %s957]]
        %s959 = sshra.s32 %s958, 3
        %s960 = sand.u32 %s958, 7
        %s961 = sshra.s32 %s958, 3
        %s962 = sand.u32 %s958, 7
        %s963 = smul.u32 %s959, 4
        %s964 = smul.u32 %s963, 8
        %s965 = sadd.s32 %s964, %s962
        %s966 = scalar_lea.vmem [#allocation6], %s965
        %v967 = vld [vmem:[%s966] ss:$8 sm:$0xf]
        %s968 = scalar_lea.vmem [#allocation2], 133
        %969 = vst.msk [vmem:[%s968] ss:$8 sm:$0xf] %vm283, %v967
        %970 = vst.msk [vmem:[%s968] ss:$8 sm:$0x0] %vm283, %v967
        %s971 = sadd.s32 %s901, 5
        %s972 = sld [smem:[#allocation5 + %s971]]
        %s973 = sshra.s32 %s972, 3
        %s974 = sand.u32 %s972, 7
        %s975 = sshra.s32 %s972, 3
        %s976 = sand.u32 %s972, 7
        %s977 = smul.u32 %s973, 4
        %s978 = smul.u32 %s977, 8
        %s979 = sadd.s32 %s978, %s976
        %s980 = scalar_lea.vmem [#allocation6], %s979
        %v981 = vld [vmem:[%s980] ss:$8 sm:$0xf]
        %s982 = scalar_lea.vmem [#allocation2], 165
        %983 = vst.msk [vmem:[%s982] ss:$8 sm:$0xf] %vm283, %v981
        %984 = vst.msk [vmem:[%s982] ss:$8 sm:$0x0] %vm283, %v981
        %s985 = sadd.s32 %s901, 6
        %s986 = sld [smem:[#allocation5 + %s985]]
        %s987 = sshra.s32 %s986, 3
        %s988 = sand.u32 %s986, 7
        %s989 = sshra.s32 %s986, 3
        %s990 = sand.u32 %s986, 7
        %s991 = smul.u32 %s987, 4
        %s992 = smul.u32 %s991, 8
        %s993 = sadd.s32 %s992, %s990
        %s994 = scalar_lea.vmem [#allocation6], %s993
        %v995 = vld [vmem:[%s994] ss:$8 sm:$0xf]
        %s996 = scalar_lea.vmem [#allocation2], 197
        %997 = vst.msk [vmem:[%s996] ss:$8 sm:$0xf] %vm283, %v995
        %998 = vst.msk [vmem:[%s996] ss:$8 sm:$0x0] %vm283, %v995
        %s999 = sadd.s32 %s901, 7
        %s1000 = sld [smem:[#allocation5 + %s999]]
        %s1001 = sshra.s32 %s1000, 3
        %s1002 = sand.u32 %s1000, 7
        %s1003 = sshra.s32 %s1000, 3
        %s1004 = sand.u32 %s1000, 7
        %s1005 = smul.u32 %s1001, 4
        %s1006 = smul.u32 %s1005, 8
        %s1007 = sadd.s32 %s1006, %s1004
        %s1008 = scalar_lea.vmem [#allocation6], %s1007
        %v1009 = vld [vmem:[%s1008] ss:$8 sm:$0xf]
        %s1010 = scalar_lea.vmem [#allocation2], 229
        %1011 = vst.msk [vmem:[%s1010] ss:$8 sm:$0xf] %vm283, %v1009
        %1012 = vst.msk [vmem:[%s1010] ss:$8 sm:$0x0] %vm283, %v1009
        %s1013 = sld [smem:[#allocation5 + %s999]]
        %s1014 = sshra.s32 %s1013, 3
        %s1015 = sand.u32 %s1013, 7
        %s1016 = sshra.s32 %s1013, 3
        %s1017 = sand.u32 %s1013, 7
        %s1018 = smul.u32 %s1014, 4
        %s1019 = smul.u32 %s1018, 8
        %s1020 = sadd.s32 %s1019, %s1017
        %s1021 = scalar_lea.vmem [#allocation9], %s1020
        %v1022 = vld [vmem:[%s1021] ss:$8 sm:$0xf]
        %s1023 = scalar_lea.vmem [#allocation3], 5
        %1024 = vst.msk [vmem:[%s1023] ss:$8 sm:$0xf] %vm283, %v1022
        %1025 = vst.msk [vmem:[%s1023] ss:$8 sm:$0x0] %vm283, %v1022
        %s1026 = sadd.s32 %s268, 6
        %s1027 = smul.u32 %s1026, 8
        %s1028 = sld [smem:[#allocation5 + %s1027]]
        %s1029 = sshra.s32 %s1028, 3
        %s1030 = sand.u32 %s1028, 7
        %s1031 = sshra.s32 %s1028, 3
        %s1032 = sand.u32 %s1028, 7
        %s1033 = smul.u32 %s1029, 4
        %s1034 = smul.u32 %s1033, 8
        %s1035 = sadd.s32 %s1034, %s1032
        %s1036 = scalar_lea.vmem [#allocation6], %s1035
        %v1037 = vld [vmem:[%s1036] ss:$8 sm:$0xf]
        %s1038 = scalar_lea.vmem [#allocation2], 6
        %1039 = vst.msk [vmem:[%s1038] ss:$8 sm:$0xf] %vm283, %v1037
        %1040 = vst.msk [vmem:[%s1038] ss:$8 sm:$0x0] %vm283, %v1037
        %s1041 = sadd.s32 %s1027, 1
        %s1042 = sld [smem:[#allocation5 + %s1041]]
        %s1043 = sshra.s32 %s1042, 3
        %s1044 = sand.u32 %s1042, 7
        %s1045 = sshra.s32 %s1042, 3
        %s1046 = sand.u32 %s1042, 7
        %s1047 = smul.u32 %s1043, 4
        %s1048 = smul.u32 %s1047, 8
        %s1049 = sadd.s32 %s1048, %s1046
        %s1050 = scalar_lea.vmem [#allocation6], %s1049
        %v1051 = vld [vmem:[%s1050] ss:$8 sm:$0xf]
        %s1052 = scalar_lea.vmem [#allocation2], 38
        %1053 = vst.msk [vmem:[%s1052] ss:$8 sm:$0xf] %vm283, %v1051
        %1054 = vst.msk [vmem:[%s1052] ss:$8 sm:$0x0] %vm283, %v1051
        %s1055 = sadd.s32 %s1027, 2
        %s1056 = sld [smem:[#allocation5 + %s1055]]
        %s1057 = sshra.s32 %s1056, 3
        %s1058 = sand.u32 %s1056, 7
        %s1059 = sshra.s32 %s1056, 3
        %s1060 = sand.u32 %s1056, 7
        %s1061 = smul.u32 %s1057, 4
        %s1062 = smul.u32 %s1061, 8
        %s1063 = sadd.s32 %s1062, %s1060
        %s1064 = scalar_lea.vmem [#allocation6], %s1063
        %v1065 = vld [vmem:[%s1064] ss:$8 sm:$0xf]
        %s1066 = scalar_lea.vmem [#allocation2], 70
        %1067 = vst.msk [vmem:[%s1066] ss:$8 sm:$0xf] %vm283, %v1065
        %1068 = vst.msk [vmem:[%s1066] ss:$8 sm:$0x0] %vm283, %v1065
        %s1069 = sadd.s32 %s1027, 3
        %s1070 = sld [smem:[#allocation5 + %s1069]]
        %s1071 = sshra.s32 %s1070, 3
        %s1072 = sand.u32 %s1070, 7
        %s1073 = sshra.s32 %s1070, 3
        %s1074 = sand.u32 %s1070, 7
        %s1075 = smul.u32 %s1071, 4
        %s1076 = smul.u32 %s1075, 8
        %s1077 = sadd.s32 %s1076, %s1074
        %s1078 = scalar_lea.vmem [#allocation6], %s1077
        %v1079 = vld [vmem:[%s1078] ss:$8 sm:$0xf]
        %s1080 = scalar_lea.vmem [#allocation2], 102
        %1081 = vst.msk [vmem:[%s1080] ss:$8 sm:$0xf] %vm283, %v1079
        %1082 = vst.msk [vmem:[%s1080] ss:$8 sm:$0x0] %vm283, %v1079
        %s1083 = sadd.s32 %s1027, 4
        %s1084 = sld [smem:[#allocation5 + %s1083]]
        %s1085 = sshra.s32 %s1084, 3
        %s1086 = sand.u32 %s1084, 7
        %s1087 = sshra.s32 %s1084, 3
        %s1088 = sand.u32 %s1084, 7
        %s1089 = smul.u32 %s1085, 4
        %s1090 = smul.u32 %s1089, 8
        %s1091 = sadd.s32 %s1090, %s1088
        %s1092 = scalar_lea.vmem [#allocation6], %s1091
        %v1093 = vld [vmem:[%s1092] ss:$8 sm:$0xf]
        %s1094 = scalar_lea.vmem [#allocation2], 134
        %1095 = vst.msk [vmem:[%s1094] ss:$8 sm:$0xf] %vm283, %v1093
        %1096 = vst.msk [vmem:[%s1094] ss:$8 sm:$0x0] %vm283, %v1093
        %s1097 = sadd.s32 %s1027, 5
        %s1098 = sld [smem:[#allocation5 + %s1097]]
        %s1099 = sshra.s32 %s1098, 3
        %s1100 = sand.u32 %s1098, 7
        %s1101 = sshra.s32 %s1098, 3
        %s1102 = sand.u32 %s1098, 7
        %s1103 = smul.u32 %s1099, 4
        %s1104 = smul.u32 %s1103, 8
        %s1105 = sadd.s32 %s1104, %s1102
        %s1106 = scalar_lea.vmem [#allocation6], %s1105
        %v1107 = vld [vmem:[%s1106] ss:$8 sm:$0xf]
        %s1108 = scalar_lea.vmem [#allocation2], 166
        %1109 = vst.msk [vmem:[%s1108] ss:$8 sm:$0xf] %vm283, %v1107
        %1110 = vst.msk [vmem:[%s1108] ss:$8 sm:$0x0] %vm283, %v1107
        %s1111 = sadd.s32 %s1027, 6
        %s1112 = sld [smem:[#allocation5 + %s1111]]
        %s1113 = sshra.s32 %s1112, 3
        %s1114 = sand.u32 %s1112, 7
        %s1115 = sshra.s32 %s1112, 3
        %s1116 = sand.u32 %s1112, 7
        %s1117 = smul.u32 %s1113, 4
        %s1118 = smul.u32 %s1117, 8
        %s1119 = sadd.s32 %s1118, %s1116
        %s1120 = scalar_lea.vmem [#allocation6], %s1119
        %v1121 = vld [vmem:[%s1120] ss:$8 sm:$0xf]
        %s1122 = scalar_lea.vmem [#allocation2], 198
        %1123 = vst.msk [vmem:[%s1122] ss:$8 sm:$0xf] %vm283, %v1121
        %1124 = vst.msk [vmem:[%s1122] ss:$8 sm:$0x0] %vm283, %v1121
        %s1125 = sadd.s32 %s1027, 7
        %s1126 = sld [smem:[#allocation5 + %s1125]]
        %s1127 = sshra.s32 %s1126, 3
        %s1128 = sand.u32 %s1126, 7
        %s1129 = sshra.s32 %s1126, 3
        %s1130 = sand.u32 %s1126, 7
        %s1131 = smul.u32 %s1127, 4
        %s1132 = smul.u32 %s1131, 8
        %s1133 = sadd.s32 %s1132, %s1130
        %s1134 = scalar_lea.vmem [#allocation6], %s1133
        %v1135 = vld [vmem:[%s1134] ss:$8 sm:$0xf]
        %s1136 = scalar_lea.vmem [#allocation2], 230
        %1137 = vst.msk [vmem:[%s1136] ss:$8 sm:$0xf] %vm283, %v1135
        %1138 = vst.msk [vmem:[%s1136] ss:$8 sm:$0x0] %vm283, %v1135
        %s1139 = sld [smem:[#allocation5 + %s1125]]
        %s1140 = sshra.s32 %s1139, 3
        %s1141 = sand.u32 %s1139, 7
        %s1142 = sshra.s32 %s1139, 3
        %s1143 = sand.u32 %s1139, 7
        %s1144 = smul.u32 %s1140, 4
        %s1145 = smul.u32 %s1144, 8
        %s1146 = sadd.s32 %s1145, %s1143
        %s1147 = scalar_lea.vmem [#allocation9], %s1146
        %v1148 = vld [vmem:[%s1147] ss:$8 sm:$0xf]
        %s1149 = scalar_lea.vmem [#allocation3], 6
        %1150 = vst.msk [vmem:[%s1149] ss:$8 sm:$0xf] %vm283, %v1148
        %1151 = vst.msk [vmem:[%s1149] ss:$8 sm:$0x0] %vm283, %v1148
        %s1152 = sadd.s32 %s268, 7
        %s1153 = smul.u32 %s1152, 8
        %s1154 = sld [smem:[#allocation5 + %s1153]]
        %s1155 = sshra.s32 %s1154, 3
        %s1156 = sand.u32 %s1154, 7
        %s1157 = sshra.s32 %s1154, 3
        %s1158 = sand.u32 %s1154, 7
        %s1159 = smul.u32 %s1155, 4
        %s1160 = smul.u32 %s1159, 8
        %s1161 = sadd.s32 %s1160, %s1158
        %s1162 = scalar_lea.vmem [#allocation6], %s1161
        %v1163 = vld [vmem:[%s1162] ss:$8 sm:$0xf]
        %s1164 = scalar_lea.vmem [#allocation2], 7
        %1165 = vst.msk [vmem:[%s1164] ss:$8 sm:$0xf] %vm283, %v1163
        %1166 = vst.msk [vmem:[%s1164] ss:$8 sm:$0x0] %vm283, %v1163
        %s1167 = sadd.s32 %s1153, 1
        %s1168 = sld [smem:[#allocation5 + %s1167]]
        %s1169 = sshra.s32 %s1168, 3
        %s1170 = sand.u32 %s1168, 7
        %s1171 = sshra.s32 %s1168, 3
        %s1172 = sand.u32 %s1168, 7
        %s1173 = smul.u32 %s1169, 4
        %s1174 = smul.u32 %s1173, 8
        %s1175 = sadd.s32 %s1174, %s1172
        %s1176 = scalar_lea.vmem [#allocation6], %s1175
        %v1177 = vld [vmem:[%s1176] ss:$8 sm:$0xf]
        %s1178 = scalar_lea.vmem [#allocation2], 39
        %1179 = vst.msk [vmem:[%s1178] ss:$8 sm:$0xf] %vm283, %v1177
        %1180 = vst.msk [vmem:[%s1178] ss:$8 sm:$0x0] %vm283, %v1177
        %s1181 = sadd.s32 %s1153, 2
        %s1182 = sld [smem:[#allocation5 + %s1181]]
        %s1183 = sshra.s32 %s1182, 3
        %s1184 = sand.u32 %s1182, 7
        %s1185 = sshra.s32 %s1182, 3
        %s1186 = sand.u32 %s1182, 7
        %s1187 = smul.u32 %s1183, 4
        %s1188 = smul.u32 %s1187, 8
        %s1189 = sadd.s32 %s1188, %s1186
        %s1190 = scalar_lea.vmem [#allocation6], %s1189
        %v1191 = vld [vmem:[%s1190] ss:$8 sm:$0xf]
        %s1192 = scalar_lea.vmem [#allocation2], 71
        %1193 = vst.msk [vmem:[%s1192] ss:$8 sm:$0xf] %vm283, %v1191
        %1194 = vst.msk [vmem:[%s1192] ss:$8 sm:$0x0] %vm283, %v1191
        %s1195 = sadd.s32 %s1153, 3
        %s1196 = sld [smem:[#allocation5 + %s1195]]
        %s1197 = sshra.s32 %s1196, 3
        %s1198 = sand.u32 %s1196, 7
        %s1199 = sshra.s32 %s1196, 3
        %s1200 = sand.u32 %s1196, 7
        %s1201 = smul.u32 %s1197, 4
        %s1202 = smul.u32 %s1201, 8
        %s1203 = sadd.s32 %s1202, %s1200
        %s1204 = scalar_lea.vmem [#allocation6], %s1203
        %v1205 = vld [vmem:[%s1204] ss:$8 sm:$0xf]
        %s1206 = scalar_lea.vmem [#allocation2], 103
        %1207 = vst.msk [vmem:[%s1206] ss:$8 sm:$0xf] %vm283, %v1205
        %1208 = vst.msk [vmem:[%s1206] ss:$8 sm:$0x0] %vm283, %v1205
        %s1209 = sadd.s32 %s1153, 4
        %s1210 = sld [smem:[#allocation5 + %s1209]]
        %s1211 = sshra.s32 %s1210, 3
        %s1212 = sand.u32 %s1210, 7
        %s1213 = sshra.s32 %s1210, 3
        %s1214 = sand.u32 %s1210, 7
        %s1215 = smul.u32 %s1211, 4
        %s1216 = smul.u32 %s1215, 8
        %s1217 = sadd.s32 %s1216, %s1214
        %s1218 = scalar_lea.vmem [#allocation6], %s1217
        %v1219 = vld [vmem:[%s1218] ss:$8 sm:$0xf]
        %s1220 = scalar_lea.vmem [#allocation2], 135
        %1221 = vst.msk [vmem:[%s1220] ss:$8 sm:$0xf] %vm283, %v1219
        %1222 = vst.msk [vmem:[%s1220] ss:$8 sm:$0x0] %vm283, %v1219
        %s1223 = sadd.s32 %s1153, 5
        %s1224 = sld [smem:[#allocation5 + %s1223]]
        %s1225 = sshra.s32 %s1224, 3
        %s1226 = sand.u32 %s1224, 7
        %s1227 = sshra.s32 %s1224, 3
        %s1228 = sand.u32 %s1224, 7
        %s1229 = smul.u32 %s1225, 4
        %s1230 = smul.u32 %s1229, 8
        %s1231 = sadd.s32 %s1230, %s1228
        %s1232 = scalar_lea.vmem [#allocation6], %s1231
        %v1233 = vld [vmem:[%s1232] ss:$8 sm:$0xf]
        %s1234 = scalar_lea.vmem [#allocation2], 167
        %1235 = vst.msk [vmem:[%s1234] ss:$8 sm:$0xf] %vm283, %v1233
        %1236 = vst.msk [vmem:[%s1234] ss:$8 sm:$0x0] %vm283, %v1233
        %s1237 = sadd.s32 %s1153, 6
        %s1238 = sld [smem:[#allocation5 + %s1237]]
        %s1239 = sshra.s32 %s1238, 3
        %s1240 = sand.u32 %s1238, 7
        %s1241 = sshra.s32 %s1238, 3
        %s1242 = sand.u32 %s1238, 7
        %s1243 = smul.u32 %s1239, 4
        %s1244 = smul.u32 %s1243, 8
        %s1245 = sadd.s32 %s1244, %s1242
        %s1246 = scalar_lea.vmem [#allocation6], %s1245
        %v1247 = vld [vmem:[%s1246] ss:$8 sm:$0xf]
        %s1248 = scalar_lea.vmem [#allocation2], 199
        %1249 = vst.msk [vmem:[%s1248] ss:$8 sm:$0xf] %vm283, %v1247
        %1250 = vst.msk [vmem:[%s1248] ss:$8 sm:$0x0] %vm283, %v1247
        %s1251 = sadd.s32 %s1153, 7
        %s1252 = sld [smem:[#allocation5 + %s1251]]
        %s1253 = sshra.s32 %s1252, 3
        %s1254 = sand.u32 %s1252, 7
        %s1255 = sshra.s32 %s1252, 3
        %s1256 = sand.u32 %s1252, 7
        %s1257 = smul.u32 %s1253, 4
        %s1258 = smul.u32 %s1257, 8
        %s1259 = sadd.s32 %s1258, %s1256
        %s1260 = scalar_lea.vmem [#allocation6], %s1259
        %v1261 = vld [vmem:[%s1260] ss:$8 sm:$0xf]
        %s1262 = scalar_lea.vmem [#allocation2], 231
        %1263 = vst.msk [vmem:[%s1262] ss:$8 sm:$0xf] %vm283, %v1261
        %1264 = vst.msk [vmem:[%s1262] ss:$8 sm:$0x0] %vm283, %v1261
        %s1265 = sld [smem:[#allocation5 + %s1251]]
        %s1266 = sshra.s32 %s1265, 3
        %s1267 = sand.u32 %s1265, 7
        %s1268 = sshra.s32 %s1265, 3
        %s1269 = sand.u32 %s1265, 7
        %s1270 = smul.u32 %s1266, 4
        %s1271 = smul.u32 %s1270, 8
        %s1272 = sadd.s32 %s1271, %s1269
        %s1273 = scalar_lea.vmem [#allocation9], %s1272
        %v1274 = vld [vmem:[%s1273] ss:$8 sm:$0xf]
        %s1275 = scalar_lea.vmem [#allocation3], 7
        %1276 = vst.msk [vmem:[%s1275] ss:$8 sm:$0xf] %vm283, %v1274
        %1277 = vst.msk [vmem:[%s1275] ss:$8 sm:$0x0] %vm283, %v1274
        %v1278 = vld [vmem:[#allocation3] sm:$0xff]
        %v1279 = vld [vmem:[#allocation3 + $0x8] sm:$0xff]
        %v1280 = vld [vmem:[#allocation3 + $0x10] sm:$0xff]
        %v1281 = vld [vmem:[#allocation3 + $0x18] sm:$0xff]
        %v1282 = vmul.f32 %v1278, 0.5
        %v1283 = vtanh.pop %v1282
        %v1284 = vmul.f32 %v1283, 0.5
        %v1285 = vadd.f32 %v1284, 0.5
        %v1286 = vmul.f32 %v1279, 0.5
        %v1287 = vtanh.pop %v1286
        %v1288 = vmul.f32 %v1287, 0.5
        %v1289 = vadd.f32 %v1288, 0.5
        %v1290 = vtanh.pop %v1280
        %v1291 = vmul.f32 %v1281, 0.5
        %v1292 = vtanh.pop %v1291
        %v1293 = vmul.f32 %v1292, 0.5
        %v1294 = vadd.f32 %v1293, 0.5
        %v1295 = vmul.f32 %v1289, 0.0
        %v1296 = vmul.f32 %v1285, %v1290
        %v1297 = vadd.f32 %v1295, %v1296
        %v1298 = vtanh.pop %v1297
        %v1299 = vmul.f32 %v1294, %v1298
        %v1300 = vld [vmem:[#allocation11] sm:$0xff]
        %v1301 = vld [vmem:[#allocation11 + $0x8] sm:$0xff]
        %v1302 = vld [vmem:[#allocation11 + $0x10] sm:$0xff]
        %v1303 = vld [vmem:[#allocation11 + $0x18] sm:$0xff]
        %v1304 = vld [vmem:[#allocation11 + $0x20] sm:$0xff]
        %v1305 = vld [vmem:[#allocation11 + $0x28] sm:$0xff]
        %v1306 = vld [vmem:[#allocation11 + $0x30] sm:$0xff]
        %v1307 = vld [vmem:[#allocation11 + $0x38] sm:$0xff]
        %v1308 = vld [vmem:[#allocation11 + $0x40] sm:$0xff]
        %v1309 = vld [vmem:[#allocation11 + $0x48] sm:$0xff]
        %v1310 = vld [vmem:[#allocation11 + $0x50] sm:$0xff]
        %v1311 = vld [vmem:[#allocation11 + $0x58] sm:$0xff]
        %v1312 = vld [vmem:[#allocation11 + $0x60] sm:$0xff]
        %v1313 = vld [vmem:[#allocation11 + $0x68] sm:$0xff]
        %v1314 = vld [vmem:[#allocation11 + $0x70] sm:$0xff]
        %v1315 = vld [vmem:[#allocation11 + $0x78] sm:$0xff]
        %v1316 = vld [vmem:[#allocation11 + $0x80] sm:$0xff]
        %v1317 = vld [vmem:[#allocation11 + $0x88] sm:$0xff]
        %v1318 = vld [vmem:[#allocation11 + $0x90] sm:$0xff]
        %v1319 = vld [vmem:[#allocation11 + $0x98] sm:$0xff]
        %v1320 = vld [vmem:[#allocation11 + $0xa0] sm:$0xff]
        %v1321 = vld [vmem:[#allocation11 + $0xa8] sm:$0xff]
        %v1322 = vld [vmem:[#allocation11 + $0xb0] sm:$0xff]
        %v1323 = vld [vmem:[#allocation11 + $0xb8] sm:$0xff]
        %v1324 = vld [vmem:[#allocation11 + $0xc0] sm:$0xff]
        %v1325 = vld [vmem:[#allocation11 + $0xc8] sm:$0xff]
        %v1326 = vld [vmem:[#allocation11 + $0xd0] sm:$0xff]
        %v1327 = vld [vmem:[#allocation11 + $0xd8] sm:$0xff]
        %v1328 = vld [vmem:[#allocation11 + $0xe0] sm:$0xff]
        %v1329 = vld [vmem:[#allocation11 + $0xe8] sm:$0xff]
        %v1330 = vld [vmem:[#allocation11 + $0xf0] sm:$0xff]
        %v1331 = vld [vmem:[#allocation11 + $0xf8] sm:$0xff]
        %v1332 = vld [vmem:[#allocation2] sm:$0xff]
        %v1333 = vld [vmem:[#allocation2 + $0x8] sm:$0xff]
        %v1334 = vld [vmem:[#allocation2 + $0x10] sm:$0xff]
        %v1335 = vld [vmem:[#allocation2 + $0x18] sm:$0xff]
        %v1336 = vmul.f32 %v1332, 0.5
        %v1337 = vtanh.pop %v1336
        %v1338 = vmul.f32 %v1337, 0.5
        %v1339 = vadd.f32 %v1338, 0.5
        %v1340 = vmul.f32 %v1333, 0.5
        %v1341 = vtanh.pop %v1340
        %v1342 = vmul.f32 %v1341, 0.5
        %v1343 = vadd.f32 %v1342, 0.5
        %v1344 = vtanh.pop %v1334
        %v1345 = vmul.f32 %v1335, 0.5
        %v1346 = vtanh.pop %v1345
        %v1347 = vmul.f32 %v1346, 0.5
        %v1348 = vadd.f32 %v1347, 0.5
        %v1349 = vmul.f32 %v1343, 0.0
        %v1350 = vmul.f32 %v1339, %v1344
        %v1351 = vadd.f32 %v1349, %v1350
        %v1352 = vtanh.pop %v1351
        %v1353 = vmul.f32 %v1348, %v1352
        %v1354 = vld [vmem:[#allocation2 + $0x20] sm:$0xff]
        %v1355 = vld [vmem:[#allocation2 + $0x28] sm:$0xff]
        %v1356 = vld [vmem:[#allocation2 + $0x30] sm:$0xff]
        %v1357 = vld [vmem:[#allocation2 + $0x38] sm:$0xff]
        %v1358 = vpack.c.bf16 %v1353, %v1353
        %v1391 = vunpack.c.l.b16 %v1300
        %v1392 = vunpack.c.h.b16 %v1300
        %v1393 = vunpack.c.l.b16 %v1301
        %v1394 = vunpack.c.h.b16 %v1301
        %v1395 = vunpack.c.l.b16 %v1302
        %v1396 = vunpack.c.h.b16 %v1302
        %v1397 = vunpack.c.l.b16 %v1303
        %v1398 = vunpack.c.h.b16 %v1303
        %v1399 = vunpack.c.l.b16 %v1304
        %v1400 = vunpack.c.h.b16 %v1304
        %v1401 = vunpack.c.l.b16 %v1305
        %v1402 = vunpack.c.h.b16 %v1305
        %v1403 = vunpack.c.l.b16 %v1306
        %v1404 = vunpack.c.h.b16 %v1306
        %v1405 = vunpack.c.l.b16 %v1307
        %v1406 = vunpack.c.h.b16 %v1307
        %v1407 = vunpack.c.l.b16 %v1308
        %v1408 = vunpack.c.h.b16 %v1308
        %v1409 = vunpack.c.l.b16 %v1309
        %v1410 = vunpack.c.h.b16 %v1309
        %v1411 = vunpack.c.l.b16 %v1310
        %v1412 = vunpack.c.h.b16 %v1310
        %v1413 = vunpack.c.l.b16 %v1311
        %v1414 = vunpack.c.h.b16 %v1311
        %v1415 = vunpack.c.l.b16 %v1312
        %v1416 = vunpack.c.h.b16 %v1312
        %v1417 = vunpack.c.l.b16 %v1313
        %v1418 = vunpack.c.h.b16 %v1313
        %v1419 = vunpack.c.l.b16 %v1314
        %v1420 = vunpack.c.h.b16 %v1314
        %v1421 = vunpack.c.l.b16 %v1315
        %v1422 = vunpack.c.h.b16 %v1315
        %v1423 = vunpack.c.l.b16 %v1316
        %v1424 = vunpack.c.h.b16 %v1316
        %v1425 = vunpack.c.l.b16 %v1317
        %v1426 = vunpack.c.h.b16 %v1317
        %v1427 = vunpack.c.l.b16 %v1318
        %v1428 = vunpack.c.h.b16 %v1318
        %v1429 = vunpack.c.l.b16 %v1319
        %v1430 = vunpack.c.h.b16 %v1319
        %v1431 = vunpack.c.l.b16 %v1320
        %v1432 = vunpack.c.h.b16 %v1320
        %v1433 = vunpack.c.l.b16 %v1321
        %v1434 = vunpack.c.h.b16 %v1321
        %v1435 = vunpack.c.l.b16 %v1322
        %v1436 = vunpack.c.h.b16 %v1322
        %v1437 = vunpack.c.l.b16 %v1323
        %v1438 = vunpack.c.h.b16 %v1323
        %v1439 = vunpack.c.l.b16 %v1324
        %v1440 = vunpack.c.h.b16 %v1324
        %v1441 = vunpack.c.l.b16 %v1325
        %v1442 = vunpack.c.h.b16 %v1325
        %v1443 = vunpack.c.l.b16 %v1326
        %v1444 = vunpack.c.h.b16 %v1326
        %v1445 = vunpack.c.l.b16 %v1327
        %v1446 = vunpack.c.h.b16 %v1327
        %v1447 = vunpack.c.l.b16 %v1328
        %v1448 = vunpack.c.h.b16 %v1328
        %v1449 = vunpack.c.l.b16 %v1329
        %v1450 = vunpack.c.h.b16 %v1329
        %v1451 = vunpack.c.l.b16 %v1330
        %v1452 = vunpack.c.h.b16 %v1330
        %v1453 = vunpack.c.l.b16 %v1331
        %v1454 = vunpack.c.h.b16 %v1331
        %v1455 = vpack.c.b16 %v1395, %v1391
        %v1456 = vpack.c.b16 %v1396, %v1392
        %v1457 = vpack.c.b16 %v1397, %v1393
        %v1458 = vpack.c.b16 %v1398, %v1394
        %v1459 = vpack.c.b16 %v1403, %v1399
        %v1460 = vpack.c.b16 %v1404, %v1400
        %v1461 = vpack.c.b16 %v1405, %v1401
        %v1462 = vpack.c.b16 %v1406, %v1402
        %v1463 = vpack.c.b16 %v1411, %v1407
        %v1464 = vpack.c.b16 %v1412, %v1408
        %v1465 = vpack.c.b16 %v1413, %v1409
        %v1466 = vpack.c.b16 %v1414, %v1410
        %v1467 = vpack.c.b16 %v1419, %v1415
        %v1468 = vpack.c.b16 %v1420, %v1416
        %v1469 = vpack.c.b16 %v1421, %v1417
        %v1470 = vpack.c.b16 %v1422, %v1418
        %v1471 = vpack.c.b16 %v1427, %v1423
        %v1472 = vpack.c.b16 %v1428, %v1424
        %v1473 = vpack.c.b16 %v1429, %v1425
        %v1474 = vpack.c.b16 %v1430, %v1426
        %v1475 = vpack.c.b16 %v1435, %v1431
        %v1476 = vpack.c.b16 %v1436, %v1432
        %v1477 = vpack.c.b16 %v1437, %v1433
        %v1478 = vpack.c.b16 %v1438, %v1434
        %v1479 = vpack.c.b16 %v1443, %v1439
        %v1480 = vpack.c.b16 %v1444, %v1440
        %v1481 = vpack.c.b16 %v1445, %v1441
        %v1482 = vpack.c.b16 %v1446, %v1442
        %v1483 = vpack.c.b16 %v1451, %v1447
        %v1484 = vpack.c.b16 %v1452, %v1448
        %v1485 = vpack.c.b16 %v1453, %v1449
        %v1486 = vpack.c.b16 %v1454, %v1450
        %1519 = vmatprep.subr.bf16.mxu0 %v1456
        %1520 = vmatpush1.bf16.msra.mxu0 %v1455
        %1521 = vmatprep.subr.bf16.mxu0 %v1460
        %1522 = vmatpush1.bf16.msra.mxu0 %v1459
        %1523 = vmatprep.subr.bf16.mxu0 %v1464
        %1524 = vmatpush1.bf16.msra.mxu0 %v1463
        %1525 = vmatprep.subr.bf16.mxu0 %v1468
        %1526 = vmatpush1.bf16.msra.mxu0 %v1467
        %1527 = vmatprep.subr.bf16.mxu0 %v1472
        %1528 = vmatpush1.bf16.msra.mxu0 %v1471
        %1529 = vmatprep.subr.bf16.mxu0 %v1476
        %1530 = vmatpush1.bf16.msra.mxu0 %v1475
        %1531 = vmatprep.subr.bf16.mxu0 %v1480
        %1532 = vmatpush1.bf16.msra.mxu0 %v1479
        %1533 = vmatprep.subr.bf16.mxu0 %v1484
        %1534 = vmatpush1.bf16.msra.mxu0 %v1483
        %1535 = vmatprep.subr.bf16.mxu0 0
        %1536 = vmatpush1.bf16.msra.mxu0 0
        %1537 = vmatprep.subr.bf16.mxu0 0
        %1538 = vmatpush1.bf16.msra.mxu0 0
        %1539 = vmatprep.subr.bf16.mxu0 0
        %1540 = vmatpush1.bf16.msra.mxu0 0
        %1541 = vmatprep.subr.bf16.mxu0 0
        %1542 = vmatpush1.bf16.msra.mxu0 0
        %1543 = vmatprep.subr.bf16.mxu0 0
        %1544 = vmatpush1.bf16.msra.mxu0 0
        %1545 = vmatprep.subr.bf16.mxu0 0
        %1546 = vmatpush1.bf16.msra.mxu0 0
        %1547 = vmatprep.subr.bf16.mxu0 0
        %1548 = vmatpush1.bf16.msra.mxu0 0
        %1549 = vmatprep.subr.bf16.mxu0 0
        %1550 = vmatpush1.bf16.msra.mxu0 0
        %1551 = vmatprep.mubr.bf16.mxu0 0
        %1552 = vmatmul.mubr.bf16.gmra.mrb[0].mxu0 %v1358
        %v1553 = vpop.f32.mrb[0].mxu0
        %v1554 = vadd.f32 0.0, %v1553
        %v1555 = vpop.f32.mrb[0].mxu0
        %v1556 = vadd.f32 0.0, %v1555
        %v1557 = vpop.f32.mrb[0].mxu0
        %v1558 = vpop.f32.mrb[0].mxu0
        %1559 = vdwg.mxu0
        %1560 = vmatprep.subr.bf16.mxu0 %v1458
        %1561 = vmatpush1.bf16.msra.mxu0 %v1457
        %1562 = vmatprep.subr.bf16.mxu0 %v1462
        %1563 = vmatpush1.bf16.msra.mxu0 %v1461
        %1564 = vmatprep.subr.bf16.mxu0 %v1466
        %1565 = vmatpush1.bf16.msra.mxu0 %v1465
        %1566 = vmatprep.subr.bf16.mxu0 %v1470
        %1567 = vmatpush1.bf16.msra.mxu0 %v1469
        %1568 = vmatprep.subr.bf16.mxu0 %v1474
        %1569 = vmatpush1.bf16.msra.mxu0 %v1473
        %1570 = vmatprep.subr.bf16.mxu0 %v1478
        %1571 = vmatpush1.bf16.msra.mxu0 %v1477
        %1572 = vmatprep.subr.bf16.mxu0 %v1482
        %1573 = vmatpush1.bf16.msra.mxu0 %v1481
        %1574 = vmatprep.subr.bf16.mxu0 %v1486
        %1575 = vmatpush1.bf16.msra.mxu0 %v1485
        %1576 = vmatprep.subr.bf16.mxu0 0
        %1577 = vmatpush1.bf16.msra.mxu0 0
        %1578 = vmatprep.subr.bf16.mxu0 0
        %1579 = vmatpush1.bf16.msra.mxu0 0
        %1580 = vmatprep.subr.bf16.mxu0 0
        %1581 = vmatpush1.bf16.msra.mxu0 0
        %1582 = vmatprep.subr.bf16.mxu0 0
        %1583 = vmatpush1.bf16.msra.mxu0 0
        %1584 = vmatprep.subr.bf16.mxu0 0
        %1585 = vmatpush1.bf16.msra.mxu0 0
        %1586 = vmatprep.subr.bf16.mxu0 0
        %1587 = vmatpush1.bf16.msra.mxu0 0
        %1588 = vmatprep.subr.bf16.mxu0 0
        %1589 = vmatpush1.bf16.msra.mxu0 0
        %1590 = vmatprep.subr.bf16.mxu0 0
        %1591 = vmatpush1.bf16.msra.mxu0 0
        %1592 = vmatprep.mubr.bf16.mxu0 0
        %1593 = vmatmul.mubr.bf16.gmra.mrb[0].mxu0 %v1358
        %v1594 = vpop.f32.mrb[0].mxu0
        %v1595 = vadd.f32 0.0, %v1594
        %v1596 = vpop.f32.mrb[0].mxu0
        %v1597 = vadd.f32 0.0, %v1596
        %v1598 = vpop.f32.mrb[0].mxu0
        %v1599 = vpop.f32.mrb[0].mxu0
        %1600 = vdwg.mxu0
        %v1601 = vadd.f32 %v1354, %v1554
        %v1602 = vadd.f32 %v1355, %v1556
        %v1603 = vadd.f32 %v1356, %v1595
        %v1604 = vadd.f32 %v1357, %v1597
        %v1605 = vmul.f32 %v1601, 0.5
        %v1606 = vtanh.pop %v1605
        %v1607 = vmul.f32 %v1606, 0.5
        %v1608 = vadd.f32 %v1607, 0.5
        %v1609 = vmul.f32 %v1602, 0.5
        %v1610 = vtanh.pop %v1609
        %v1611 = vmul.f32 %v1610, 0.5
        %v1612 = vadd.f32 %v1611, 0.5
        %v1613 = vtanh.pop %v1603
        %v1614 = vmul.f32 %v1604, 0.5
        %v1615 = vtanh.pop %v1614
        %v1616 = vmul.f32 %v1615, 0.5
        %v1617 = vadd.f32 %v1616, 0.5
        %v1618 = vmul.f32 %v1612, %v1351
        %v1619 = vmul.f32 %v1608, %v1613
        %v1620 = vadd.f32 %v1618, %v1619
        %v1621 = vtanh.pop %v1620
        %v1622 = vmul.f32 %v1617, %v1621
        %v1623 = vld [vmem:[#allocation2 + $0x40] sm:$0xff]
        %v1624 = vld [vmem:[#allocation2 + $0x48] sm:$0xff]
        %v1625 = vld [vmem:[#allocation2 + $0x50] sm:$0xff]
        %v1626 = vld [vmem:[#allocation2 + $0x58] sm:$0xff]
        %v1627 = vpack.c.bf16 %v1622, %v1622
        %1628 = vmatprep.subr.bf16.mxu0 %v1456
        %1629 = vmatpush1.bf16.msra.mxu0 %v1455
        %1630 = vmatprep.subr.bf16.mxu0 %v1460
        %1631 = vmatpush1.bf16.msra.mxu0 %v1459
        %1632 = vmatprep.subr.bf16.mxu0 %v1464
        %1633 = vmatpush1.bf16.msra.mxu0 %v1463
        %1634 = vmatprep.subr.bf16.mxu0 %v1468
        %1635 = vmatpush1.bf16.msra.mxu0 %v1467
        %1636 = vmatprep.subr.bf16.mxu0 %v1472
        %1637 = vmatpush1.bf16.msra.mxu0 %v1471
        %1638 = vmatprep.subr.bf16.mxu0 %v1476
        %1639 = vmatpush1.bf16.msra.mxu0 %v1475
        %1640 = vmatprep.subr.bf16.mxu0 %v1480
        %1641 = vmatpush1.bf16.msra.mxu0 %v1479
        %1642 = vmatprep.subr.bf16.mxu0 %v1484
        %1643 = vmatpush1.bf16.msra.mxu0 %v1483
        %1644 = vmatprep.subr.bf16.mxu0 0
        %1645 = vmatpush1.bf16.msra.mxu0 0
        %1646 = vmatprep.subr.bf16.mxu0 0
        %1647 = vmatpush1.bf16.msra.mxu0 0
        %1648 = vmatprep.subr.bf16.mxu0 0
        %1649 = vmatpush1.bf16.msra.mxu0 0
        %1650 = vmatprep.subr.bf16.mxu0 0
        %1651 = vmatpush1.bf16.msra.mxu0 0
        %1652 = vmatprep.subr.bf16.mxu0 0
        %1653 = vmatpush1.bf16.msra.mxu0 0
        %1654 = vmatprep.subr.bf16.mxu0 0
        %1655 = vmatpush1.bf16.msra.mxu0 0
        %1656 = vmatprep.subr.bf16.mxu0 0
        %1657 = vmatpush1.bf16.msra.mxu0 0
        %1658 = vmatprep.subr.bf16.mxu0 0
        %1659 = vmatpush1.bf16.msra.mxu0 0
        %1660 = vmatprep.mubr.bf16.mxu0 0
        %1661 = vmatmul.mubr.bf16.gmra.mrb[0].mxu0 %v1627
        %v1662 = vpop.f32.mrb[0].mxu0
        %v1663 = vadd.f32 0.0, %v1662
        %v1664 = vpop.f32.mrb[0].mxu0
        %v1665 = vadd.f32 0.0, %v1664
        %v1666 = vpop.f32.mrb[0].mxu0
        %v1667 = vpop.f32.mrb[0].mxu0
        %1668 = vdwg.mxu0
        %1669 = vmatprep.subr.bf16.mxu0 %v1458
        %1670 = vmatpush1.bf16.msra.mxu0 %v1457
        %1671 = vmatprep.subr.bf16.mxu0 %v1462
        %1672 = vmatpush1.bf16.msra.mxu0 %v1461
        %1673 = vmatprep.subr.bf16.mxu0 %v1466
        %1674 = vmatpush1.bf16.msra.mxu0 %v1465
        %1675 = vmatprep.subr.bf16.mxu0 %v1470
        %1676 = vmatpush1.bf16.msra.mxu0 %v1469
        %1677 = vmatprep.subr.bf16.mxu0 %v1474
        %1678 = vmatpush1.bf16.msra.mxu0 %v1473
        %1679 = vmatprep.subr.bf16.mxu0 %v1478
        %1680 = vmatpush1.bf16.msra.mxu0 %v1477
        %1681 = vmatprep.subr.bf16.mxu0 %v1482
        %1682 = vmatpush1.bf16.msra.mxu0 %v1481
        %1683 = vmatprep.subr.bf16.mxu0 %v1486
        %1684 = vmatpush1.bf16.msra.mxu0 %v1485
        %1685 = vmatprep.subr.bf16.mxu0 0
        %1686 = vmatpush1.bf16.msra.mxu0 0
        %1687 = vmatprep.subr.bf16.mxu0 0
        %1688 = vmatpush1.bf16.msra.mxu0 0
        %1689 = vmatprep.subr.bf16.mxu0 0
        %1690 = vmatpush1.bf16.msra.mxu0 0
        %1691 = vmatprep.subr.bf16.mxu0 0
        %1692 = vmatpush1.bf16.msra.mxu0 0
        %1693 = vmatprep.subr.bf16.mxu0 0
        %1694 = vmatpush1.bf16.msra.mxu0 0
        %1695 = vmatprep.subr.bf16.mxu0 0
        %1696 = vmatpush1.bf16.msra.mxu0 0
        %1697 = vmatprep.subr.bf16.mxu0 0
        %1698 = vmatpush1.bf16.msra.mxu0 0
        %1699 = vmatprep.subr.bf16.mxu0 0
        %1700 = vmatpush1.bf16.msra.mxu0 0
        %1701 = vmatprep.mubr.bf16.mxu0 0
        %1702 = vmatmul.mubr.bf16.gmra.mrb[0].mxu0 %v1627
        %v1703 = vpop.f32.mrb[0].mxu0
        %v1704 = vadd.f32 0.0, %v1703
        %v1705 = vpop.f32.mrb[0].mxu0
        %v1706 = vadd.f32 0.0, %v1705
        %v1707 = vpop.f32.mrb[0].mxu0
        %v1708 = vpop.f32.mrb[0].mxu0
        %1709 = vdwg.mxu0
        %v1710 = vadd.f32 %v1623, %v1663
        %v1711 = vadd.f32 %v1624, %v1665
        %v1712 = vadd.f32 %v1625, %v1704
        %v1713 = vadd.f32 %v1626, %v1706
        %v1714 = vmul.f32 %v1710, 0.5
        %v1715 = vtanh.pop %v1714
        %v1716 = vmul.f32 %v1715, 0.5
        %v1717 = vadd.f32 %v1716, 0.5
        %v1718 = vmul.f32 %v1711, 0.5
        %v1719 = vtanh.pop %v1718
        %v1720 = vmul.f32 %v1719, 0.5
        %v1721 = vadd.f32 %v1720, 0.5
        %v1722 = vtanh.pop %v1712
        %v1723 = vmul.f32 %v1713, 0.5
        %v1724 = vtanh.pop %v1723
        %v1725 = vmul.f32 %v1724, 0.5
        %v1726 = vadd.f32 %v1725, 0.5
        %v1727 = vmul.f32 %v1721, %v1620
        %v1728 = vmul.f32 %v1717, %v1722
        %v1729 = vadd.f32 %v1727, %v1728
        %v1730 = vtanh.pop %v1729
        %v1731 = vmul.f32 %v1726, %v1730
        %v1732 = vld [vmem:[#allocation2 + $0x60] sm:$0xff]
        %v1733 = vld [vmem:[#allocation2 + $0x68] sm:$0xff]
        %v1734 = vld [vmem:[#allocation2 + $0x70] sm:$0xff]
        %v1735 = vld [vmem:[#allocation2 + $0x78] sm:$0xff]
        %v1736 = vpack.c.bf16 %v1731, %v1731
        %1737 = vmatprep.subr.bf16.mxu0 %v1456
        %1738 = vmatpush1.bf16.msra.mxu0 %v1455
        %1739 = vmatprep.subr.bf16.mxu0 %v1460
        %1740 = vmatpush1.bf16.msra.mxu0 %v1459
        %1741 = vmatprep.subr.bf16.mxu0 %v1464
        %1742 = vmatpush1.bf16.msra.mxu0 %v1463
        %1743 = vmatprep.subr.bf16.mxu0 %v1468
        %1744 = vmatpush1.bf16.msra.mxu0 %v1467
        %1745 = vmatprep.subr.bf16.mxu0 %v1472
        %1746 = vmatpush1.bf16.msra.mxu0 %v1471
        %1747 = vmatprep.subr.bf16.mxu0 %v1476
        %1748 = vmatpush1.bf16.msra.mxu0 %v1475
        %1749 = vmatprep.subr.bf16.mxu0 %v1480
        %1750 = vmatpush1.bf16.msra.mxu0 %v1479
        %1751 = vmatprep.subr.bf16.mxu0 %v1484
        %1752 = vmatpush1.bf16.msra.mxu0 %v1483
        %1753 = vmatprep.subr.bf16.mxu0 0
        %1754 = vmatpush1.bf16.msra.mxu0 0
        %1755 = vmatprep.subr.bf16.mxu0 0
        %1756 = vmatpush1.bf16.msra.mxu0 0
        %1757 = vmatprep.subr.bf16.mxu0 0
        %1758 = vmatpush1.bf16.msra.mxu0 0
        %1759 = vmatprep.subr.bf16.mxu0 0
        %1760 = vmatpush1.bf16.msra.mxu0 0
        %1761 = vmatprep.subr.bf16.mxu0 0
        %1762 = vmatpush1.bf16.msra.mxu0 0
        %1763 = vmatprep.subr.bf16.mxu0 0
        %1764 = vmatpush1.bf16.msra.mxu0 0
        %1765 = vmatprep.subr.bf16.mxu0 0
        %1766 = vmatpush1.bf16.msra.mxu0 0
        %1767 = vmatprep.subr.bf16.mxu0 0
        %1768 = vmatpush1.bf16.msra.mxu0 0
        %1769 = vmatprep.mubr.bf16.mxu0 0
        %1770 = vmatmul.mubr.bf16.gmra.mrb[0].mxu0 %v1736
        %v1771 = vpop.f32.mrb[0].mxu0
        %v1772 = vadd.f32 0.0, %v1771
        %v1773 = vpop.f32.mrb[0].mxu0
        %v1774 = vadd.f32 0.0, %v1773
        %v1775 = vpop.f32.mrb[0].mxu0
        %v1776 = vpop.f32.mrb[0].mxu0
        %1777 = vdwg.mxu0
        %1778 = vmatprep.subr.bf16.mxu0 %v1458
        %1779 = vmatpush1.bf16.msra.mxu0 %v1457
        %1780 = vmatprep.subr.bf16.mxu0 %v1462
        %1781 = vmatpush1.bf16.msra.mxu0 %v1461
        %1782 = vmatprep.subr.bf16.mxu0 %v1466
        %1783 = vmatpush1.bf16.msra.mxu0 %v1465
        %1784 = vmatprep.subr.bf16.mxu0 %v1470
        %1785 = vmatpush1.bf16.msra.mxu0 %v1469
        %1786 = vmatprep.subr.bf16.mxu0 %v1474
        %1787 = vmatpush1.bf16.msra.mxu0 %v1473
        %1788 = vmatprep.subr.bf16.mxu0 %v1478
        %1789 = vmatpush1.bf16.msra.mxu0 %v1477
        %1790 = vmatprep.subr.bf16.mxu0 %v1482
        %1791 = vmatpush1.bf16.msra.mxu0 %v1481
        %1792 = vmatprep.subr.bf16.mxu0 %v1486
        %1793 = vmatpush1.bf16.msra.mxu0 %v1485
        %1794 = vmatprep.subr.bf16.mxu0 0
        %1795 = vmatpush1.bf16.msra.mxu0 0
        %1796 = vmatprep.subr.bf16.mxu0 0
        %1797 = vmatpush1.bf16.msra.mxu0 0
        %1798 = vmatprep.subr.bf16.mxu0 0
        %1799 = vmatpush1.bf16.msra.mxu0 0
        %1800 = vmatprep.subr.bf16.mxu0 0
        %1801 = vmatpush1.bf16.msra.mxu0 0
        %1802 = vmatprep.subr.bf16.mxu0 0
        %1803 = vmatpush1.bf16.msra.mxu0 0
        %1804 = vmatprep.subr.bf16.mxu0 0
        %1805 = vmatpush1.bf16.msra.mxu0 0
        %1806 = vmatprep.subr.bf16.mxu0 0
        %1807 = vmatpush1.bf16.msra.mxu0 0
        %1808 = vmatprep.subr.bf16.mxu0 0
        %1809 = vmatpush1.bf16.msra.mxu0 0
        %1810 = vmatprep.mubr.bf16.mxu0 0
        %1811 = vmatmul.mubr.bf16.gmra.mrb[0].mxu0 %v1736
        %v1812 = vpop.f32.mrb[0].mxu0
        %v1813 = vadd.f32 0.0, %v1812
        %v1814 = vpop.f32.mrb[0].mxu0
        %v1815 = vadd.f32 0.0, %v1814
        %v1816 = vpop.f32.mrb[0].mxu0
        %v1817 = vpop.f32.mrb[0].mxu0
        %1818 = vdwg.mxu0
        %v1819 = vadd.f32 %v1732, %v1772
        %v1820 = vadd.f32 %v1733, %v1774
        %v1821 = vadd.f32 %v1734, %v1813
        %v1822 = vadd.f32 %v1735, %v1815
        %v1823 = vmul.f32 %v1819, 0.5
        %v1824 = vtanh.pop %v1823
        %v1825 = vmul.f32 %v1824, 0.5
        %v1826 = vadd.f32 %v1825, 0.5
        %v1827 = vmul.f32 %v1820, 0.5
        %v1828 = vtanh.pop %v1827
        %v1829 = vmul.f32 %v1828, 0.5
        %v1830 = vadd.f32 %v1829, 0.5
        %v1831 = vtanh.pop %v1821
        %v1832 = vmul.f32 %v1822, 0.5
        %v1833 = vtanh.pop %v1832
        %v1834 = vmul.f32 %v1833, 0.5
        %v1835 = vadd.f32 %v1834, 0.5
        %v1836 = vmul.f32 %v1830, %v1729
        %v1837 = vmul.f32 %v1826, %v1831
        %v1838 = vadd.f32 %v1836, %v1837
        %v1839 = vtanh.pop %v1838
        %v1840 = vmul.f32 %v1835, %v1839
        %v1841 = vld [vmem:[#allocation2 + $0x80] sm:$0xff]
        %v1842 = vld [vmem:[#allocation2 + $0x88] sm:$0xff]
        %v1843 = vld [vmem:[#allocation2 + $0x90] sm:$0xff]
        %v1844 = vld [vmem:[#allocation2 + $0x98] sm:$0xff]
        %v1845 = vpack.c.bf16 %v1840, %v1840
        %1846 = vmatprep.subr.bf16.mxu0 %v1456
        %1847 = vmatpush1.bf16.msra.mxu0 %v1455
        %1848 = vmatprep.subr.bf16.mxu0 %v1460
        %1849 = vmatpush1.bf16.msra.mxu0 %v1459
        %1850 = vmatprep.subr.bf16.mxu0 %v1464
        %1851 = vmatpush1.bf16.msra.mxu0 %v1463
        %1852 = vmatprep.subr.bf16.mxu0 %v1468
        %1853 = vmatpush1.bf16.msra.mxu0 %v1467
        %1854 = vmatprep.subr.bf16.mxu0 %v1472
        %1855 = vmatpush1.bf16.msra.mxu0 %v1471
        %1856 = vmatprep.subr.bf16.mxu0 %v1476
        %1857 = vmatpush1.bf16.msra.mxu0 %v1475
        %1858 = vmatprep.subr.bf16.mxu0 %v1480
        %1859 = vmatpush1.bf16.msra.mxu0 %v1479
        %1860 = vmatprep.subr.bf16.mxu0 %v1484
        %1861 = vmatpush1.bf16.msra.mxu0 %v1483
        %1862 = vmatprep.subr.bf16.mxu0 0
        %1863 = vmatpush1.bf16.msra.mxu0 0
        %1864 = vmatprep.subr.bf16.mxu0 0
        %1865 = vmatpush1.bf16.msra.mxu0 0
        %1866 = vmatprep.subr.bf16.mxu0 0
        %1867 = vmatpush1.bf16.msra.mxu0 0
        %1868 = vmatprep.subr.bf16.mxu0 0
        %1869 = vmatpush1.bf16.msra.mxu0 0
        %1870 = vmatprep.subr.bf16.mxu0 0
        %1871 = vmatpush1.bf16.msra.mxu0 0
        %1872 = vmatprep.subr.bf16.mxu0 0
        %1873 = vmatpush1.bf16.msra.mxu0 0
        %1874 = vmatprep.subr.bf16.mxu0 0
        %1875 = vmatpush1.bf16.msra.mxu0 0
        %1876 = vmatprep.subr.bf16.mxu0 0
        %1877 = vmatpush1.bf16.msra.mxu0 0
        %1878 = vmatprep.mubr.bf16.mxu0 0
        %1879 = vmatmul.mubr.bf16.gmra.mrb[0].mxu0 %v1845
        %v1880 = vpop.f32.mrb[0].mxu0
        %v1881 = vadd.f32 0.0, %v1880
        %v1882 = vpop.f32.mrb[0].mxu0
        %v1883 = vadd.f32 0.0, %v1882
        %v1884 = vpop.f32.mrb[0].mxu0
        %v1885 = vpop.f32.mrb[0].mxu0
        %1886 = vdwg.mxu0
        %1887 = vmatprep.subr.bf16.mxu0 %v1458
        %1888 = vmatpush1.bf16.msra.mxu0 %v1457
        %1889 = vmatprep.subr.bf16.mxu0 %v1462
        %1890 = vmatpush1.bf16.msra.mxu0 %v1461
        %1891 = vmatprep.subr.bf16.mxu0 %v1466
        %1892 = vmatpush1.bf16.msra.mxu0 %v1465
        %1893 = vmatprep.subr.bf16.mxu0 %v1470
        %1894 = vmatpush1.bf16.msra.mxu0 %v1469
        %1895 = vmatprep.subr.bf16.mxu0 %v1474
        %1896 = vmatpush1.bf16.msra.mxu0 %v1473
        %1897 = vmatprep.subr.bf16.mxu0 %v1478
        %1898 = vmatpush1.bf16.msra.mxu0 %v1477
        %1899 = vmatprep.subr.bf16.mxu0 %v1482
        %1900 = vmatpush1.bf16.msra.mxu0 %v1481
        %1901 = vmatprep.subr.bf16.mxu0 %v1486
        %1902 = vmatpush1.bf16.msra.mxu0 %v1485
        %1903 = vmatprep.subr.bf16.mxu0 0
        %1904 = vmatpush1.bf16.msra.mxu0 0
        %1905 = vmatprep.subr.bf16.mxu0 0
        %1906 = vmatpush1.bf16.msra.mxu0 0
        %1907 = vmatprep.subr.bf16.mxu0 0
        %1908 = vmatpush1.bf16.msra.mxu0 0
        %1909 = vmatprep.subr.bf16.mxu0 0
        %1910 = vmatpush1.bf16.msra.mxu0 0
        %1911 = vmatprep.subr.bf16.mxu0 0
        %1912 = vmatpush1.bf16.msra.mxu0 0
        %1913 = vmatprep.subr.bf16.mxu0 0
        %1914 = vmatpush1.bf16.msra.mxu0 0
        %1915 = vmatprep.subr.bf16.mxu0 0
        %1916 = vmatpush1.bf16.msra.mxu0 0
        %1917 = vmatprep.subr.bf16.mxu0 0
        %1918 = vmatpush1.bf16.msra.mxu0 0
        %1919 = vmatprep.mubr.bf16.mxu0 0
        %1920 = vmatmul.mubr.bf16.gmra.mrb[0].mxu0 %v1845
        %v1921 = vpop.f32.mrb[0].mxu0
        %v1922 = vadd.f32 0.0, %v1921
        %v1923 = vpop.f32.mrb[0].mxu0
        %v1924 = vadd.f32 0.0, %v1923
        %v1925 = vpop.f32.mrb[0].mxu0
        %v1926 = vpop.f32.mrb[0].mxu0
        %1927 = vdwg.mxu0
        %v1928 = vadd.f32 %v1841, %v1881
        %v1929 = vadd.f32 %v1842, %v1883
        %v1930 = vadd.f32 %v1843, %v1922
        %v1931 = vadd.f32 %v1844, %v1924
        %v1932 = vmul.f32 %v1928, 0.5
        %v1933 = vtanh.pop %v1932
        %v1934 = vmul.f32 %v1933, 0.5
        %v1935 = vadd.f32 %v1934, 0.5
        %v1936 = vmul.f32 %v1929, 0.5
        %v1937 = vtanh.pop %v1936
        %v1938 = vmul.f32 %v1937, 0.5
        %v1939 = vadd.f32 %v1938, 0.5
        %v1940 = vtanh.pop %v1930
        %v1941 = vmul.f32 %v1931, 0.5
        %v1942 = vtanh.pop %v1941
        %v1943 = vmul.f32 %v1942, 0.5
        %v1944 = vadd.f32 %v1943, 0.5
        %v1945 = vmul.f32 %v1939, %v1838
        %v1946 = vmul.f32 %v1935, %v1940
        %v1947 = vadd.f32 %v1945, %v1946
        %v1948 = vtanh.pop %v1947
        %v1949 = vmul.f32 %v1944, %v1948
        %v1950 = vld [vmem:[#allocation2 + $0xa0] sm:$0xff]
        %v1951 = vld [vmem:[#allocation2 + $0xa8] sm:$0xff]
        %v1952 = vld [vmem:[#allocation2 + $0xb0] sm:$0xff]
        %v1953 = vld [vmem:[#allocation2 + $0xb8] sm:$0xff]
        %v1954 = vpack.c.bf16 %v1949, %v1949
        %1955 = vmatprep.subr.bf16.mxu0 %v1456
        %1956 = vmatpush1.bf16.msra.mxu0 %v1455
        %1957 = vmatprep.subr.bf16.mxu0 %v1460
        %1958 = vmatpush1.bf16.msra.mxu0 %v1459
        %1959 = vmatprep.subr.bf16.mxu0 %v1464
        %1960 = vmatpush1.bf16.msra.mxu0 %v1463
        %1961 = vmatprep.subr.bf16.mxu0 %v1468
        %1962 = vmatpush1.bf16.msra.mxu0 %v1467
        %1963 = vmatprep.subr.bf16.mxu0 %v1472
        %1964 = vmatpush1.bf16.msra.mxu0 %v1471
        %1965 = vmatprep.subr.bf16.mxu0 %v1476
        %1966 = vmatpush1.bf16.msra.mxu0 %v1475
        %1967 = vmatprep.subr.bf16.mxu0 %v1480
        %1968 = vmatpush1.bf16.msra.mxu0 %v1479
        %1969 = vmatprep.subr.bf16.mxu0 %v1484
        %1970 = vmatpush1.bf16.msra.mxu0 %v1483
        %1971 = vmatprep.subr.bf16.mxu0 0
        %1972 = vmatpush1.bf16.msra.mxu0 0
        %1973 = vmatprep.subr.bf16.mxu0 0
        %1974 = vmatpush1.bf16.msra.mxu0 0
        %1975 = vmatprep.subr.bf16.mxu0 0
        %1976 = vmatpush1.bf16.msra.mxu0 0
        %1977 = vmatprep.subr.bf16.mxu0 0
        %1978 = vmatpush1.bf16.msra.mxu0 0
        %1979 = vmatprep.subr.bf16.mxu0 0
        %1980 = vmatpush1.bf16.msra.mxu0 0
        %1981 = vmatprep.subr.bf16.mxu0 0
        %1982 = vmatpush1.bf16.msra.mxu0 0
        %1983 = vmatprep.subr.bf16.mxu0 0
        %1984 = vmatpush1.bf16.msra.mxu0 0
        %1985 = vmatprep.subr.bf16.mxu0 0
        %1986 = vmatpush1.bf16.msra.mxu0 0
        %1987 = vmatprep.mubr.bf16.mxu0 0
        %1988 = vmatmul.mubr.bf16.gmra.mrb[0].mxu0 %v1954
        %v1989 = vpop.f32.mrb[0].mxu0
        %v1990 = vadd.f32 0.0, %v1989
        %v1991 = vpop.f32.mrb[0].mxu0
        %v1992 = vadd.f32 0.0, %v1991
        %v1993 = vpop.f32.mrb[0].mxu0
        %v1994 = vpop.f32.mrb[0].mxu0
        %1995 = vdwg.mxu0
        %1996 = vmatprep.subr.bf16.mxu0 %v1458
        %1997 = vmatpush1.bf16.msra.mxu0 %v1457
        %1998 = vmatprep.subr.bf16.mxu0 %v1462
        %1999 = vmatpush1.bf16.msra.mxu0 %v1461
        %2000 = vmatprep.subr.bf16.mxu0 %v1466
        %2001 = vmatpush1.bf16.msra.mxu0 %v1465
        %2002 = vmatprep.subr.bf16.mxu0 %v1470
        %2003 = vmatpush1.bf16.msra.mxu0 %v1469
        %2004 = vmatprep.subr.bf16.mxu0 %v1474
        %2005 = vmatpush1.bf16.msra.mxu0 %v1473
        %2006 = vmatprep.subr.bf16.mxu0 %v1478
        %2007 = vmatpush1.bf16.msra.mxu0 %v1477
        %2008 = vmatprep.subr.bf16.mxu0 %v1482
        %2009 = vmatpush1.bf16.msra.mxu0 %v1481
        %2010 = vmatprep.subr.bf16.mxu0 %v1486
        %2011 = vmatpush1.bf16.msra.mxu0 %v1485
        %2012 = vmatprep.subr.bf16.mxu0 0
        %2013 = vmatpush1.bf16.msra.mxu0 0
        %2014 = vmatprep.subr.bf16.mxu0 0
        %2015 = vmatpush1.bf16.msra.mxu0 0
        %2016 = vmatprep.subr.bf16.mxu0 0
        %2017 = vmatpush1.bf16.msra.mxu0 0
        %2018 = vmatprep.subr.bf16.mxu0 0
        %2019 = vmatpush1.bf16.msra.mxu0 0
        %2020 = vmatprep.subr.bf16.mxu0 0
        %2021 = vmatpush1.bf16.msra.mxu0 0
        %2022 = vmatprep.subr.bf16.mxu0 0
        %2023 = vmatpush1.bf16.msra.mxu0 0
        %2024 = vmatprep.subr.bf16.mxu0 0
        %2025 = vmatpush1.bf16.msra.mxu0 0
        %2026 = vmatprep.subr.bf16.mxu0 0
        %2027 = vmatpush1.bf16.msra.mxu0 0
        %2028 = vmatprep.mubr.bf16.mxu0 0
        %2029 = vmatmul.mubr.bf16.gmra.mrb[0].mxu0 %v1954
        %v2030 = vpop.f32.mrb[0].mxu0
        %v2031 = vadd.f32 0.0, %v2030
        %v2032 = vpop.f32.mrb[0].mxu0
        %v2033 = vadd.f32 0.0, %v2032
        %v2034 = vpop.f32.mrb[0].mxu0
        %v2035 = vpop.f32.mrb[0].mxu0
        %2036 = vdwg.mxu0
        %v2037 = vadd.f32 %v1950, %v1990
        %v2038 = vadd.f32 %v1951, %v1992
        %v2039 = vadd.f32 %v1952, %v2031
        %v2040 = vadd.f32 %v1953, %v2033
        %v2041 = vmul.f32 %v2037, 0.5
        %v2042 = vtanh.pop %v2041
        %v2043 = vmul.f32 %v2042, 0.5
        %v2044 = vadd.f32 %v2043, 0.5
        %v2045 = vmul.f32 %v2038, 0.5
        %v2046 = vtanh.pop %v2045
        %v2047 = vmul.f32 %v2046, 0.5
        %v2048 = vadd.f32 %v2047, 0.5
        %v2049 = vtanh.pop %v2039
        %v2050 = vmul.f32 %v2040, 0.5
        %v2051 = vtanh.pop %v2050
        %v2052 = vmul.f32 %v2051, 0.5
        %v2053 = vadd.f32 %v2052, 0.5
        %v2054 = vmul.f32 %v2048, %v1947
        %v2055 = vmul.f32 %v2044, %v2049
        %v2056 = vadd.f32 %v2054, %v2055
        %v2057 = vtanh.pop %v2056
        %v2058 = vmul.f32 %v2053, %v2057
        %v2059 = vld [vmem:[#allocation2 + $0xc0] sm:$0xff]
        %v2060 = vld [vmem:[#allocation2 + $0xc8] sm:$0xff]
        %v2061 = vld [vmem:[#allocation2 + $0xd0] sm:$0xff]
        %v2062 = vld [vmem:[#allocation2 + $0xd8] sm:$0xff]
        %v2063 = vpack.c.bf16 %v2058, %v2058
        %2064 = vmatprep.subr.bf16.mxu0 %v1456
        %2065 = vmatpush1.bf16.msra.mxu0 %v1455
        %2066 = vmatprep.subr.bf16.mxu0 %v1460
        %2067 = vmatpush1.bf16.msra.mxu0 %v1459
        %2068 = vmatprep.subr.bf16.mxu0 %v1464
        %2069 = vmatpush1.bf16.msra.mxu0 %v1463
        %2070 = vmatprep.subr.bf16.mxu0 %v1468
        %2071 = vmatpush1.bf16.msra.mxu0 %v1467
        %2072 = vmatprep.subr.bf16.mxu0 %v1472
        %2073 = vmatpush1.bf16.msra.mxu0 %v1471
        %2074 = vmatprep.subr.bf16.mxu0 %v1476
        %2075 = vmatpush1.bf16.msra.mxu0 %v1475
        %2076 = vmatprep.subr.bf16.mxu0 %v1480
        %2077 = vmatpush1.bf16.msra.mxu0 %v1479
        %2078 = vmatprep.subr.bf16.mxu0 %v1484
        %2079 = vmatpush1.bf16.msra.mxu0 %v1483
        %2080 = vmatprep.subr.bf16.mxu0 0
        %2081 = vmatpush1.bf16.msra.mxu0 0
        %2082 = vmatprep.subr.bf16.mxu0 0
        %2083 = vmatpush1.bf16.msra.mxu0 0
        %2084 = vmatprep.subr.bf16.mxu0 0
        %2085 = vmatpush1.bf16.msra.mxu0 0
        %2086 = vmatprep.subr.bf16.mxu0 0
        %2087 = vmatpush1.bf16.msra.mxu0 0
        %2088 = vmatprep.subr.bf16.mxu0 0
        %2089 = vmatpush1.bf16.msra.mxu0 0
        %2090 = vmatprep.subr.bf16.mxu0 0
        %2091 = vmatpush1.bf16.msra.mxu0 0
        %2092 = vmatprep.subr.bf16.mxu0 0
        %2093 = vmatpush1.bf16.msra.mxu0 0
        %2094 = vmatprep.subr.bf16.mxu0 0
        %2095 = vmatpush1.bf16.msra.mxu0 0
        %2096 = vmatprep.mubr.bf16.mxu0 0
        %2097 = vmatmul.mubr.bf16.gmra.mrb[0].mxu0 %v2063
        %v2098 = vpop.f32.mrb[0].mxu0
        %v2099 = vadd.f32 0.0, %v2098
        %v2100 = vpop.f32.mrb[0].mxu0
        %v2101 = vadd.f32 0.0, %v2100
        %v2102 = vpop.f32.mrb[0].mxu0
        %v2103 = vpop.f32.mrb[0].mxu0
        %2104 = vdwg.mxu0
        %2105 = vmatprep.subr.bf16.mxu0 %v1458
        %2106 = vmatpush1.bf16.msra.mxu0 %v1457
        %2107 = vmatprep.subr.bf16.mxu0 %v1462
        %2108 = vmatpush1.bf16.msra.mxu0 %v1461
        %2109 = vmatprep.subr.bf16.mxu0 %v1466
        %2110 = vmatpush1.bf16.msra.mxu0 %v1465
        %2111 = vmatprep.subr.bf16.mxu0 %v1470
        %2112 = vmatpush1.bf16.msra.mxu0 %v1469
        %2113 = vmatprep.subr.bf16.mxu0 %v1474
        %2114 = vmatpush1.bf16.msra.mxu0 %v1473
        %2115 = vmatprep.subr.bf16.mxu0 %v1478
        %2116 = vmatpush1.bf16.msra.mxu0 %v1477
        %2117 = vmatprep.subr.bf16.mxu0 %v1482
        %2118 = vmatpush1.bf16.msra.mxu0 %v1481
        %2119 = vmatprep.subr.bf16.mxu0 %v1486
        %2120 = vmatpush1.bf16.msra.mxu0 %v1485
        %2121 = vmatprep.subr.bf16.mxu0 0
        %2122 = vmatpush1.bf16.msra.mxu0 0
        %2123 = vmatprep.subr.bf16.mxu0 0
        %2124 = vmatpush1.bf16.msra.mxu0 0
        %2125 = vmatprep.subr.bf16.mxu0 0
        %2126 = vmatpush1.bf16.msra.mxu0 0
        %2127 = vmatprep.subr.bf16.mxu0 0
        %2128 = vmatpush1.bf16.msra.mxu0 0
        %2129 = vmatprep.subr.bf16.mxu0 0
        %2130 = vmatpush1.bf16.msra.mxu0 0
        %2131 = vmatprep.subr.bf16.mxu0 0
        %2132 = vmatpush1.bf16.msra.mxu0 0
        %2133 = vmatprep.subr.bf16.mxu0 0
        %2134 = vmatpush1.bf16.msra.mxu0 0
        %2135 = vmatprep.subr.bf16.mxu0 0
        %2136 = vmatpush1.bf16.msra.mxu0 0
        %2137 = vmatprep.mubr.bf16.mxu0 0
        %2138 = vmatmul.mubr.bf16.gmra.mrb[0].mxu0 %v2063
        %v2139 = vpop.f32.mrb[0].mxu0
        %v2140 = vadd.f32 0.0, %v2139
        %v2141 = vpop.f32.mrb[0].mxu0
        %v2142 = vadd.f32 0.0, %v2141
        %v2143 = vpop.f32.mrb[0].mxu0
        %v2144 = vpop.f32.mrb[0].mxu0
        %2145 = vdwg.mxu0
        %v2146 = vadd.f32 %v2059, %v2099
        %v2147 = vadd.f32 %v2060, %v2101
        %v2148 = vadd.f32 %v2061, %v2140
        %v2149 = vadd.f32 %v2062, %v2142
        %v2150 = vmul.f32 %v2146, 0.5
        %v2151 = vtanh.pop %v2150
        %v2152 = vmul.f32 %v2151, 0.5
        %v2153 = vadd.f32 %v2152, 0.5
        %v2154 = vmul.f32 %v2147, 0.5
        %v2155 = vtanh.pop %v2154
        %v2156 = vmul.f32 %v2155, 0.5
        %v2157 = vadd.f32 %v2156, 0.5
        %v2158 = vtanh.pop %v2148
        %v2159 = vmul.f32 %v2149, 0.5
        %v2160 = vtanh.pop %v2159
        %v2161 = vmul.f32 %v2160, 0.5
        %v2162 = vadd.f32 %v2161, 0.5
        %v2163 = vmul.f32 %v2157, %v2056
        %v2164 = vmul.f32 %v2153, %v2158
        %v2165 = vadd.f32 %v2163, %v2164
        %v2166 = vtanh.pop %v2165
        %v2167 = vmul.f32 %v2162, %v2166
        %v2168 = vld [vmem:[#allocation2 + $0xe0] sm:$0xff]
        %v2169 = vld [vmem:[#allocation2 + $0xe8] sm:$0xff]
        %v2170 = vld [vmem:[#allocation2 + $0xf0] sm:$0xff]
        %v2171 = vld [vmem:[#allocation2 + $0xf8] sm:$0xff]
        %v2172 = vpack.c.bf16 %v2167, %v2167
        %2173 = vmatprep.subr.bf16.mxu0 %v1456
        %2174 = vmatpush1.bf16.msra.mxu0 %v1455
        %2175 = vmatprep.subr.bf16.mxu0 %v1460
        %2176 = vmatpush1.bf16.msra.mxu0 %v1459
        %2177 = vmatprep.subr.bf16.mxu0 %v1464
        %2178 = vmatpush1.bf16.msra.mxu0 %v1463
        %2179 = vmatprep.subr.bf16.mxu0 %v1468
        %2180 = vmatpush1.bf16.msra.mxu0 %v1467
        %2181 = vmatprep.subr.bf16.mxu0 %v1472
        %2182 = vmatpush1.bf16.msra.mxu0 %v1471
        %2183 = vmatprep.subr.bf16.mxu0 %v1476
        %2184 = vmatpush1.bf16.msra.mxu0 %v1475
        %2185 = vmatprep.subr.bf16.mxu0 %v1480
        %2186 = vmatpush1.bf16.msra.mxu0 %v1479
        %2187 = vmatprep.subr.bf16.mxu0 %v1484
        %2188 = vmatpush1.bf16.msra.mxu0 %v1483
        %2189 = vmatprep.subr.bf16.mxu0 0
        %2190 = vmatpush1.bf16.msra.mxu0 0
        %2191 = vmatprep.subr.bf16.mxu0 0
        %2192 = vmatpush1.bf16.msra.mxu0 0
        %2193 = vmatprep.subr.bf16.mxu0 0
        %2194 = vmatpush1.bf16.msra.mxu0 0
        %2195 = vmatprep.subr.bf16.mxu0 0
        %2196 = vmatpush1.bf16.msra.mxu0 0
        %2197 = vmatprep.subr.bf16.mxu0 0
        %2198 = vmatpush1.bf16.msra.mxu0 0
        %2199 = vmatprep.subr.bf16.mxu0 0
        %2200 = vmatpush1.bf16.msra.mxu0 0
        %2201 = vmatprep.subr.bf16.mxu0 0
        %2202 = vmatpush1.bf16.msra.mxu0 0
        %2203 = vmatprep.subr.bf16.mxu0 0
        %2204 = vmatpush1.bf16.msra.mxu0 0
        %2205 = vmatprep.mubr.bf16.mxu0 0
        %2206 = vmatmul.mubr.bf16.gmra.mrb[0].mxu0 %v2172
        %v2207 = vpop.f32.mrb[0].mxu0
        %v2208 = vadd.f32 0.0, %v2207
        %v2209 = vpop.f32.mrb[0].mxu0
        %v2210 = vadd.f32 0.0, %v2209
        %v2211 = vpop.f32.mrb[0].mxu0
        %v2212 = vpop.f32.mrb[0].mxu0
        %2213 = vdwg.mxu0
        %2214 = vmatprep.subr.bf16.mxu0 %v1458
        %2215 = vmatpush1.bf16.msra.mxu0 %v1457
        %2216 = vmatprep.subr.bf16.mxu0 %v1462
        %2217 = vmatpush1.bf16.msra.mxu0 %v1461
        %2218 = vmatprep.subr.bf16.mxu0 %v1466
        %2219 = vmatpush1.bf16.msra.mxu0 %v1465
        %2220 = vmatprep.subr.bf16.mxu0 %v1470
        %2221 = vmatpush1.bf16.msra.mxu0 %v1469
        %2222 = vmatprep.subr.bf16.mxu0 %v1474
        %2223 = vmatpush1.bf16.msra.mxu0 %v1473
        %2224 = vmatprep.subr.bf16.mxu0 %v1478
        %2225 = vmatpush1.bf16.msra.mxu0 %v1477
        %2226 = vmatprep.subr.bf16.mxu0 %v1482
        %2227 = vmatpush1.bf16.msra.mxu0 %v1481
        %2228 = vmatprep.subr.bf16.mxu0 %v1486
        %2229 = vmatpush1.bf16.msra.mxu0 %v1485
        %2230 = vmatprep.subr.bf16.mxu0 0
        %2231 = vmatpush1.bf16.msra.mxu0 0
        %2232 = vmatprep.subr.bf16.mxu0 0
        %2233 = vmatpush1.bf16.msra.mxu0 0
        %2234 = vmatprep.subr.bf16.mxu0 0
        %2235 = vmatpush1.bf16.msra.mxu0 0
        %2236 = vmatprep.subr.bf16.mxu0 0
        %2237 = vmatpush1.bf16.msra.mxu0 0
        %2238 = vmatprep.subr.bf16.mxu0 0
        %2239 = vmatpush1.bf16.msra.mxu0 0
        %2240 = vmatprep.subr.bf16.mxu0 0
        %2241 = vmatpush1.bf16.msra.mxu0 0
        %2242 = vmatprep.subr.bf16.mxu0 0
        %2243 = vmatpush1.bf16.msra.mxu0 0
        %2244 = vmatprep.subr.bf16.mxu0 0
        %2245 = vmatpush1.bf16.msra.mxu0 0
        %2246 = vmatprep.mubr.bf16.mxu0 0
        %2247 = vmatmul.mubr.bf16.gmra.mrb[0].mxu0 %v2172
        %v2248 = vpop.f32.mrb[0].mxu0
        %v2249 = vadd.f32 0.0, %v2248
        %v2250 = vpop.f32.mrb[0].mxu0
        %v2251 = vadd.f32 0.0, %v2250
        %v2252 = vpop.f32.mrb[0].mxu0
        %v2253 = vpop.f32.mrb[0].mxu0
        %2254 = vdwg.mxu0
        %v2255 = vadd.f32 %v2168, %v2208
        %v2256 = vadd.f32 %v2169, %v2210
        %v2257 = vadd.f32 %v2170, %v2249
        %v2258 = vadd.f32 %v2171, %v2251
        %v2259 = vmul.f32 %v2255, 0.5
        %v2260 = vtanh.pop %v2259
        %v2261 = vmul.f32 %v2260, 0.5
        %v2262 = vadd.f32 %v2261, 0.5
        %v2263 = vmul.f32 %v2256, 0.5
        %v2264 = vtanh.pop %v2263
        %v2265 = vmul.f32 %v2264, 0.5
        %v2266 = vadd.f32 %v2265, 0.5
        %v2267 = vtanh.pop %v2257
        %v2268 = vmul.f32 %v2258, 0.5
        %v2269 = vtanh.pop %v2268
        %v2270 = vmul.f32 %v2269, 0.5
        %v2271 = vadd.f32 %v2270, 0.5
        %v2272 = vmul.f32 %v2266, %v2165
        %v2273 = vmul.f32 %v2262, %v2267
        %v2274 = vadd.f32 %v2272, %v2273
        %v2275 = vtanh.pop %v2274
        %v2276 = vmul.f32 %v2271, %v2275
        %v2277 = vpack.c.bf16 %v2276, %v2276
        %v2278 = vpack.c.bf16 %v1299, %v1299
        %v2279 = vld [vmem:[#allocation12] sm:$0xf]
        %v2280 = vld [vmem:[#allocation12 + $0x4] sm:$0xf]
        %v2281 = vld [vmem:[#allocation12 + $0x8] sm:$0xf]
        %v2282 = vld [vmem:[#allocation12 + $0xc] sm:$0xf]
        %v2283 = vld [vmem:[#allocation12 + $0x10] sm:$0xf]
        %v2284 = vld [vmem:[#allocation12 + $0x14] sm:$0xf]
        %v2285 = vld [vmem:[#allocation12 + $0x18] sm:$0xf]
        %v2286 = vld [vmem:[#allocation12 + $0x1c] sm:$0xf]
        %v2287 = vld [vmem:[#allocation12 + $0x20] sm:$0xf]
        %v2288 = vld [vmem:[#allocation12 + $0x24] sm:$0xf]
        %v2289 = vld [vmem:[#allocation12 + $0x28] sm:$0xf]
        %v2290 = vld [vmem:[#allocation12 + $0x2c] sm:$0xf]
        %v2291 = vld [vmem:[#allocation12 + $0x30] sm:$0xf]
        %v2292 = vld [vmem:[#allocation12 + $0x34] sm:$0xf]
        %v2293 = vld [vmem:[#allocation12 + $0x38] sm:$0xf]
        %v2294 = vld [vmem:[#allocation12 + $0x3c] sm:$0xf]
        %v2295 = vld [vmem:[#allocation12 + $0x40] sm:$0xf]
        %v2296 = vld [vmem:[#allocation12 + $0x44] sm:$0xf]
        %v2297 = vld [vmem:[#allocation12 + $0x48] sm:$0xf]
        %v2298 = vld [vmem:[#allocation12 + $0x4c] sm:$0xf]
        %v2299 = vld [vmem:[#allocation12 + $0x50] sm:$0xf]
        %v2300 = vld [vmem:[#allocation12 + $0x54] sm:$0xf]
        %v2301 = vld [vmem:[#allocation12 + $0x58] sm:$0xf]
        %v2302 = vld [vmem:[#allocation12 + $0x5c] sm:$0xf]
        %v2303 = vld [vmem:[#allocation12 + $0x60] sm:$0xf]
        %v2304 = vld [vmem:[#allocation12 + $0x64] sm:$0xf]
        %v2305 = vld [vmem:[#allocation12 + $0x68] sm:$0xf]
        %v2306 = vld [vmem:[#allocation12 + $0x6c] sm:$0xf]
        %v2307 = vld [vmem:[#allocation12 + $0x70] sm:$0xf]
        %v2308 = vld [vmem:[#allocation12 + $0x74] sm:$0xf]
        %v2309 = vld [vmem:[#allocation12 + $0x78] sm:$0xf]
        %v2310 = vld [vmem:[#allocation12 + $0x7c] sm:$0xf]
        %v2311 = vld [vmem:[%s5] sm:$0x1]
        %v2313 = vlaneseq
        %v2314 = vshrl.u32 %v2313, 7
        %v2315 = vsub.s32 0, %v2314
        %v2316 = vrot.slane %v2311, %v2315
        %v2350 = vunpack.c.l.b16 %v2279
        %v2351 = vunpack.c.l.b16 %v2280
        %v2352 = vunpack.c.l.b16 %v2281
        %v2353 = vunpack.c.l.b16 %v2282
        %v2354 = vunpack.c.l.b16 %v2283
        %v2355 = vunpack.c.l.b16 %v2284
        %v2356 = vunpack.c.l.b16 %v2285
        %v2357 = vunpack.c.l.b16 %v2286
        %v2358 = vunpack.c.l.b16 %v2287
        %v2359 = vunpack.c.l.b16 %v2288
        %v2360 = vunpack.c.l.b16 %v2289
        %v2361 = vunpack.c.l.b16 %v2290
        %v2362 = vunpack.c.l.b16 %v2291
        %v2363 = vunpack.c.l.b16 %v2292
        %v2364 = vunpack.c.l.b16 %v2293
        %v2365 = vunpack.c.l.b16 %v2294
        %v2366 = vunpack.c.l.b16 %v2295
        %v2367 = vunpack.c.l.b16 %v2296
        %v2368 = vunpack.c.l.b16 %v2297
        %v2369 = vunpack.c.l.b16 %v2298
        %v2370 = vunpack.c.l.b16 %v2299
        %v2371 = vunpack.c.l.b16 %v2300
        %v2372 = vunpack.c.l.b16 %v2301
        %v2373 = vunpack.c.l.b16 %v2302
        %v2374 = vunpack.c.l.b16 %v2303
        %v2375 = vunpack.c.l.b16 %v2304
        %v2376 = vunpack.c.l.b16 %v2305
        %v2377 = vunpack.c.l.b16 %v2306
        %v2378 = vunpack.c.l.b16 %v2307
        %v2379 = vunpack.c.l.b16 %v2308
        %v2380 = vunpack.c.l.b16 %v2309
        %v2381 = vunpack.c.l.b16 %v2310
        %v2382 = vpack.c.b16 %v2351, %v2350
        %v2383 = vpack.c.b16 %v2353, %v2352
        %v2384 = vpack.c.b16 %v2355, %v2354
        %v2385 = vpack.c.b16 %v2357, %v2356
        %v2386 = vpack.c.b16 %v2359, %v2358
        %v2387 = vpack.c.b16 %v2361, %v2360
        %v2388 = vpack.c.b16 %v2363, %v2362
        %v2389 = vpack.c.b16 %v2365, %v2364
        %v2390 = vpack.c.b16 %v2367, %v2366
        %v2391 = vpack.c.b16 %v2369, %v2368
        %v2392 = vpack.c.b16 %v2371, %v2370
        %v2393 = vpack.c.b16 %v2373, %v2372
        %v2394 = vpack.c.b16 %v2375, %v2374
        %v2395 = vpack.c.b16 %v2377, %v2376
        %v2396 = vpack.c.b16 %v2379, %v2378
        %v2397 = vpack.c.b16 %v2381, %v2380
        %2414 = vmatprep.subr.bf16.mxu0 0
        %2415 = vmatpush1.bf16.msra.mxu0 %v2382
        %2416 = vmatprep.subr.bf16.mxu0 0
        %2417 = vmatpush1.bf16.msra.mxu0 %v2383
        %2418 = vmatprep.subr.bf16.mxu0 0
        %2419 = vmatpush1.bf16.msra.mxu0 %v2384
        %2420 = vmatprep.subr.bf16.mxu0 0
        %2421 = vmatpush1.bf16.msra.mxu0 %v2385
        %2422 = vmatprep.subr.bf16.mxu0 0
        %2423 = vmatpush1.bf16.msra.mxu0 %v2386
        %2424 = vmatprep.subr.bf16.mxu0 0
        %2425 = vmatpush1.bf16.msra.mxu0 %v2387
        %2426 = vmatprep.subr.bf16.mxu0 0
        %2427 = vmatpush1.bf16.msra.mxu0 %v2388
        %2428 = vmatprep.subr.bf16.mxu0 0
        %2429 = vmatpush1.bf16.msra.mxu0 %v2389
        %2430 = vmatprep.subr.bf16.mxu0 0
        %2431 = vmatpush1.bf16.msra.mxu0 %v2390
        %2432 = vmatprep.subr.bf16.mxu0 0
        %2433 = vmatpush1.bf16.msra.mxu0 %v2391
        %2434 = vmatprep.subr.bf16.mxu0 0
        %2435 = vmatpush1.bf16.msra.mxu0 %v2392
        %2436 = vmatprep.subr.bf16.mxu0 0
        %2437 = vmatpush1.bf16.msra.mxu0 %v2393
        %2438 = vmatprep.subr.bf16.mxu0 0
        %2439 = vmatpush1.bf16.msra.mxu0 %v2394
        %2440 = vmatprep.subr.bf16.mxu0 0
        %2441 = vmatpush1.bf16.msra.mxu0 %v2395
        %2442 = vmatprep.subr.bf16.mxu0 0
        %2443 = vmatpush1.bf16.msra.mxu0 %v2396
        %2444 = vmatprep.subr.bf16.mxu0 0
        %2445 = vmatpush1.bf16.msra.mxu0 %v2397
        %2446 = vmatprep.mubr.bf16.mxu0 %v2278
        %2447 = vmatmul.mubr.bf16.gmra.mrb[0].mxu0 %v2277
        %v2448 = vpop.f32.mrb[0].mxu0
        %v2449 = vadd.f32 %v2316, %v2448
        %v2450 = vpop.f32.mrb[0].mxu0
        %v2451 = vpop.f32.mrb[0].mxu0
        %v2452 = vpop.f32.mrb[0].mxu0
        %2453 = vdwg.mxu0
        %2454 = vst [vmem:[%s266] sm:$0xff] %v2449
        %s2455 = sand.u32 %s140, 1
        %s2456 = scalar_lea.sflag [#allocation8], %s2455
        %s2457 = sand.u32 %s140, 1
        %s2458 = smul.addr %s2457, 8
        %s2459 = scalar_lea.vmem [#allocation14], %s2458
        // Predicated region
        $region57: #{tpu_custom_call.1} parent=39 // pred_check
          %p2460 = pneg %p150
        $region58: #{tpu_custom_call.1} parent=39 // pred_check_branch
          %2462 = sbr.rel (%p2460) target = $region60
        $region59: #{tpu_custom_call.1} parent=39 // pred_region
          %s2464 = ssub.s32 128, 128
          %2465 = vsyncadd %s2456, %s2464
          %s2466 = smul.addr %s27, 128
          %s2467 = scalar_lea.hbm %s6, %s2466
          %s2469 = sshll.u32 %s2459, 4
          %s2470 = int_to_ptr.vmem [resolvable:$true] %s2469
          %2472 = dma.vmem_to_hbm [thread:$0]  %s2470, 128, %s2467, %s2456
        $region60: #{tpu_custom_call.1} parent=39 // pred_fallthru
          _
      $region40: #{tpu_custom_call.1} parent=5 // pred_fallthru
        _
      %p2473 = scmp.le.s32.totalorder 2, %s22
      // Predicated region
      $region61: #{tpu_custom_call.1} parent=5 // pred_check
        %p2474 = pneg %p2473
      $region62: #{tpu_custom_call.1} parent=5 // pred_check_branch
        %2476 = sbr.rel (%p2474) target = $region64
      $region63: #{tpu_custom_call.1} parent=5 // pred_region
        %s2477 = ssub.s32 %s22, 2
        // Predicated region
        $region65: #{tpu_custom_call.1} parent=63 // pred_check
          %p2478 = pneg %p156
        $region66: #{tpu_custom_call.1} parent=63 // pred_check_branch
          %2480 = sbr.rel (%p2478) target = $region68
        $region67: #{tpu_custom_call.1} parent=63 // pred_region
          %s2481 = sand.u32 %s141, 1
          %s2482 = scalar_lea.sflag [#allocation8], %s2481
          %s2483 = sand.u32 %s141, 1
          %s2484 = smul.addr %s2483, 8
          %s2485 = scalar_lea.vmem [#allocation14], %s2484
          %2486 = dma.done %s2482, 128
        $region68: #{tpu_custom_call.1} parent=63 // pred_fallthru
          _
      $region64: #{tpu_custom_call.1} parent=5 // pred_fallthru
        _
    $region6: #{tpu_custom_call.1} parent=1 // loop_footer
      %s26 = sadd.s32 1, %s22
    $region7: #{tpu_custom_call.1} parent=1 // loop_footer_branch
      %21 = sbr.rel target = $region3
    $region8: #{tpu_custom_call.1} parent=1 // loop_exit
      _
    %2487 = vsyncpa [#allocation7], 1
    %s2488 = scalar_lea.sflag [#allocation7], 1
    %2489 = vsyncpa %s2488, 1
    %2490 = vsyncpa [#allocation10], 1
    %2491 = vsyncpa [#allocation13], 1
    %2492 = vsyncpa [#allocation8], 1
    %s2493 = scalar_lea.sflag [#allocation8], 1
    %2494 = vsyncpa %s2493, 1

</llo_original>
